<compile_context>
chip_gen: v7x
topology: tpu7x:2x2x1
jax: 0.10.0
libtpu: 0.0.40
codegen_flags: <defaults>
</compile_context>

<pallas_src>
import functools

import jax
import jax.numpy as jnp
import numpy as np
from jax import lax
from jax.experimental import pallas as pl
from jax.experimental.pallas import tpu as pltpu


def _dnd_kernel(q_ref, keys_t_ref, keys_sq_ref, values_ref,   # inputs  (VMEM)
                out_ref, inds_ref, w_ref,                     # outputs (VMEM)
                *, delta, k):
    bt = q_ref.shape[0]
    max_len = keys_t_ref.shape[1]

    q = q_ref[...]                                              # (bt, Ck)

    # --- squared distances via norm expansion; the dot product runs on the MXU.
    dot = jnp.dot(q, keys_t_ref[...],
                  preferred_element_type=jnp.float32)           # (bt, L)
    q_sq = jnp.sum(q * q, axis=1, keepdims=True)                # (bt, 1)
    sq = jnp.maximum(keys_sq_ref[...] + q_sq - 2.0 * dot, 0.0)  # clamp cancellation
    lw = 1.0 / (sq + delta)                                     # exact, all > 0

    # Normalizer 1/sum(lw): EUP approx reciprocal + one Newton step (~f32 exact).
    total = jnp.sum(lw, axis=1, keepdims=True)                  # (bt, 1)
    inv_t = pl.reciprocal(total, approx=True)
    inv_t = inv_t * (2.0 - total * inv_t)                       # (bt, 1)

    lane_ids = lax.broadcasted_iota(jnp.int32, (1, max_len), 1)  # (1, L)
    k_lane = lax.broadcasted_iota(jnp.int32, (1, k), 1)          # (1, k)

    # --- iterative top-k over all bt queries at once (sublane-packed rows).
    # Only the row-max is on the serial carry chain; the index reduce and the
    # accumulator updates are off-path so the scheduler can overlap iterations.
    def body(i, carry):
        cur, w_acc, i_acc = carry                               # (bt,L),(bt,k),(bt,k)
        m = jnp.max(cur, axis=1, keepdims=True)                 # (bt, 1) row max
        hit = cur == m                                          # (bt, L)
        nxt = jnp.where(hit, 0.0, cur)                          # carry: depends only on m
        idx = jnp.min(jnp.where(hit, lane_ids, max_len),
                      axis=1, keepdims=True)                    # (bt, 1) first argmax
        sel = k_lane == i                                       # (1, k) column mask
        w_acc = jnp.where(sel, m, w_acc)
        i_acc = jnp.where(sel, idx, i_acc)
        return nxt, w_acc, i_acc

    lw_left, w_acc, i_acc = lax.fori_loop(
        0, k, body,
        (lw, jnp.zeros((bt, k), jnp.float32), jnp.zeros((bt, k), jnp.int32)),
        unroll=True)

    w_ref[...] = w_acc * inv_t                                  # normalized weights
    inds_ref[...] = i_acc

    # Weighted sum of the selected value rows as one MXU matmul:
    # (lw - lw_left) equals lw exactly on selected entries and exactly 0 elsewhere.
    sel_w = (lw - lw_left) * inv_t                              # (bt, L)
    out_ref[...] = jnp.dot(sel_w, values_ref[...],
                           preferred_element_type=jnp.float32)


def _as_f32(x):
    x = jnp.asarray(x)
    return x if x.dtype == jnp.float32 else x.astype(jnp.float32)


def prepare_dnd_dictionary(keys):
    """Precompute the lane-dense key layout once per dictionary (amortized across queries)."""
    keys_f = _as_f32(keys)
    keys_t = keys_f.T                                           # (Ck, L)
    keys_sq = jnp.sum(keys_f * keys_f, axis=1)[None, :]         # (1, L)
    return keys_t, keys_sq


_SUBLANE = 8   # queries per grid step (one sublane tile)


def pruning_dnd_forward_batched(queries, keys_t, keys_sq, values, *,
                                delta=0.001, query_width=50):
    """queries: (B, Ck); keys_t: (Ck, L); keys_sq: (1, L); values: (L, Cv).
    Returns (out (B, Cv), inds (B, k) int32, weights (B, k))."""
    queries_f = _as_f32(queries)
    values_f = _as_f32(values)
    B, nb_key_chan = queries_f.shape
    max_len, nb_v_chan = values_f.shape
    k = int(query_width)
    assert k <= max_len, "query_width must be <= max_len"
    assert keys_t.shape == (nb_key_chan, max_len)

    bt = _SUBLANE
    b_pad = -(-B // bt) * bt
    if b_pad != B:
        queries_f = jnp.concatenate(
            [queries_f, jnp.zeros((b_pad - B, nb_key_chan), jnp.float32)], axis=0)

    # VMEM budget: resident dictionary blocks (double-buffered by the pipeline)
    # plus the small per-step query/output blocks, with headroom.
    block_bytes = 4 * (nb_key_chan * max_len + max_len + max_len * nb_v_chan
                       + bt * (nb_key_chan + nb_v_chan + 2 * k))
    vmem_limit = int(min(max(2 * block_bytes + (8 << 20), 32 << 20), 60 << 20))

    kernel = functools.partial(_dnd_kernel, delta=float(delta), k=k)

    out, inds, weights = pl.pallas_call(
        kernel,
        grid=(b_pad // bt,),
        in_specs=[
            pl.BlockSpec((bt, nb_key_chan), lambda i: (i, 0)),       # query tile
            pl.BlockSpec((nb_key_chan, max_len), lambda i: (0, 0)),  # keys^T   (resident)
            pl.BlockSpec((1, max_len), lambda i: (0, 0)),            # ||keys||^2 (resident)
            pl.BlockSpec((max_len, nb_v_chan), lambda i: (0, 0)),    # values   (resident)
        ],
        out_specs=(
            pl.BlockSpec((bt, nb_v_chan), lambda i: (i, 0)),
            pl.BlockSpec((bt, k), lambda i: (i, 0)),
            pl.BlockSpec((bt, k), lambda i: (i, 0)),
        ),
        out_shape=(
            jax.ShapeDtypeStruct((b_pad, nb_v_chan), jnp.float32),   # weighted sums
            jax.ShapeDtypeStruct((b_pad, k), jnp.int32),             # top-k indices
            jax.ShapeDtypeStruct((b_pad, k), jnp.float32),           # normalized weights
        ),
        compiler_params=pltpu.CompilerParams(
            dimension_semantics=("parallel",),
            vmem_limit_bytes=vmem_limit,
        ),
    )(queries_f, keys_t, keys_sq, values_f)

    return out[:B], inds[:B], weights[:B]


def pruning_dnd_forward(key, keys, values, *, delta=0.001, query_width=50):
    """Module-equivalent single-query forward.
    key: (Ck,), keys: (L, Ck), values: (L, Cv) ->
    (out (1, Cv), inds (k,) int32, weights (k,))."""
    keys_t, keys_sq = prepare_dnd_dictionary(keys)
    q = _as_f32(key).reshape(1, -1)
    out, inds, weights = pruning_dnd_forward_batched(
        q, keys_t, keys_sq, values, delta=delta, query_width=query_width)
    return out, inds[0], weights[0]


if __name__ == "__main__":
    # Shapes consistent with the module's __init__ (max_len x nb_key_chan keys,
    # max_len x nb_v_chan values, scalar delta, query_width top-k).
    max_len, nb_key_chan, nb_v_chan = 256, 16, 32
    query_width, delta = 50, 1e-3

    root = jax.random.PRNGKey(0)
    k_q, k_keys, k_vals, k_qb = jax.random.split(root, 4)
    # Module init: keys ~ U[0,1) (torch.rand); values init to zeros in the module,
    # but we use a deterministic random init so the weighted sum is non-trivial.
    keys = jax.random.uniform(k_keys, (max_len, nb_key_chan), dtype=jnp.float32)
    values = jax.random.normal(k_vals, (max_len, nb_v_chan), dtype=jnp.float32)
    query = jax.random.uniform(k_q, (nb_key_chan,), dtype=jnp.float32)

    # ---------- single-query (module-equivalent) path ----------
    out, inds, weights = jax.block_until_ready(
        pruning_dnd_forward(query, keys, values, delta=delta,
                            query_width=query_width))

    lw_ref = np.asarray(1.0 / (jnp.sum((query[None, :] - keys) ** 2, axis=1) + delta))
    total = float(lw_ref.sum())
    inds_np = np.asarray(inds)
    weights_np = np.asarray(weights)
    out_np = np.asarray(out)

    assert out_np.shape == (1, nb_v_chan)
    assert inds_np.shape == (query_width,) and weights_np.shape == (query_width,)
    # selected indices are unique and correspond to the k largest lookup weights
    assert len(set(inds_np.tolist())) == query_width
    kth = np.sort(lw_ref)[-query_width]
    assert np.all(lw_ref[inds_np] >= kth * (1.0 - 1e-4))
    # weights are sorted descending and equal lw[inds] / sum(lw)
    assert np.all(np.diff(weights_np) <= 1e-6)
    np.testing.assert_allclose(weights_np, lw_ref[inds_np] / total,
                               rtol=1e-4, atol=1e-6)
    ref_out = np.sum(np.asarray(values)[inds_np, :] * weights_np[:, None],
                     axis=0, keepdims=True)
    np.testing.assert_allclose(out_np, ref_out, rtol=1e-4, atol=1e-5)

    # ---------- batched path (grid over queries, padded to the sublane tile) ----------
    B = 12
    queries = jax.random.uniform(k_qb, (B, nb_key_chan), dtype=jnp.float32)
    keys_t, keys_sq = prepare_dnd_dictionary(keys)
    out_b, inds_b, w_b = jax.block_until_ready(
        pruning_dnd_forward_batched(queries, keys_t, keys_sq, values,
                                    delta=delta, query_width=query_width))
    assert out_b.shape == (B, nb_v_chan)
    keys_np, values_np, queries_np = map(np.asarray, (keys, values, queries))
    inds_b_np, w_b_np, out_b_np = map(np.asarray, (inds_b, w_b, out_b))
    for b in range(B):
        lw_b = 1.0 / (np.sum((queries_np[b][None, :] - keys_np) ** 2, axis=1) + delta)
        tot_b = lw_b.sum()
        ib = inds_b_np[b]
        wb = w_b_np[b]
        assert len(set(ib.tolist())) == query_width
        np.testing.assert_allclose(wb, lw_b[ib] / tot_b, rtol=1e-4, atol=1e-6)
        ref_ob = np.sum(values_np[ib, :] * wb[:, None], axis=0)
        np.testing.assert_allclose(out_b_np[b], ref_ob, rtol=1e-4, atol=1e-5)

    print("KERNEL_OK")
</pallas_src>

<mosaic_0001>
module attributes {stable_mosaic.version = 11 : i64} {
  func.func @_dnd_kernel(%arg0: i32, %arg1: memref<8x16xf32, #tpu.memory_space<vmem>>, %arg2: memref<16x256xf32, #tpu.memory_space<vmem>>, %arg3: memref<1x256xf32, #tpu.memory_space<vmem>>, %arg4: memref<256x32xf32, #tpu.memory_space<vmem>>, %arg5: memref<8x32xf32, #tpu.memory_space<vmem>>, %arg6: memref<8x50xi32, #tpu.memory_space<vmem>>, %arg7: memref<8x50xf32, #tpu.memory_space<vmem>>) attributes {dimension_semantics = [#tpu.dimension_semantics<parallel>], iteration_bounds = array<i64: 1>, scalar_prefetch = 0 : i64, scratch_operands = 0 : i64, tpu.core_type = #tpu.core_type<tc>, window_params = [{transform_indices = @transform_0, window_bounds = array<i64: 8, 16>}, {pipeline_mode = #tpu.pipeline_mode<synchronous>, transform_indices = @transform_1, window_bounds = array<i64: 16, 256>}, {pipeline_mode = #tpu.pipeline_mode<synchronous>, transform_indices = @transform_2, window_bounds = array<i64: 1, 256>}, {pipeline_mode = #tpu.pipeline_mode<synchronous>, transform_indices = @transform_3, window_bounds = array<i64: 256, 32>}, {transform_indices = @transform_4, window_bounds = array<i64: 8, 32>}, {transform_indices = @transform_5, window_bounds = array<i64: 8, 50>}, {transform_indices = @transform_6, window_bounds = array<i64: 8, 50>}]} {
    %c0 = arith.constant 0 : index
    %c0_0 = arith.constant 0 : index
    %0 = vector.load %arg1[%c0, %c0_0] : memref<8x16xf32, #tpu.memory_space<vmem>>, vector<8x16xf32>
    %c0_1 = arith.constant 0 : index
    %c0_2 = arith.constant 0 : index
    %1 = vector.load %arg2[%c0_1, %c0_2] : memref<16x256xf32, #tpu.memory_space<vmem>>, vector<16x256xf32>
    %cst = arith.constant dense<0.000000e+00> : vector<8x256xf32>
    %2 = tpu.matmul %0, %1, %cst {dimension_numbers = #tpu.dot_dimension_numbers<[1], [0], [0], [1], [0, 0, 1, 1], [], []>} : vector<8x16xf32>, vector<16x256xf32>, vector<8x256xf32> -> vector<8x256xf32>
    %3 = arith.mulf %0, %0 : vector<8x16xf32>
    %cst_3 = arith.constant dense<0.000000e+00> : vector<8xf32>
    %4 = vector.multi_reduction <add>, %3, %cst_3 [1] : vector<8x16xf32> to vector<8xf32>
    %5 = vector.shape_cast %4 : vector<8xf32> to vector<8x1xf32>
    %c0_4 = arith.constant 0 : index
    %c0_5 = arith.constant 0 : index
    %6 = vector.load %arg3[%c0_4, %c0_5] : memref<1x256xf32, #tpu.memory_space<vmem>>, vector<1x256xf32>
    %7 = vector.broadcast %6 : vector<1x256xf32> to vector<8x256xf32>
    %8 = vector.broadcast %5 : vector<8x1xf32> to vector<8x256xf32>
    %9 = arith.addf %7, %8 : vector<8x256xf32>
    %cst_6 = arith.constant 2.000000e+00 : f32
    %10 = vector.broadcast %cst_6 : f32 to vector<8x256xf32>
    %11 = arith.mulf %10, %2 : vector<8x256xf32>
    %12 = arith.subf %9, %11 : vector<8x256xf32>
    %cst_7 = arith.constant 0.000000e+00 : f32
    %13 = vector.broadcast %cst_7 : f32 to vector<8x256xf32>
    %14 = arith.maximumf %12, %13 : vector<8x256xf32>
    %cst_8 = arith.constant 1.000000e-03 : f32
    %15 = vector.broadcast %cst_8 : f32 to vector<8x256xf32>
    %16 = arith.addf %14, %15 : vector<8x256xf32>
    %cst_9 = arith.constant 1.000000e+00 : f32
    %17 = vector.broadcast %cst_9 : f32 to vector<8x256xf32>
    %18 = arith.divf %17, %16 : vector<8x256xf32>
    %cst_10 = arith.constant dense<0.000000e+00> : vector<8xf32>
    %19 = vector.multi_reduction <add>, %18, %cst_10 [1] : vector<8x256xf32> to vector<8xf32>
    %20 = vector.shape_cast %19 : vector<8xf32> to vector<8x1xf32>
    %21 = tpu.reciprocal %20 {approx = true} : vector<8x1xf32> -> vector<8x1xf32>
    %22 = arith.mulf %20, %21 : vector<8x1xf32>
    %cst_11 = arith.constant 2.000000e+00 : f32
    %23 = vector.broadcast %cst_11 : f32 to vector<8x1xf32>
    %24 = arith.subf %23, %22 : vector<8x1xf32>
    %25 = arith.mulf %21, %24 : vector<8x1xf32>
    %26 = tpu.iota {dimensions = array<i32: 1>} : vector<1x256xi32>
    %27 = tpu.iota {dimensions = array<i32: 1>} : vector<1x50xi32>
    %cst_12 = arith.constant 0.000000e+00 : f32
    %28 = vector.broadcast %cst_12 : f32 to vector<8x50xf32>
    %c0_i32 = arith.constant 0 : i32
    %29 = vector.broadcast %c0_i32 : i32 to vector<8x50xi32>
    %c0_i32_13 = arith.constant 0 : i32
    %cst_14 = arith.constant dense<0xFF800000> : vector<8xf32>
    %30 = vector.multi_reduction <maximumf>, %18, %cst_14 [1] : vector<8x256xf32> to vector<8xf32>
    %31 = vector.shape_cast %30 : vector<8xf32> to vector<8x1xf32>
    %32 = vector.broadcast %31 : vector<8x1xf32> to vector<8x256xf32>
    %33 = arith.cmpf oeq, %18, %32 : vector<8x256xf32>
    %cst_15 = arith.constant 0.000000e+00 : f32
    %34 = vector.broadcast %cst_15 : f32 to vector<8x256xf32>
    %35 = arith.select %33, %34, %18 : vector<8x256xi1>, vector<8x256xf32>
    %c256_i32 = arith.constant 256 : i32
    %36 = vector.shape_cast %26 : vector<1x256xi32> to vector<1x256xi32>
    %37 = vector.broadcast %36 : vector<1x256xi32> to vector<8x256xi32>
    %38 = vector.broadcast %c256_i32 : i32 to vector<8x256xi32>
    %39 = arith.select %33, %37, %38 : vector<8x256xi1>, vector<8x256xi32>
    %cst_16 = arith.constant dense<2147483647> : vector<8xi32>
    %40 = vector.multi_reduction <minsi>, %39, %cst_16 [1] : vector<8x256xi32> to vector<8xi32>
    %41 = vector.shape_cast %40 : vector<8xi32> to vector<8x1xi32>
    %42 = vector.broadcast %c0_i32_13 : i32 to vector<1x50xi32>
    %43 = arith.cmpi eq, %27, %42 : vector<1x50xi32>
    %44 = vector.shape_cast %43 : vector<1x50xi1> to vector<1x50xi1>
    %45 = vector.broadcast %44 : vector<1x50xi1> to vector<8x50xi1>
    %46 = vector.shape_cast %31 : vector<8x1xf32> to vector<8x1xf32>
    %47 = vector.broadcast %46 : vector<8x1xf32> to vector<8x50xf32>
    %48 = arith.select %45, %47, %28 : vector<8x50xi1>, vector<8x50xf32>
    %49 = vector.shape_cast %43 : vector<1x50xi1> to vector<1x50xi1>
    %50 = vector.broadcast %49 : vector<1x50xi1> to vector<8x50xi1>
    %51 = vector.shape_cast %41 : vector<8x1xi32> to vector<8x1xi32>
    %52 = vector.broadcast %51 : vector<8x1xi32> to vector<8x50xi32>
    %53 = arith.select %50, %52, %29 : vector<8x50xi1>, vector<8x50xi32>
    %c1_i32 = arith.constant 1 : i32
    %cst_17 = arith.constant dense<0xFF800000> : vector<8xf32>
    %54 = vector.multi_reduction <maximumf>, %35, %cst_17 [1] : vector<8x256xf32> to vector<8xf32>
    %55 = vector.shape_cast %54 : vector<8xf32> to vector<8x1xf32>
    %56 = vector.broadcast %55 : vector<8x1xf32> to vector<8x256xf32>
    %57 = arith.cmpf oeq, %35, %56 : vector<8x256xf32>
    %cst_18 = arith.constant 0.000000e+00 : f32
    %58 = vector.broadcast %cst_18 : f32 to vector<8x256xf32>
    %59 = arith.select %57, %58, %35 : vector<8x256xi1>, vector<8x256xf32>
    %c256_i32_19 = arith.constant 256 : i32
    %60 = vector.shape_cast %26 : vector<1x256xi32> to vector<1x256xi32>
    %61 = vector.broadcast %60 : vector<1x256xi32> to vector<8x256xi32>
    %62 = vector.broadcast %c256_i32_19 : i32 to vector<8x256xi32>
    %63 = arith.select %57, %61, %62 : vector<8x256xi1>, vector<8x256xi32>
    %cst_20 = arith.constant dense<2147483647> : vector<8xi32>
    %64 = vector.multi_reduction <minsi>, %63, %cst_20 [1] : vector<8x256xi32> to vector<8xi32>
    %65 = vector.shape_cast %64 : vector<8xi32> to vector<8x1xi32>
    %66 = vector.broadcast %c1_i32 : i32 to vector<1x50xi32>
    %67 = arith.cmpi eq, %27, %66 : vector<1x50xi32>
    %68 = vector.shape_cast %67 : vector<1x50xi1> to vector<1x50xi1>
    %69 = vector.broadcast %68 : vector<1x50xi1> to vector<8x50xi1>
    %70 = vector.shape_cast %55 : vector<8x1xf32> to vector<8x1xf32>
    %71 = vector.broadcast %70 : vector<8x1xf32> to vector<8x50xf32>
    %72 = arith.select %69, %71, %48 : vector<8x50xi1>, vector<8x50xf32>
    %73 = vector.shape_cast %67 : vector<1x50xi1> to vector<1x50xi1>
    %74 = vector.broadcast %73 : vector<1x50xi1> to vector<8x50xi1>
    %75 = vector.shape_cast %65 : vector<8x1xi32> to vector<8x1xi32>
    %76 = vector.broadcast %75 : vector<8x1xi32> to vector<8x50xi32>
    %77 = arith.select %74, %76, %53 : vector<8x50xi1>, vector<8x50xi32>
    %c2_i32 = arith.constant 2 : i32
    %cst_21 = arith.constant dense<0xFF800000> : vector<8xf32>
    %78 = vector.multi_reduction <maximumf>, %59, %cst_21 [1] : vector<8x256xf32> to vector<8xf32>
    %79 = vector.shape_cast %78 : vector<8xf32> to vector<8x1xf32>
    %80 = vector.broadcast %79 : vector<8x1xf32> to vector<8x256xf32>
    %81 = arith.cmpf oeq, %59, %80 : vector<8x256xf32>
    %cst_22 = arith.constant 0.000000e+00 : f32
    %82 = vector.broadcast %cst_22 : f32 to vector<8x256xf32>
    %83 = arith.select %81, %82, %59 : vector<8x256xi1>, vector<8x256xf32>
    %c256_i32_23 = arith.constant 256 : i32
    %84 = vector.shape_cast %26 : vector<1x256xi32> to vector<1x256xi32>
    %85 = vector.broadcast %84 : vector<1x256xi32> to vector<8x256xi32>
    %86 = vector.broadcast %c256_i32_23 : i32 to vector<8x256xi32>
    %87 = arith.select %81, %85, %86 : vector<8x256xi1>, vector<8x256xi32>
    %cst_24 = arith.constant dense<2147483647> : vector<8xi32>
    %88 = vector.multi_reduction <minsi>, %87, %cst_24 [1] : vector<8x256xi32> to vector<8xi32>
    %89 = vector.shape_cast %88 : vector<8xi32> to vector<8x1xi32>
    %90 = vector.broadcast %c2_i32 : i32 to vector<1x50xi32>
    %91 = arith.cmpi eq, %27, %90 : vector<1x50xi32>
    %92 = vector.shape_cast %91 : vector<1x50xi1> to vector<1x50xi1>
    %93 = vector.broadcast %92 : vector<1x50xi1> to vector<8x50xi1>
    %94 = vector.shape_cast %79 : vector<8x1xf32> to vector<8x1xf32>
    %95 = vector.broadcast %94 : vector<8x1xf32> to vector<8x50xf32>
    %96 = arith.select %93, %95, %72 : vector<8x50xi1>, vector<8x50xf32>
    %97 = vector.shape_cast %91 : vector<1x50xi1> to vector<1x50xi1>
    %98 = vector.broadcast %97 : vector<1x50xi1> to vector<8x50xi1>
    %99 = vector.shape_cast %89 : vector<8x1xi32> to vector<8x1xi32>
    %100 = vector.broadcast %99 : vector<8x1xi32> to vector<8x50xi32>
    %101 = arith.select %98, %100, %77 : vector<8x50xi1>, vector<8x50xi32>
    %c3_i32 = arith.constant 3 : i32
    %cst_25 = arith.constant dense<0xFF800000> : vector<8xf32>
    %102 = vector.multi_reduction <maximumf>, %83, %cst_25 [1] : vector<8x256xf32> to vector<8xf32>
    %103 = vector.shape_cast %102 : vector<8xf32> to vector<8x1xf32>
    %104 = vector.broadcast %103 : vector<8x1xf32> to vector<8x256xf32>
    %105 = arith.cmpf oeq, %83, %104 : vector<8x256xf32>
    %cst_26 = arith.constant 0.000000e+00 : f32
    %106 = vector.broadcast %cst_26 : f32 to vector<8x256xf32>
    %107 = arith.select %105, %106, %83 : vector<8x256xi1>, vector<8x256xf32>
    %c256_i32_27 = arith.constant 256 : i32
    %108 = vector.shape_cast %26 : vector<1x256xi32> to vector<1x256xi32>
    %109 = vector.broadcast %108 : vector<1x256xi32> to vector<8x256xi32>
    %110 = vector.broadcast %c256_i32_27 : i32 to vector<8x256xi32>
    %111 = arith.select %105, %109, %110 : vector<8x256xi1>, vector<8x256xi32>
    %cst_28 = arith.constant dense<2147483647> : vector<8xi32>
    %112 = vector.multi_reduction <minsi>, %111, %cst_28 [1] : vector<8x256xi32> to vector<8xi32>
    %113 = vector.shape_cast %112 : vector<8xi32> to vector<8x1xi32>
    %114 = vector.broadcast %c3_i32 : i32 to vector<1x50xi32>
    %115 = arith.cmpi eq, %27, %114 : vector<1x50xi32>
    %116 = vector.shape_cast %115 : vector<1x50xi1> to vector<1x50xi1>
    %117 = vector.broadcast %116 : vector<1x50xi1> to vector<8x50xi1>
    %118 = vector.shape_cast %103 : vector<8x1xf32> to vector<8x1xf32>
    %119 = vector.broadcast %118 : vector<8x1xf32> to vector<8x50xf32>
    %120 = arith.select %117, %119, %96 : vector<8x50xi1>, vector<8x50xf32>
    %121 = vector.shape_cast %115 : vector<1x50xi1> to vector<1x50xi1>
    %122 = vector.broadcast %121 : vector<1x50xi1> to vector<8x50xi1>
    %123 = vector.shape_cast %113 : vector<8x1xi32> to vector<8x1xi32>
    %124 = vector.broadcast %123 : vector<8x1xi32> to vector<8x50xi32>
    %125 = arith.select %122, %124, %101 : vector<8x50xi1>, vector<8x50xi32>
    %c4_i32 = arith.constant 4 : i32
    %cst_29 = arith.constant dense<0xFF800000> : vector<8xf32>
    %126 = vector.multi_reduction <maximumf>, %107, %cst_29 [1] : vector<8x256xf32> to vector<8xf32>
    %127 = vector.shape_cast %126 : vector<8xf32> to vector<8x1xf32>
    %128 = vector.broadcast %127 : vector<8x1xf32> to vector<8x256xf32>
    %129 = arith.cmpf oeq, %107, %128 : vector<8x256xf32>
    %cst_30 = arith.constant 0.000000e+00 : f32
    %130 = vector.broadcast %cst_30 : f32 to vector<8x256xf32>
    %131 = arith.select %129, %130, %107 : vector<8x256xi1>, vector<8x256xf32>
    %c256_i32_31 = arith.constant 256 : i32
    %132 = vector.shape_cast %26 : vector<1x256xi32> to vector<1x256xi32>
    %133 = vector.broadcast %132 : vector<1x256xi32> to vector<8x256xi32>
    %134 = vector.broadcast %c256_i32_31 : i32 to vector<8x256xi32>
    %135 = arith.select %129, %133, %134 : vector<8x256xi1>, vector<8x256xi32>
    %cst_32 = arith.constant dense<2147483647> : vector<8xi32>
    %136 = vector.multi_reduction <minsi>, %135, %cst_32 [1] : vector<8x256xi32> to vector<8xi32>
    %137 = vector.shape_cast %136 : vector<8xi32> to vector<8x1xi32>
    %138 = vector.broadcast %c4_i32 : i32 to vector<1x50xi32>
    %139 = arith.cmpi eq, %27, %138 : vector<1x50xi32>
    %140 = vector.shape_cast %139 : vector<1x50xi1> to vector<1x50xi1>
    %141 = vector.broadcast %140 : vector<1x50xi1> to vector<8x50xi1>
    %142 = vector.shape_cast %127 : vector<8x1xf32> to vector<8x1xf32>
    %143 = vector.broadcast %142 : vector<8x1xf32> to vector<8x50xf32>
    %144 = arith.select %141, %143, %120 : vector<8x50xi1>, vector<8x50xf32>
    %145 = vector.shape_cast %139 : vector<1x50xi1> to vector<1x50xi1>
    %146 = vector.broadcast %145 : vector<1x50xi1> to vector<8x50xi1>
    %147 = vector.shape_cast %137 : vector<8x1xi32> to vector<8x1xi32>
    %148 = vector.broadcast %147 : vector<8x1xi32> to vector<8x50xi32>
    %149 = arith.select %146, %148, %125 : vector<8x50xi1>, vector<8x50xi32>
    %c5_i32 = arith.constant 5 : i32
    %cst_33 = arith.constant dense<0xFF800000> : vector<8xf32>
    %150 = vector.multi_reduction <maximumf>, %131, %cst_33 [1] : vector<8x256xf32> to vector<8xf32>
    %151 = vector.shape_cast %150 : vector<8xf32> to vector<8x1xf32>
    %152 = vector.broadcast %151 : vector<8x1xf32> to vector<8x256xf32>
    %153 = arith.cmpf oeq, %131, %152 : vector<8x256xf32>
    %cst_34 = arith.constant 0.000000e+00 : f32
    %154 = vector.broadcast %cst_34 : f32 to vector<8x256xf32>
    %155 = arith.select %153, %154, %131 : vector<8x256xi1>, vector<8x256xf32>
    %c256_i32_35 = arith.constant 256 : i32
    %156 = vector.shape_cast %26 : vector<1x256xi32> to vector<1x256xi32>
    %157 = vector.broadcast %156 : vector<1x256xi32> to vector<8x256xi32>
    %158 = vector.broadcast %c256_i32_35 : i32 to vector<8x256xi32>
    %159 = arith.select %153, %157, %158 : vector<8x256xi1>, vector<8x256xi32>
    %cst_36 = arith.constant dense<2147483647> : vector<8xi32>
    %160 = vector.multi_reduction <minsi>, %159, %cst_36 [1] : vector<8x256xi32> to vector<8xi32>
    %161 = vector.shape_cast %160 : vector<8xi32> to vector<8x1xi32>
    %162 = vector.broadcast %c5_i32 : i32 to vector<1x50xi32>
    %163 = arith.cmpi eq, %27, %162 : vector<1x50xi32>
    %164 = vector.shape_cast %163 : vector<1x50xi1> to vector<1x50xi1>
    %165 = vector.broadcast %164 : vector<1x50xi1> to vector<8x50xi1>
    %166 = vector.shape_cast %151 : vector<8x1xf32> to vector<8x1xf32>
    %167 = vector.broadcast %166 : vector<8x1xf32> to vector<8x50xf32>
    %168 = arith.select %165, %167, %144 : vector<8x50xi1>, vector<8x50xf32>
    %169 = vector.shape_cast %163 : vector<1x50xi1> to vector<1x50xi1>
    %170 = vector.broadcast %169 : vector<1x50xi1> to vector<8x50xi1>
    %171 = vector.shape_cast %161 : vector<8x1xi32> to vector<8x1xi32>
    %172 = vector.broadcast %171 : vector<8x1xi32> to vector<8x50xi32>
    %173 = arith.select %170, %172, %149 : vector<8x50xi1>, vector<8x50xi32>
    %c6_i32 = arith.constant 6 : i32
    %cst_37 = arith.constant dense<0xFF800000> : vector<8xf32>
    %174 = vector.multi_reduction <maximumf>, %155, %cst_37 [1] : vector<8x256xf32> to vector<8xf32>
    %175 = vector.shape_cast %174 : vector<8xf32> to vector<8x1xf32>
    %176 = vector.broadcast %175 : vector<8x1xf32> to vector<8x256xf32>
    %177 = arith.cmpf oeq, %155, %176 : vector<8x256xf32>
    %cst_38 = arith.constant 0.000000e+00 : f32
    %178 = vector.broadcast %cst_38 : f32 to vector<8x256xf32>
    %179 = arith.select %177, %178, %155 : vector<8x256xi1>, vector<8x256xf32>
    %c256_i32_39 = arith.constant 256 : i32
    %180 = vector.shape_cast %26 : vector<1x256xi32> to vector<1x256xi32>
    %181 = vector.broadcast %180 : vector<1x256xi32> to vector<8x256xi32>
    %182 = vector.broadcast %c256_i32_39 : i32 to vector<8x256xi32>
    %183 = arith.select %177, %181, %182 : vector<8x256xi1>, vector<8x256xi32>
    %cst_40 = arith.constant dense<2147483647> : vector<8xi32>
    %184 = vector.multi_reduction <minsi>, %183, %cst_40 [1] : vector<8x256xi32> to vector<8xi32>
    %185 = vector.shape_cast %184 : vector<8xi32> to vector<8x1xi32>
    %186 = vector.broadcast %c6_i32 : i32 to vector<1x50xi32>
    %187 = arith.cmpi eq, %27, %186 : vector<1x50xi32>
    %188 = vector.shape_cast %187 : vector<1x50xi1> to vector<1x50xi1>
    %189 = vector.broadcast %188 : vector<1x50xi1> to vector<8x50xi1>
    %190 = vector.shape_cast %175 : vector<8x1xf32> to vector<8x1xf32>
    %191 = vector.broadcast %190 : vector<8x1xf32> to vector<8x50xf32>
    %192 = arith.select %189, %191, %168 : vector<8x50xi1>, vector<8x50xf32>
    %193 = vector.shape_cast %187 : vector<1x50xi1> to vector<1x50xi1>
    %194 = vector.broadcast %193 : vector<1x50xi1> to vector<8x50xi1>
    %195 = vector.shape_cast %185 : vector<8x1xi32> to vector<8x1xi32>
    %196 = vector.broadcast %195 : vector<8x1xi32> to vector<8x50xi32>
    %197 = arith.select %194, %196, %173 : vector<8x50xi1>, vector<8x50xi32>
    %c7_i32 = arith.constant 7 : i32
    %cst_41 = arith.constant dense<0xFF800000> : vector<8xf32>
    %198 = vector.multi_reduction <maximumf>, %179, %cst_41 [1] : vector<8x256xf32> to vector<8xf32>
    %199 = vector.shape_cast %198 : vector<8xf32> to vector<8x1xf32>
    %200 = vector.broadcast %199 : vector<8x1xf32> to vector<8x256xf32>
    %201 = arith.cmpf oeq, %179, %200 : vector<8x256xf32>
    %cst_42 = arith.constant 0.000000e+00 : f32
    %202 = vector.broadcast %cst_42 : f32 to vector<8x256xf32>
    %203 = arith.select %201, %202, %179 : vector<8x256xi1>, vector<8x256xf32>
    %c256_i32_43 = arith.constant 256 : i32
    %204 = vector.shape_cast %26 : vector<1x256xi32> to vector<1x256xi32>
    %205 = vector.broadcast %204 : vector<1x256xi32> to vector<8x256xi32>
    %206 = vector.broadcast %c256_i32_43 : i32 to vector<8x256xi32>
    %207 = arith.select %201, %205, %206 : vector<8x256xi1>, vector<8x256xi32>
    %cst_44 = arith.constant dense<2147483647> : vector<8xi32>
    %208 = vector.multi_reduction <minsi>, %207, %cst_44 [1] : vector<8x256xi32> to vector<8xi32>
    %209 = vector.shape_cast %208 : vector<8xi32> to vector<8x1xi32>
    %210 = vector.broadcast %c7_i32 : i32 to vector<1x50xi32>
    %211 = arith.cmpi eq, %27, %210 : vector<1x50xi32>
    %212 = vector.shape_cast %211 : vector<1x50xi1> to vector<1x50xi1>
    %213 = vector.broadcast %212 : vector<1x50xi1> to vector<8x50xi1>
    %214 = vector.shape_cast %199 : vector<8x1xf32> to vector<8x1xf32>
    %215 = vector.broadcast %214 : vector<8x1xf32> to vector<8x50xf32>
    %216 = arith.select %213, %215, %192 : vector<8x50xi1>, vector<8x50xf32>
    %217 = vector.shape_cast %211 : vector<1x50xi1> to vector<1x50xi1>
    %218 = vector.broadcast %217 : vector<1x50xi1> to vector<8x50xi1>
    %219 = vector.shape_cast %209 : vector<8x1xi32> to vector<8x1xi32>
    %220 = vector.broadcast %219 : vector<8x1xi32> to vector<8x50xi32>
    %221 = arith.select %218, %220, %197 : vector<8x50xi1>, vector<8x50xi32>
    %c8_i32 = arith.constant 8 : i32
    %cst_45 = arith.constant dense<0xFF800000> : vector<8xf32>
    %222 = vector.multi_reduction <maximumf>, %203, %cst_45 [1] : vector<8x256xf32> to vector<8xf32>
    %223 = vector.shape_cast %222 : vector<8xf32> to vector<8x1xf32>
    %224 = vector.broadcast %223 : vector<8x1xf32> to vector<8x256xf32>
    %225 = arith.cmpf oeq, %203, %224 : vector<8x256xf32>
    %cst_46 = arith.constant 0.000000e+00 : f32
    %226 = vector.broadcast %cst_46 : f32 to vector<8x256xf32>
    %227 = arith.select %225, %226, %203 : vector<8x256xi1>, vector<8x256xf32>
    %c256_i32_47 = arith.constant 256 : i32
    %228 = vector.shape_cast %26 : vector<1x256xi32> to vector<1x256xi32>
    %229 = vector.broadcast %228 : vector<1x256xi32> to vector<8x256xi32>
    %230 = vector.broadcast %c256_i32_47 : i32 to vector<8x256xi32>
    %231 = arith.select %225, %229, %230 : vector<8x256xi1>, vector<8x256xi32>
    %cst_48 = arith.constant dense<2147483647> : vector<8xi32>
    %232 = vector.multi_reduction <minsi>, %231, %cst_48 [1] : vector<8x256xi32> to vector<8xi32>
    %233 = vector.shape_cast %232 : vector<8xi32> to vector<8x1xi32>
    %234 = vector.broadcast %c8_i32 : i32 to vector<1x50xi32>
    %235 = arith.cmpi eq, %27, %234 : vector<1x50xi32>
    %236 = vector.shape_cast %235 : vector<1x50xi1> to vector<1x50xi1>
    %237 = vector.broadcast %236 : vector<1x50xi1> to vector<8x50xi1>
    %238 = vector.shape_cast %223 : vector<8x1xf32> to vector<8x1xf32>
    %239 = vector.broadcast %238 : vector<8x1xf32> to vector<8x50xf32>
    %240 = arith.select %237, %239, %216 : vector<8x50xi1>, vector<8x50xf32>
    %241 = vector.shape_cast %235 : vector<1x50xi1> to vector<1x50xi1>
    %242 = vector.broadcast %241 : vector<1x50xi1> to vector<8x50xi1>
    %243 = vector.shape_cast %233 : vector<8x1xi32> to vector<8x1xi32>
    %244 = vector.broadcast %243 : vector<8x1xi32> to vector<8x50xi32>
    %245 = arith.select %242, %244, %221 : vector<8x50xi1>, vector<8x50xi32>
    %c9_i32 = arith.constant 9 : i32
    %cst_49 = arith.constant dense<0xFF800000> : vector<8xf32>
    %246 = vector.multi_reduction <maximumf>, %227, %cst_49 [1] : vector<8x256xf32> to vector<8xf32>
    %247 = vector.shape_cast %246 : vector<8xf32> to vector<8x1xf32>
    %248 = vector.broadcast %247 : vector<8x1xf32> to vector<8x256xf32>
    %249 = arith.cmpf oeq, %227, %248 : vector<8x256xf32>
    %cst_50 = arith.constant 0.000000e+00 : f32
    %250 = vector.broadcast %cst_50 : f32 to vector<8x256xf32>
    %251 = arith.select %249, %250, %227 : vector<8x256xi1>, vector<8x256xf32>
    %c256_i32_51 = arith.constant 256 : i32
    %252 = vector.shape_cast %26 : vector<1x256xi32> to vector<1x256xi32>
    %253 = vector.broadcast %252 : vector<1x256xi32> to vector<8x256xi32>
    %254 = vector.broadcast %c256_i32_51 : i32 to vector<8x256xi32>
    %255 = arith.select %249, %253, %254 : vector<8x256xi1>, vector<8x256xi32>
    %cst_52 = arith.constant dense<2147483647> : vector<8xi32>
    %256 = vector.multi_reduction <minsi>, %255, %cst_52 [1] : vector<8x256xi32> to vector<8xi32>
    %257 = vector.shape_cast %256 : vector<8xi32> to vector<8x1xi32>
    %258 = vector.broadcast %c9_i32 : i32 to vector<1x50xi32>
    %259 = arith.cmpi eq, %27, %258 : vector<1x50xi32>
    %260 = vector.shape_cast %259 : vector<1x50xi1> to vector<1x50xi1>
    %261 = vector.broadcast %260 : vector<1x50xi1> to vector<8x50xi1>
    %262 = vector.shape_cast %247 : vector<8x1xf32> to vector<8x1xf32>
    %263 = vector.broadcast %262 : vector<8x1xf32> to vector<8x50xf32>
    %264 = arith.select %261, %263, %240 : vector<8x50xi1>, vector<8x50xf32>
    %265 = vector.shape_cast %259 : vector<1x50xi1> to vector<1x50xi1>
    %266 = vector.broadcast %265 : vector<1x50xi1> to vector<8x50xi1>
    %267 = vector.shape_cast %257 : vector<8x1xi32> to vector<8x1xi32>
    %268 = vector.broadcast %267 : vector<8x1xi32> to vector<8x50xi32>
    %269 = arith.select %266, %268, %245 : vector<8x50xi1>, vector<8x50xi32>
    %c10_i32 = arith.constant 10 : i32
    %cst_53 = arith.constant dense<0xFF800000> : vector<8xf32>
    %270 = vector.multi_reduction <maximumf>, %251, %cst_53 [1] : vector<8x256xf32> to vector<8xf32>
    %271 = vector.shape_cast %270 : vector<8xf32> to vector<8x1xf32>
    %272 = vector.broadcast %271 : vector<8x1xf32> to vector<8x256xf32>
    %273 = arith.cmpf oeq, %251, %272 : vector<8x256xf32>
    %cst_54 = arith.constant 0.000000e+00 : f32
    %274 = vector.broadcast %cst_54 : f32 to vector<8x256xf32>
    %275 = arith.select %273, %274, %251 : vector<8x256xi1>, vector<8x256xf32>
    %c256_i32_55 = arith.constant 256 : i32
    %276 = vector.shape_cast %26 : vector<1x256xi32> to vector<1x256xi32>
    %277 = vector.broadcast %276 : vector<1x256xi32> to vector<8x256xi32>
    %278 = vector.broadcast %c256_i32_55 : i32 to vector<8x256xi32>
    %279 = arith.select %273, %277, %278 : vector<8x256xi1>, vector<8x256xi32>
    %cst_56 = arith.constant dense<2147483647> : vector<8xi32>
    %280 = vector.multi_reduction <minsi>, %279, %cst_56 [1] : vector<8x256xi32> to vector<8xi32>
    %281 = vector.shape_cast %280 : vector<8xi32> to vector<8x1xi32>
    %282 = vector.broadcast %c10_i32 : i32 to vector<1x50xi32>
    %283 = arith.cmpi eq, %27, %282 : vector<1x50xi32>
    %284 = vector.shape_cast %283 : vector<1x50xi1> to vector<1x50xi1>
    %285 = vector.broadcast %284 : vector<1x50xi1> to vector<8x50xi1>
    %286 = vector.shape_cast %271 : vector<8x1xf32> to vector<8x1xf32>
    %287 = vector.broadcast %286 : vector<8x1xf32> to vector<8x50xf32>
    %288 = arith.select %285, %287, %264 : vector<8x50xi1>, vector<8x50xf32>
    %289 = vector.shape_cast %283 : vector<1x50xi1> to vector<1x50xi1>
    %290 = vector.broadcast %289 : vector<1x50xi1> to vector<8x50xi1>
    %291 = vector.shape_cast %281 : vector<8x1xi32> to vector<8x1xi32>
    %292 = vector.broadcast %291 : vector<8x1xi32> to vector<8x50xi32>
    %293 = arith.select %290, %292, %269 : vector<8x50xi1>, vector<8x50xi32>
    %c11_i32 = arith.constant 11 : i32
    %cst_57 = arith.constant dense<0xFF800000> : vector<8xf32>
    %294 = vector.multi_reduction <maximumf>, %275, %cst_57 [1] : vector<8x256xf32> to vector<8xf32>
    %295 = vector.shape_cast %294 : vector<8xf32> to vector<8x1xf32>
    %296 = vector.broadcast %295 : vector<8x1xf32> to vector<8x256xf32>
    %297 = arith.cmpf oeq, %275, %296 : vector<8x256xf32>
    %cst_58 = arith.constant 0.000000e+00 : f32
    %298 = vector.broadcast %cst_58 : f32 to vector<8x256xf32>
    %299 = arith.select %297, %298, %275 : vector<8x256xi1>, vector<8x256xf32>
    %c256_i32_59 = arith.constant 256 : i32
    %300 = vector.shape_cast %26 : vector<1x256xi32> to vector<1x256xi32>
    %301 = vector.broadcast %300 : vector<1x256xi32> to vector<8x256xi32>
    %302 = vector.broadcast %c256_i32_59 : i32 to vector<8x256xi32>
    %303 = arith.select %297, %301, %302 : vector<8x256xi1>, vector<8x256xi32>
    %cst_60 = arith.constant dense<2147483647> : vector<8xi32>
    %304 = vector.multi_reduction <minsi>, %303, %cst_60 [1] : vector<8x256xi32> to vector<8xi32>
    %305 = vector.shape_cast %304 : vector<8xi32> to vector<8x1xi32>
    %306 = vector.broadcast %c11_i32 : i32 to vector<1x50xi32>
    %307 = arith.cmpi eq, %27, %306 : vector<1x50xi32>
    %308 = vector.shape_cast %307 : vector<1x50xi1> to vector<1x50xi1>
    %309 = vector.broadcast %308 : vector<1x50xi1> to vector<8x50xi1>
    %310 = vector.shape_cast %295 : vector<8x1xf32> to vector<8x1xf32>
    %311 = vector.broadcast %310 : vector<8x1xf32> to vector<8x50xf32>
    %312 = arith.select %309, %311, %288 : vector<8x50xi1>, vector<8x50xf32>
    %313 = vector.shape_cast %307 : vector<1x50xi1> to vector<1x50xi1>
    %314 = vector.broadcast %313 : vector<1x50xi1> to vector<8x50xi1>
    %315 = vector.shape_cast %305 : vector<8x1xi32> to vector<8x1xi32>
    %316 = vector.broadcast %315 : vector<8x1xi32> to vector<8x50xi32>
    %317 = arith.select %314, %316, %293 : vector<8x50xi1>, vector<8x50xi32>
    %c12_i32 = arith.constant 12 : i32
    %cst_61 = arith.constant dense<0xFF800000> : vector<8xf32>
    %318 = vector.multi_reduction <maximumf>, %299, %cst_61 [1] : vector<8x256xf32> to vector<8xf32>
    %319 = vector.shape_cast %318 : vector<8xf32> to vector<8x1xf32>
    %320 = vector.broadcast %319 : vector<8x1xf32> to vector<8x256xf32>
    %321 = arith.cmpf oeq, %299, %320 : vector<8x256xf32>
    %cst_62 = arith.constant 0.000000e+00 : f32
    %322 = vector.broadcast %cst_62 : f32 to vector<8x256xf32>
    %323 = arith.select %321, %322, %299 : vector<8x256xi1>, vector<8x256xf32>
    %c256_i32_63 = arith.constant 256 : i32
    %324 = vector.shape_cast %26 : vector<1x256xi32> to vector<1x256xi32>
    %325 = vector.broadcast %324 : vector<1x256xi32> to vector<8x256xi32>
    %326 = vector.broadcast %c256_i32_63 : i32 to vector<8x256xi32>
    %327 = arith.select %321, %325, %326 : vector<8x256xi1>, vector<8x256xi32>
    %cst_64 = arith.constant dense<2147483647> : vector<8xi32>
    %328 = vector.multi_reduction <minsi>, %327, %cst_64 [1] : vector<8x256xi32> to vector<8xi32>
    %329 = vector.shape_cast %328 : vector<8xi32> to vector<8x1xi32>
    %330 = vector.broadcast %c12_i32 : i32 to vector<1x50xi32>
    %331 = arith.cmpi eq, %27, %330 : vector<1x50xi32>
    %332 = vector.shape_cast %331 : vector<1x50xi1> to vector<1x50xi1>
    %333 = vector.broadcast %332 : vector<1x50xi1> to vector<8x50xi1>
    %334 = vector.shape_cast %319 : vector<8x1xf32> to vector<8x1xf32>
    %335 = vector.broadcast %334 : vector<8x1xf32> to vector<8x50xf32>
    %336 = arith.select %333, %335, %312 : vector<8x50xi1>, vector<8x50xf32>
    %337 = vector.shape_cast %331 : vector<1x50xi1> to vector<1x50xi1>
    %338 = vector.broadcast %337 : vector<1x50xi1> to vector<8x50xi1>
    %339 = vector.shape_cast %329 : vector<8x1xi32> to vector<8x1xi32>
    %340 = vector.broadcast %339 : vector<8x1xi32> to vector<8x50xi32>
    %341 = arith.select %338, %340, %317 : vector<8x50xi1>, vector<8x50xi32>
    %c13_i32 = arith.constant 13 : i32
    %cst_65 = arith.constant dense<0xFF800000> : vector<8xf32>
    %342 = vector.multi_reduction <maximumf>, %323, %cst_65 [1] : vector<8x256xf32> to vector<8xf32>
    %343 = vector.shape_cast %342 : vector<8xf32> to vector<8x1xf32>
    %344 = vector.broadcast %343 : vector<8x1xf32> to vector<8x256xf32>
    %345 = arith.cmpf oeq, %323, %344 : vector<8x256xf32>
    %cst_66 = arith.constant 0.000000e+00 : f32
    %346 = vector.broadcast %cst_66 : f32 to vector<8x256xf32>
    %347 = arith.select %345, %346, %323 : vector<8x256xi1>, vector<8x256xf32>
    %c256_i32_67 = arith.constant 256 : i32
    %348 = vector.shape_cast %26 : vector<1x256xi32> to vector<1x256xi32>
    %349 = vector.broadcast %348 : vector<1x256xi32> to vector<8x256xi32>
    %350 = vector.broadcast %c256_i32_67 : i32 to vector<8x256xi32>
    %351 = arith.select %345, %349, %350 : vector<8x256xi1>, vector<8x256xi32>
    %cst_68 = arith.constant dense<2147483647> : vector<8xi32>
    %352 = vector.multi_reduction <minsi>, %351, %cst_68 [1] : vector<8x256xi32> to vector<8xi32>
    %353 = vector.shape_cast %352 : vector<8xi32> to vector<8x1xi32>
    %354 = vector.broadcast %c13_i32 : i32 to vector<1x50xi32>
    %355 = arith.cmpi eq, %27, %354 : vector<1x50xi32>
    %356 = vector.shape_cast %355 : vector<1x50xi1> to vector<1x50xi1>
    %357 = vector.broadcast %356 : vector<1x50xi1> to vector<8x50xi1>
    %358 = vector.shape_cast %343 : vector<8x1xf32> to vector<8x1xf32>
    %359 = vector.broadcast %358 : vector<8x1xf32> to vector<8x50xf32>
    %360 = arith.select %357, %359, %336 : vector<8x50xi1>, vector<8x50xf32>
    %361 = vector.shape_cast %355 : vector<1x50xi1> to vector<1x50xi1>
    %362 = vector.broadcast %361 : vector<1x50xi1> to vector<8x50xi1>
    %363 = vector.shape_cast %353 : vector<8x1xi32> to vector<8x1xi32>
    %364 = vector.broadcast %363 : vector<8x1xi32> to vector<8x50xi32>
    %365 = arith.select %362, %364, %341 : vector<8x50xi1>, vector<8x50xi32>
    %c14_i32 = arith.constant 14 : i32
    %cst_69 = arith.constant dense<0xFF800000> : vector<8xf32>
    %366 = vector.multi_reduction <maximumf>, %347, %cst_69 [1] : vector<8x256xf32> to vector<8xf32>
    %367 = vector.shape_cast %366 : vector<8xf32> to vector<8x1xf32>
    %368 = vector.broadcast %367 : vector<8x1xf32> to vector<8x256xf32>
    %369 = arith.cmpf oeq, %347, %368 : vector<8x256xf32>
    %cst_70 = arith.constant 0.000000e+00 : f32
    %370 = vector.broadcast %cst_70 : f32 to vector<8x256xf32>
    %371 = arith.select %369, %370, %347 : vector<8x256xi1>, vector<8x256xf32>
    %c256_i32_71 = arith.constant 256 : i32
    %372 = vector.shape_cast %26 : vector<1x256xi32> to vector<1x256xi32>
    %373 = vector.broadcast %372 : vector<1x256xi32> to vector<8x256xi32>
    %374 = vector.broadcast %c256_i32_71 : i32 to vector<8x256xi32>
    %375 = arith.select %369, %373, %374 : vector<8x256xi1>, vector<8x256xi32>
    %cst_72 = arith.constant dense<2147483647> : vector<8xi32>
    %376 = vector.multi_reduction <minsi>, %375, %cst_72 [1] : vector<8x256xi32> to vector<8xi32>
    %377 = vector.shape_cast %376 : vector<8xi32> to vector<8x1xi32>
    %378 = vector.broadcast %c14_i32 : i32 to vector<1x50xi32>
    %379 = arith.cmpi eq, %27, %378 : vector<1x50xi32>
    %380 = vector.shape_cast %379 : vector<1x50xi1> to vector<1x50xi1>
    %381 = vector.broadcast %380 : vector<1x50xi1> to vector<8x50xi1>
    %382 = vector.shape_cast %367 : vector<8x1xf32> to vector<8x1xf32>
    %383 = vector.broadcast %382 : vector<8x1xf32> to vector<8x50xf32>
    %384 = arith.select %381, %383, %360 : vector<8x50xi1>, vector<8x50xf32>
    %385 = vector.shape_cast %379 : vector<1x50xi1> to vector<1x50xi1>
    %386 = vector.broadcast %385 : vector<1x50xi1> to vector<8x50xi1>
    %387 = vector.shape_cast %377 : vector<8x1xi32> to vector<8x1xi32>
    %388 = vector.broadcast %387 : vector<8x1xi32> to vector<8x50xi32>
    %389 = arith.select %386, %388, %365 : vector<8x50xi1>, vector<8x50xi32>
    %c15_i32 = arith.constant 15 : i32
    %cst_73 = arith.constant dense<0xFF800000> : vector<8xf32>
    %390 = vector.multi_reduction <maximumf>, %371, %cst_73 [1] : vector<8x256xf32> to vector<8xf32>
    %391 = vector.shape_cast %390 : vector<8xf32> to vector<8x1xf32>
    %392 = vector.broadcast %391 : vector<8x1xf32> to vector<8x256xf32>
    %393 = arith.cmpf oeq, %371, %392 : vector<8x256xf32>
    %cst_74 = arith.constant 0.000000e+00 : f32
    %394 = vector.broadcast %cst_74 : f32 to vector<8x256xf32>
    %395 = arith.select %393, %394, %371 : vector<8x256xi1>, vector<8x256xf32>
    %c256_i32_75 = arith.constant 256 : i32
    %396 = vector.shape_cast %26 : vector<1x256xi32> to vector<1x256xi32>
    %397 = vector.broadcast %396 : vector<1x256xi32> to vector<8x256xi32>
    %398 = vector.broadcast %c256_i32_75 : i32 to vector<8x256xi32>
    %399 = arith.select %393, %397, %398 : vector<8x256xi1>, vector<8x256xi32>
    %cst_76 = arith.constant dense<2147483647> : vector<8xi32>
    %400 = vector.multi_reduction <minsi>, %399, %cst_76 [1] : vector<8x256xi32> to vector<8xi32>
    %401 = vector.shape_cast %400 : vector<8xi32> to vector<8x1xi32>
    %402 = vector.broadcast %c15_i32 : i32 to vector<1x50xi32>
    %403 = arith.cmpi eq, %27, %402 : vector<1x50xi32>
    %404 = vector.shape_cast %403 : vector<1x50xi1> to vector<1x50xi1>
    %405 = vector.broadcast %404 : vector<1x50xi1> to vector<8x50xi1>
    %406 = vector.shape_cast %391 : vector<8x1xf32> to vector<8x1xf32>
    %407 = vector.broadcast %406 : vector<8x1xf32> to vector<8x50xf32>
    %408 = arith.select %405, %407, %384 : vector<8x50xi1>, vector<8x50xf32>
    %409 = vector.shape_cast %403 : vector<1x50xi1> to vector<1x50xi1>
    %410 = vector.broadcast %409 : vector<1x50xi1> to vector<8x50xi1>
    %411 = vector.shape_cast %401 : vector<8x1xi32> to vector<8x1xi32>
    %412 = vector.broadcast %411 : vector<8x1xi32> to vector<8x50xi32>
    %413 = arith.select %410, %412, %389 : vector<8x50xi1>, vector<8x50xi32>
    %c16_i32 = arith.constant 16 : i32
    %cst_77 = arith.constant dense<0xFF800000> : vector<8xf32>
    %414 = vector.multi_reduction <maximumf>, %395, %cst_77 [1] : vector<8x256xf32> to vector<8xf32>
    %415 = vector.shape_cast %414 : vector<8xf32> to vector<8x1xf32>
    %416 = vector.broadcast %415 : vector<8x1xf32> to vector<8x256xf32>
    %417 = arith.cmpf oeq, %395, %416 : vector<8x256xf32>
    %cst_78 = arith.constant 0.000000e+00 : f32
    %418 = vector.broadcast %cst_78 : f32 to vector<8x256xf32>
    %419 = arith.select %417, %418, %395 : vector<8x256xi1>, vector<8x256xf32>
    %c256_i32_79 = arith.constant 256 : i32
    %420 = vector.shape_cast %26 : vector<1x256xi32> to vector<1x256xi32>
    %421 = vector.broadcast %420 : vector<1x256xi32> to vector<8x256xi32>
    %422 = vector.broadcast %c256_i32_79 : i32 to vector<8x256xi32>
    %423 = arith.select %417, %421, %422 : vector<8x256xi1>, vector<8x256xi32>
    %cst_80 = arith.constant dense<2147483647> : vector<8xi32>
    %424 = vector.multi_reduction <minsi>, %423, %cst_80 [1] : vector<8x256xi32> to vector<8xi32>
    %425 = vector.shape_cast %424 : vector<8xi32> to vector<8x1xi32>
    %426 = vector.broadcast %c16_i32 : i32 to vector<1x50xi32>
    %427 = arith.cmpi eq, %27, %426 : vector<1x50xi32>
    %428 = vector.shape_cast %427 : vector<1x50xi1> to vector<1x50xi1>
    %429 = vector.broadcast %428 : vector<1x50xi1> to vector<8x50xi1>
    %430 = vector.shape_cast %415 : vector<8x1xf32> to vector<8x1xf32>
    %431 = vector.broadcast %430 : vector<8x1xf32> to vector<8x50xf32>
    %432 = arith.select %429, %431, %408 : vector<8x50xi1>, vector<8x50xf32>
    %433 = vector.shape_cast %427 : vector<1x50xi1> to vector<1x50xi1>
    %434 = vector.broadcast %433 : vector<1x50xi1> to vector<8x50xi1>
    %435 = vector.shape_cast %425 : vector<8x1xi32> to vector<8x1xi32>
    %436 = vector.broadcast %435 : vector<8x1xi32> to vector<8x50xi32>
    %437 = arith.select %434, %436, %413 : vector<8x50xi1>, vector<8x50xi32>
    %c17_i32 = arith.constant 17 : i32
    %cst_81 = arith.constant dense<0xFF800000> : vector<8xf32>
    %438 = vector.multi_reduction <maximumf>, %419, %cst_81 [1] : vector<8x256xf32> to vector<8xf32>
    %439 = vector.shape_cast %438 : vector<8xf32> to vector<8x1xf32>
    %440 = vector.broadcast %439 : vector<8x1xf32> to vector<8x256xf32>
    %441 = arith.cmpf oeq, %419, %440 : vector<8x256xf32>
    %cst_82 = arith.constant 0.000000e+00 : f32
    %442 = vector.broadcast %cst_82 : f32 to vector<8x256xf32>
    %443 = arith.select %441, %442, %419 : vector<8x256xi1>, vector<8x256xf32>
    %c256_i32_83 = arith.constant 256 : i32
    %444 = vector.shape_cast %26 : vector<1x256xi32> to vector<1x256xi32>
    %445 = vector.broadcast %444 : vector<1x256xi32> to vector<8x256xi32>
    %446 = vector.broadcast %c256_i32_83 : i32 to vector<8x256xi32>
    %447 = arith.select %441, %445, %446 : vector<8x256xi1>, vector<8x256xi32>
    %cst_84 = arith.constant dense<2147483647> : vector<8xi32>
    %448 = vector.multi_reduction <minsi>, %447, %cst_84 [1] : vector<8x256xi32> to vector<8xi32>
    %449 = vector.shape_cast %448 : vector<8xi32> to vector<8x1xi32>
    %450 = vector.broadcast %c17_i32 : i32 to vector<1x50xi32>
    %451 = arith.cmpi eq, %27, %450 : vector<1x50xi32>
    %452 = vector.shape_cast %451 : vector<1x50xi1> to vector<1x50xi1>
    %453 = vector.broadcast %452 : vector<1x50xi1> to vector<8x50xi1>
    %454 = vector.shape_cast %439 : vector<8x1xf32> to vector<8x1xf32>
    %455 = vector.broadcast %454 : vector<8x1xf32> to vector<8x50xf32>
    %456 = arith.select %453, %455, %432 : vector<8x50xi1>, vector<8x50xf32>
    %457 = vector.shape_cast %451 : vector<1x50xi1> to vector<1x50xi1>
    %458 = vector.broadcast %457 : vector<1x50xi1> to vector<8x50xi1>
    %459 = vector.shape_cast %449 : vector<8x1xi32> to vector<8x1xi32>
    %460 = vector.broadcast %459 : vector<8x1xi32> to vector<8x50xi32>
    %461 = arith.select %458, %460, %437 : vector<8x50xi1>, vector<8x50xi32>
    %c18_i32 = arith.constant 18 : i32
    %cst_85 = arith.constant dense<0xFF800000> : vector<8xf32>
    %462 = vector.multi_reduction <maximumf>, %443, %cst_85 [1] : vector<8x256xf32> to vector<8xf32>
    %463 = vector.shape_cast %462 : vector<8xf32> to vector<8x1xf32>
    %464 = vector.broadcast %463 : vector<8x1xf32> to vector<8x256xf32>
    %465 = arith.cmpf oeq, %443, %464 : vector<8x256xf32>
    %cst_86 = arith.constant 0.000000e+00 : f32
    %466 = vector.broadcast %cst_86 : f32 to vector<8x256xf32>
    %467 = arith.select %465, %466, %443 : vector<8x256xi1>, vector<8x256xf32>
    %c256_i32_87 = arith.constant 256 : i32
    %468 = vector.shape_cast %26 : vector<1x256xi32> to vector<1x256xi32>
    %469 = vector.broadcast %468 : vector<1x256xi32> to vector<8x256xi32>
    %470 = vector.broadcast %c256_i32_87 : i32 to vector<8x256xi32>
    %471 = arith.select %465, %469, %470 : vector<8x256xi1>, vector<8x256xi32>
    %cst_88 = arith.constant dense<2147483647> : vector<8xi32>
    %472 = vector.multi_reduction <minsi>, %471, %cst_88 [1] : vector<8x256xi32> to vector<8xi32>
    %473 = vector.shape_cast %472 : vector<8xi32> to vector<8x1xi32>
    %474 = vector.broadcast %c18_i32 : i32 to vector<1x50xi32>
    %475 = arith.cmpi eq, %27, %474 : vector<1x50xi32>
    %476 = vector.shape_cast %475 : vector<1x50xi1> to vector<1x50xi1>
    %477 = vector.broadcast %476 : vector<1x50xi1> to vector<8x50xi1>
    %478 = vector.shape_cast %463 : vector<8x1xf32> to vector<8x1xf32>
    %479 = vector.broadcast %478 : vector<8x1xf32> to vector<8x50xf32>
    %480 = arith.select %477, %479, %456 : vector<8x50xi1>, vector<8x50xf32>
    %481 = vector.shape_cast %475 : vector<1x50xi1> to vector<1x50xi1>
    %482 = vector.broadcast %481 : vector<1x50xi1> to vector<8x50xi1>
    %483 = vector.shape_cast %473 : vector<8x1xi32> to vector<8x1xi32>
    %484 = vector.broadcast %483 : vector<8x1xi32> to vector<8x50xi32>
    %485 = arith.select %482, %484, %461 : vector<8x50xi1>, vector<8x50xi32>
    %c19_i32 = arith.constant 19 : i32
    %cst_89 = arith.constant dense<0xFF800000> : vector<8xf32>
    %486 = vector.multi_reduction <maximumf>, %467, %cst_89 [1] : vector<8x256xf32> to vector<8xf32>
    %487 = vector.shape_cast %486 : vector<8xf32> to vector<8x1xf32>
    %488 = vector.broadcast %487 : vector<8x1xf32> to vector<8x256xf32>
    %489 = arith.cmpf oeq, %467, %488 : vector<8x256xf32>
    %cst_90 = arith.constant 0.000000e+00 : f32
    %490 = vector.broadcast %cst_90 : f32 to vector<8x256xf32>
    %491 = arith.select %489, %490, %467 : vector<8x256xi1>, vector<8x256xf32>
    %c256_i32_91 = arith.constant 256 : i32
    %492 = vector.shape_cast %26 : vector<1x256xi32> to vector<1x256xi32>
    %493 = vector.broadcast %492 : vector<1x256xi32> to vector<8x256xi32>
    %494 = vector.broadcast %c256_i32_91 : i32 to vector<8x256xi32>
    %495 = arith.select %489, %493, %494 : vector<8x256xi1>, vector<8x256xi32>
    %cst_92 = arith.constant dense<2147483647> : vector<8xi32>
    %496 = vector.multi_reduction <minsi>, %495, %cst_92 [1] : vector<8x256xi32> to vector<8xi32>
    %497 = vector.shape_cast %496 : vector<8xi32> to vector<8x1xi32>
    %498 = vector.broadcast %c19_i32 : i32 to vector<1x50xi32>
    %499 = arith.cmpi eq, %27, %498 : vector<1x50xi32>
    %500 = vector.shape_cast %499 : vector<1x50xi1> to vector<1x50xi1>
    %501 = vector.broadcast %500 : vector<1x50xi1> to vector<8x50xi1>
    %502 = vector.shape_cast %487 : vector<8x1xf32> to vector<8x1xf32>
    %503 = vector.broadcast %502 : vector<8x1xf32> to vector<8x50xf32>
    %504 = arith.select %501, %503, %480 : vector<8x50xi1>, vector<8x50xf32>
    %505 = vector.shape_cast %499 : vector<1x50xi1> to vector<1x50xi1>
    %506 = vector.broadcast %505 : vector<1x50xi1> to vector<8x50xi1>
    %507 = vector.shape_cast %497 : vector<8x1xi32> to vector<8x1xi32>
    %508 = vector.broadcast %507 : vector<8x1xi32> to vector<8x50xi32>
    %509 = arith.select %506, %508, %485 : vector<8x50xi1>, vector<8x50xi32>
    %c20_i32 = arith.constant 20 : i32
    %cst_93 = arith.constant dense<0xFF800000> : vector<8xf32>
    %510 = vector.multi_reduction <maximumf>, %491, %cst_93 [1] : vector<8x256xf32> to vector<8xf32>
    %511 = vector.shape_cast %510 : vector<8xf32> to vector<8x1xf32>
    %512 = vector.broadcast %511 : vector<8x1xf32> to vector<8x256xf32>
    %513 = arith.cmpf oeq, %491, %512 : vector<8x256xf32>
    %cst_94 = arith.constant 0.000000e+00 : f32
    %514 = vector.broadcast %cst_94 : f32 to vector<8x256xf32>
    %515 = arith.select %513, %514, %491 : vector<8x256xi1>, vector<8x256xf32>
    %c256_i32_95 = arith.constant 256 : i32
    %516 = vector.shape_cast %26 : vector<1x256xi32> to vector<1x256xi32>
    %517 = vector.broadcast %516 : vector<1x256xi32> to vector<8x256xi32>
    %518 = vector.broadcast %c256_i32_95 : i32 to vector<8x256xi32>
    %519 = arith.select %513, %517, %518 : vector<8x256xi1>, vector<8x256xi32>
    %cst_96 = arith.constant dense<2147483647> : vector<8xi32>
    %520 = vector.multi_reduction <minsi>, %519, %cst_96 [1] : vector<8x256xi32> to vector<8xi32>
    %521 = vector.shape_cast %520 : vector<8xi32> to vector<8x1xi32>
    %522 = vector.broadcast %c20_i32 : i32 to vector<1x50xi32>
    %523 = arith.cmpi eq, %27, %522 : vector<1x50xi32>
    %524 = vector.shape_cast %523 : vector<1x50xi1> to vector<1x50xi1>
    %525 = vector.broadcast %524 : vector<1x50xi1> to vector<8x50xi1>
    %526 = vector.shape_cast %511 : vector<8x1xf32> to vector<8x1xf32>
    %527 = vector.broadcast %526 : vector<8x1xf32> to vector<8x50xf32>
    %528 = arith.select %525, %527, %504 : vector<8x50xi1>, vector<8x50xf32>
    %529 = vector.shape_cast %523 : vector<1x50xi1> to vector<1x50xi1>
    %530 = vector.broadcast %529 : vector<1x50xi1> to vector<8x50xi1>
    %531 = vector.shape_cast %521 : vector<8x1xi32> to vector<8x1xi32>
    %532 = vector.broadcast %531 : vector<8x1xi32> to vector<8x50xi32>
    %533 = arith.select %530, %532, %509 : vector<8x50xi1>, vector<8x50xi32>
    %c21_i32 = arith.constant 21 : i32
    %cst_97 = arith.constant dense<0xFF800000> : vector<8xf32>
    %534 = vector.multi_reduction <maximumf>, %515, %cst_97 [1] : vector<8x256xf32> to vector<8xf32>
    %535 = vector.shape_cast %534 : vector<8xf32> to vector<8x1xf32>
    %536 = vector.broadcast %535 : vector<8x1xf32> to vector<8x256xf32>
    %537 = arith.cmpf oeq, %515, %536 : vector<8x256xf32>
    %cst_98 = arith.constant 0.000000e+00 : f32
    %538 = vector.broadcast %cst_98 : f32 to vector<8x256xf32>
    %539 = arith.select %537, %538, %515 : vector<8x256xi1>, vector<8x256xf32>
    %c256_i32_99 = arith.constant 256 : i32
    %540 = vector.shape_cast %26 : vector<1x256xi32> to vector<1x256xi32>
    %541 = vector.broadcast %540 : vector<1x256xi32> to vector<8x256xi32>
    %542 = vector.broadcast %c256_i32_99 : i32 to vector<8x256xi32>
    %543 = arith.select %537, %541, %542 : vector<8x256xi1>, vector<8x256xi32>
    %cst_100 = arith.constant dense<2147483647> : vector<8xi32>
    %544 = vector.multi_reduction <minsi>, %543, %cst_100 [1] : vector<8x256xi32> to vector<8xi32>
    %545 = vector.shape_cast %544 : vector<8xi32> to vector<8x1xi32>
    %546 = vector.broadcast %c21_i32 : i32 to vector<1x50xi32>
    %547 = arith.cmpi eq, %27, %546 : vector<1x50xi32>
    %548 = vector.shape_cast %547 : vector<1x50xi1> to vector<1x50xi1>
    %549 = vector.broadcast %548 : vector<1x50xi1> to vector<8x50xi1>
    %550 = vector.shape_cast %535 : vector<8x1xf32> to vector<8x1xf32>
    %551 = vector.broadcast %550 : vector<8x1xf32> to vector<8x50xf32>
    %552 = arith.select %549, %551, %528 : vector<8x50xi1>, vector<8x50xf32>
    %553 = vector.shape_cast %547 : vector<1x50xi1> to vector<1x50xi1>
    %554 = vector.broadcast %553 : vector<1x50xi1> to vector<8x50xi1>
    %555 = vector.shape_cast %545 : vector<8x1xi32> to vector<8x1xi32>
    %556 = vector.broadcast %555 : vector<8x1xi32> to vector<8x50xi32>
    %557 = arith.select %554, %556, %533 : vector<8x50xi1>, vector<8x50xi32>
    %c22_i32 = arith.constant 22 : i32
    %cst_101 = arith.constant dense<0xFF800000> : vector<8xf32>
    %558 = vector.multi_reduction <maximumf>, %539, %cst_101 [1] : vector<8x256xf32> to vector<8xf32>
    %559 = vector.shape_cast %558 : vector<8xf32> to vector<8x1xf32>
    %560 = vector.broadcast %559 : vector<8x1xf32> to vector<8x256xf32>
    %561 = arith.cmpf oeq, %539, %560 : vector<8x256xf32>
    %cst_102 = arith.constant 0.000000e+00 : f32
    %562 = vector.broadcast %cst_102 : f32 to vector<8x256xf32>
    %563 = arith.select %561, %562, %539 : vector<8x256xi1>, vector<8x256xf32>
    %c256_i32_103 = arith.constant 256 : i32
    %564 = vector.shape_cast %26 : vector<1x256xi32> to vector<1x256xi32>
    %565 = vector.broadcast %564 : vector<1x256xi32> to vector<8x256xi32>
    %566 = vector.broadcast %c256_i32_103 : i32 to vector<8x256xi32>
    %567 = arith.select %561, %565, %566 : vector<8x256xi1>, vector<8x256xi32>
    %cst_104 = arith.constant dense<2147483647> : vector<8xi32>
    %568 = vector.multi_reduction <minsi>, %567, %cst_104 [1] : vector<8x256xi32> to vector<8xi32>
    %569 = vector.shape_cast %568 : vector<8xi32> to vector<8x1xi32>
    %570 = vector.broadcast %c22_i32 : i32 to vector<1x50xi32>
    %571 = arith.cmpi eq, %27, %570 : vector<1x50xi32>
    %572 = vector.shape_cast %571 : vector<1x50xi1> to vector<1x50xi1>
    %573 = vector.broadcast %572 : vector<1x50xi1> to vector<8x50xi1>
    %574 = vector.shape_cast %559 : vector<8x1xf32> to vector<8x1xf32>
    %575 = vector.broadcast %574 : vector<8x1xf32> to vector<8x50xf32>
    %576 = arith.select %573, %575, %552 : vector<8x50xi1>, vector<8x50xf32>
    %577 = vector.shape_cast %571 : vector<1x50xi1> to vector<1x50xi1>
    %578 = vector.broadcast %577 : vector<1x50xi1> to vector<8x50xi1>
    %579 = vector.shape_cast %569 : vector<8x1xi32> to vector<8x1xi32>
    %580 = vector.broadcast %579 : vector<8x1xi32> to vector<8x50xi32>
    %581 = arith.select %578, %580, %557 : vector<8x50xi1>, vector<8x50xi32>
    %c23_i32 = arith.constant 23 : i32
    %cst_105 = arith.constant dense<0xFF800000> : vector<8xf32>
    %582 = vector.multi_reduction <maximumf>, %563, %cst_105 [1] : vector<8x256xf32> to vector<8xf32>
    %583 = vector.shape_cast %582 : vector<8xf32> to vector<8x1xf32>
    %584 = vector.broadcast %583 : vector<8x1xf32> to vector<8x256xf32>
    %585 = arith.cmpf oeq, %563, %584 : vector<8x256xf32>
    %cst_106 = arith.constant 0.000000e+00 : f32
    %586 = vector.broadcast %cst_106 : f32 to vector<8x256xf32>
    %587 = arith.select %585, %586, %563 : vector<8x256xi1>, vector<8x256xf32>
    %c256_i32_107 = arith.constant 256 : i32
    %588 = vector.shape_cast %26 : vector<1x256xi32> to vector<1x256xi32>
    %589 = vector.broadcast %588 : vector<1x256xi32> to vector<8x256xi32>
    %590 = vector.broadcast %c256_i32_107 : i32 to vector<8x256xi32>
    %591 = arith.select %585, %589, %590 : vector<8x256xi1>, vector<8x256xi32>
    %cst_108 = arith.constant dense<2147483647> : vector<8xi32>
    %592 = vector.multi_reduction <minsi>, %591, %cst_108 [1] : vector<8x256xi32> to vector<8xi32>
    %593 = vector.shape_cast %592 : vector<8xi32> to vector<8x1xi32>
    %594 = vector.broadcast %c23_i32 : i32 to vector<1x50xi32>
    %595 = arith.cmpi eq, %27, %594 : vector<1x50xi32>
    %596 = vector.shape_cast %595 : vector<1x50xi1> to vector<1x50xi1>
    %597 = vector.broadcast %596 : vector<1x50xi1> to vector<8x50xi1>
    %598 = vector.shape_cast %583 : vector<8x1xf32> to vector<8x1xf32>
    %599 = vector.broadcast %598 : vector<8x1xf32> to vector<8x50xf32>
    %600 = arith.select %597, %599, %576 : vector<8x50xi1>, vector<8x50xf32>
    %601 = vector.shape_cast %595 : vector<1x50xi1> to vector<1x50xi1>
    %602 = vector.broadcast %601 : vector<1x50xi1> to vector<8x50xi1>
    %603 = vector.shape_cast %593 : vector<8x1xi32> to vector<8x1xi32>
    %604 = vector.broadcast %603 : vector<8x1xi32> to vector<8x50xi32>
    %605 = arith.select %602, %604, %581 : vector<8x50xi1>, vector<8x50xi32>
    %c24_i32 = arith.constant 24 : i32
    %cst_109 = arith.constant dense<0xFF800000> : vector<8xf32>
    %606 = vector.multi_reduction <maximumf>, %587, %cst_109 [1] : vector<8x256xf32> to vector<8xf32>
    %607 = vector.shape_cast %606 : vector<8xf32> to vector<8x1xf32>
    %608 = vector.broadcast %607 : vector<8x1xf32> to vector<8x256xf32>
    %609 = arith.cmpf oeq, %587, %608 : vector<8x256xf32>
    %cst_110 = arith.constant 0.000000e+00 : f32
    %610 = vector.broadcast %cst_110 : f32 to vector<8x256xf32>
    %611 = arith.select %609, %610, %587 : vector<8x256xi1>, vector<8x256xf32>
    %c256_i32_111 = arith.constant 256 : i32
    %612 = vector.shape_cast %26 : vector<1x256xi32> to vector<1x256xi32>
    %613 = vector.broadcast %612 : vector<1x256xi32> to vector<8x256xi32>
    %614 = vector.broadcast %c256_i32_111 : i32 to vector<8x256xi32>
    %615 = arith.select %609, %613, %614 : vector<8x256xi1>, vector<8x256xi32>
    %cst_112 = arith.constant dense<2147483647> : vector<8xi32>
    %616 = vector.multi_reduction <minsi>, %615, %cst_112 [1] : vector<8x256xi32> to vector<8xi32>
    %617 = vector.shape_cast %616 : vector<8xi32> to vector<8x1xi32>
    %618 = vector.broadcast %c24_i32 : i32 to vector<1x50xi32>
    %619 = arith.cmpi eq, %27, %618 : vector<1x50xi32>
    %620 = vector.shape_cast %619 : vector<1x50xi1> to vector<1x50xi1>
    %621 = vector.broadcast %620 : vector<1x50xi1> to vector<8x50xi1>
    %622 = vector.shape_cast %607 : vector<8x1xf32> to vector<8x1xf32>
    %623 = vector.broadcast %622 : vector<8x1xf32> to vector<8x50xf32>
    %624 = arith.select %621, %623, %600 : vector<8x50xi1>, vector<8x50xf32>
    %625 = vector.shape_cast %619 : vector<1x50xi1> to vector<1x50xi1>
    %626 = vector.broadcast %625 : vector<1x50xi1> to vector<8x50xi1>
    %627 = vector.shape_cast %617 : vector<8x1xi32> to vector<8x1xi32>
    %628 = vector.broadcast %627 : vector<8x1xi32> to vector<8x50xi32>
    %629 = arith.select %626, %628, %605 : vector<8x50xi1>, vector<8x50xi32>
    %c25_i32 = arith.constant 25 : i32
    %cst_113 = arith.constant dense<0xFF800000> : vector<8xf32>
    %630 = vector.multi_reduction <maximumf>, %611, %cst_113 [1] : vector<8x256xf32> to vector<8xf32>
    %631 = vector.shape_cast %630 : vector<8xf32> to vector<8x1xf32>
    %632 = vector.broadcast %631 : vector<8x1xf32> to vector<8x256xf32>
    %633 = arith.cmpf oeq, %611, %632 : vector<8x256xf32>
    %cst_114 = arith.constant 0.000000e+00 : f32
    %634 = vector.broadcast %cst_114 : f32 to vector<8x256xf32>
    %635 = arith.select %633, %634, %611 : vector<8x256xi1>, vector<8x256xf32>
    %c256_i32_115 = arith.constant 256 : i32
    %636 = vector.shape_cast %26 : vector<1x256xi32> to vector<1x256xi32>
    %637 = vector.broadcast %636 : vector<1x256xi32> to vector<8x256xi32>
    %638 = vector.broadcast %c256_i32_115 : i32 to vector<8x256xi32>
    %639 = arith.select %633, %637, %638 : vector<8x256xi1>, vector<8x256xi32>
    %cst_116 = arith.constant dense<2147483647> : vector<8xi32>
    %640 = vector.multi_reduction <minsi>, %639, %cst_116 [1] : vector<8x256xi32> to vector<8xi32>
    %641 = vector.shape_cast %640 : vector<8xi32> to vector<8x1xi32>
    %642 = vector.broadcast %c25_i32 : i32 to vector<1x50xi32>
    %643 = arith.cmpi eq, %27, %642 : vector<1x50xi32>
    %644 = vector.shape_cast %643 : vector<1x50xi1> to vector<1x50xi1>
    %645 = vector.broadcast %644 : vector<1x50xi1> to vector<8x50xi1>
    %646 = vector.shape_cast %631 : vector<8x1xf32> to vector<8x1xf32>
    %647 = vector.broadcast %646 : vector<8x1xf32> to vector<8x50xf32>
    %648 = arith.select %645, %647, %624 : vector<8x50xi1>, vector<8x50xf32>
    %649 = vector.shape_cast %643 : vector<1x50xi1> to vector<1x50xi1>
    %650 = vector.broadcast %649 : vector<1x50xi1> to vector<8x50xi1>
    %651 = vector.shape_cast %641 : vector<8x1xi32> to vector<8x1xi32>
    %652 = vector.broadcast %651 : vector<8x1xi32> to vector<8x50xi32>
    %653 = arith.select %650, %652, %629 : vector<8x50xi1>, vector<8x50xi32>
    %c26_i32 = arith.constant 26 : i32
    %cst_117 = arith.constant dense<0xFF800000> : vector<8xf32>
    %654 = vector.multi_reduction <maximumf>, %635, %cst_117 [1] : vector<8x256xf32> to vector<8xf32>
    %655 = vector.shape_cast %654 : vector<8xf32> to vector<8x1xf32>
    %656 = vector.broadcast %655 : vector<8x1xf32> to vector<8x256xf32>
    %657 = arith.cmpf oeq, %635, %656 : vector<8x256xf32>
    %cst_118 = arith.constant 0.000000e+00 : f32
    %658 = vector.broadcast %cst_118 : f32 to vector<8x256xf32>
    %659 = arith.select %657, %658, %635 : vector<8x256xi1>, vector<8x256xf32>
    %c256_i32_119 = arith.constant 256 : i32
    %660 = vector.shape_cast %26 : vector<1x256xi32> to vector<1x256xi32>
    %661 = vector.broadcast %660 : vector<1x256xi32> to vector<8x256xi32>
    %662 = vector.broadcast %c256_i32_119 : i32 to vector<8x256xi32>
    %663 = arith.select %657, %661, %662 : vector<8x256xi1>, vector<8x256xi32>
    %cst_120 = arith.constant dense<2147483647> : vector<8xi32>
    %664 = vector.multi_reduction <minsi>, %663, %cst_120 [1] : vector<8x256xi32> to vector<8xi32>
    %665 = vector.shape_cast %664 : vector<8xi32> to vector<8x1xi32>
    %666 = vector.broadcast %c26_i32 : i32 to vector<1x50xi32>
    %667 = arith.cmpi eq, %27, %666 : vector<1x50xi32>
    %668 = vector.shape_cast %667 : vector<1x50xi1> to vector<1x50xi1>
    %669 = vector.broadcast %668 : vector<1x50xi1> to vector<8x50xi1>
    %670 = vector.shape_cast %655 : vector<8x1xf32> to vector<8x1xf32>
    %671 = vector.broadcast %670 : vector<8x1xf32> to vector<8x50xf32>
    %672 = arith.select %669, %671, %648 : vector<8x50xi1>, vector<8x50xf32>
    %673 = vector.shape_cast %667 : vector<1x50xi1> to vector<1x50xi1>
    %674 = vector.broadcast %673 : vector<1x50xi1> to vector<8x50xi1>
    %675 = vector.shape_cast %665 : vector<8x1xi32> to vector<8x1xi32>
    %676 = vector.broadcast %675 : vector<8x1xi32> to vector<8x50xi32>
    %677 = arith.select %674, %676, %653 : vector<8x50xi1>, vector<8x50xi32>
    %c27_i32 = arith.constant 27 : i32
    %cst_121 = arith.constant dense<0xFF800000> : vector<8xf32>
    %678 = vector.multi_reduction <maximumf>, %659, %cst_121 [1] : vector<8x256xf32> to vector<8xf32>
    %679 = vector.shape_cast %678 : vector<8xf32> to vector<8x1xf32>
    %680 = vector.broadcast %679 : vector<8x1xf32> to vector<8x256xf32>
    %681 = arith.cmpf oeq, %659, %680 : vector<8x256xf32>
    %cst_122 = arith.constant 0.000000e+00 : f32
    %682 = vector.broadcast %cst_122 : f32 to vector<8x256xf32>
    %683 = arith.select %681, %682, %659 : vector<8x256xi1>, vector<8x256xf32>
    %c256_i32_123 = arith.constant 256 : i32
    %684 = vector.shape_cast %26 : vector<1x256xi32> to vector<1x256xi32>
    %685 = vector.broadcast %684 : vector<1x256xi32> to vector<8x256xi32>
    %686 = vector.broadcast %c256_i32_123 : i32 to vector<8x256xi32>
    %687 = arith.select %681, %685, %686 : vector<8x256xi1>, vector<8x256xi32>
    %cst_124 = arith.constant dense<2147483647> : vector<8xi32>
    %688 = vector.multi_reduction <minsi>, %687, %cst_124 [1] : vector<8x256xi32> to vector<8xi32>
    %689 = vector.shape_cast %688 : vector<8xi32> to vector<8x1xi32>
    %690 = vector.broadcast %c27_i32 : i32 to vector<1x50xi32>
    %691 = arith.cmpi eq, %27, %690 : vector<1x50xi32>
    %692 = vector.shape_cast %691 : vector<1x50xi1> to vector<1x50xi1>
    %693 = vector.broadcast %692 : vector<1x50xi1> to vector<8x50xi1>
    %694 = vector.shape_cast %679 : vector<8x1xf32> to vector<8x1xf32>
    %695 = vector.broadcast %694 : vector<8x1xf32> to vector<8x50xf32>
    %696 = arith.select %693, %695, %672 : vector<8x50xi1>, vector<8x50xf32>
    %697 = vector.shape_cast %691 : vector<1x50xi1> to vector<1x50xi1>
    %698 = vector.broadcast %697 : vector<1x50xi1> to vector<8x50xi1>
    %699 = vector.shape_cast %689 : vector<8x1xi32> to vector<8x1xi32>
    %700 = vector.broadcast %699 : vector<8x1xi32> to vector<8x50xi32>
    %701 = arith.select %698, %700, %677 : vector<8x50xi1>, vector<8x50xi32>
    %c28_i32 = arith.constant 28 : i32
    %cst_125 = arith.constant dense<0xFF800000> : vector<8xf32>
    %702 = vector.multi_reduction <maximumf>, %683, %cst_125 [1] : vector<8x256xf32> to vector<8xf32>
    %703 = vector.shape_cast %702 : vector<8xf32> to vector<8x1xf32>
    %704 = vector.broadcast %703 : vector<8x1xf32> to vector<8x256xf32>
    %705 = arith.cmpf oeq, %683, %704 : vector<8x256xf32>
    %cst_126 = arith.constant 0.000000e+00 : f32
    %706 = vector.broadcast %cst_126 : f32 to vector<8x256xf32>
    %707 = arith.select %705, %706, %683 : vector<8x256xi1>, vector<8x256xf32>
    %c256_i32_127 = arith.constant 256 : i32
    %708 = vector.shape_cast %26 : vector<1x256xi32> to vector<1x256xi32>
    %709 = vector.broadcast %708 : vector<1x256xi32> to vector<8x256xi32>
    %710 = vector.broadcast %c256_i32_127 : i32 to vector<8x256xi32>
    %711 = arith.select %705, %709, %710 : vector<8x256xi1>, vector<8x256xi32>
    %cst_128 = arith.constant dense<2147483647> : vector<8xi32>
    %712 = vector.multi_reduction <minsi>, %711, %cst_128 [1] : vector<8x256xi32> to vector<8xi32>
    %713 = vector.shape_cast %712 : vector<8xi32> to vector<8x1xi32>
    %714 = vector.broadcast %c28_i32 : i32 to vector<1x50xi32>
    %715 = arith.cmpi eq, %27, %714 : vector<1x50xi32>
    %716 = vector.shape_cast %715 : vector<1x50xi1> to vector<1x50xi1>
    %717 = vector.broadcast %716 : vector<1x50xi1> to vector<8x50xi1>
    %718 = vector.shape_cast %703 : vector<8x1xf32> to vector<8x1xf32>
    %719 = vector.broadcast %718 : vector<8x1xf32> to vector<8x50xf32>
    %720 = arith.select %717, %719, %696 : vector<8x50xi1>, vector<8x50xf32>
    %721 = vector.shape_cast %715 : vector<1x50xi1> to vector<1x50xi1>
    %722 = vector.broadcast %721 : vector<1x50xi1> to vector<8x50xi1>
    %723 = vector.shape_cast %713 : vector<8x1xi32> to vector<8x1xi32>
    %724 = vector.broadcast %723 : vector<8x1xi32> to vector<8x50xi32>
    %725 = arith.select %722, %724, %701 : vector<8x50xi1>, vector<8x50xi32>
    %c29_i32 = arith.constant 29 : i32
    %cst_129 = arith.constant dense<0xFF800000> : vector<8xf32>
    %726 = vector.multi_reduction <maximumf>, %707, %cst_129 [1] : vector<8x256xf32> to vector<8xf32>
    %727 = vector.shape_cast %726 : vector<8xf32> to vector<8x1xf32>
    %728 = vector.broadcast %727 : vector<8x1xf32> to vector<8x256xf32>
    %729 = arith.cmpf oeq, %707, %728 : vector<8x256xf32>
    %cst_130 = arith.constant 0.000000e+00 : f32
    %730 = vector.broadcast %cst_130 : f32 to vector<8x256xf32>
    %731 = arith.select %729, %730, %707 : vector<8x256xi1>, vector<8x256xf32>
    %c256_i32_131 = arith.constant 256 : i32
    %732 = vector.shape_cast %26 : vector<1x256xi32> to vector<1x256xi32>
    %733 = vector.broadcast %732 : vector<1x256xi32> to vector<8x256xi32>
    %734 = vector.broadcast %c256_i32_131 : i32 to vector<8x256xi32>
    %735 = arith.select %729, %733, %734 : vector<8x256xi1>, vector<8x256xi32>
    %cst_132 = arith.constant dense<2147483647> : vector<8xi32>
    %736 = vector.multi_reduction <minsi>, %735, %cst_132 [1] : vector<8x256xi32> to vector<8xi32>
    %737 = vector.shape_cast %736 : vector<8xi32> to vector<8x1xi32>
    %738 = vector.broadcast %c29_i32 : i32 to vector<1x50xi32>
    %739 = arith.cmpi eq, %27, %738 : vector<1x50xi32>
    %740 = vector.shape_cast %739 : vector<1x50xi1> to vector<1x50xi1>
    %741 = vector.broadcast %740 : vector<1x50xi1> to vector<8x50xi1>
    %742 = vector.shape_cast %727 : vector<8x1xf32> to vector<8x1xf32>
    %743 = vector.broadcast %742 : vector<8x1xf32> to vector<8x50xf32>
    %744 = arith.select %741, %743, %720 : vector<8x50xi1>, vector<8x50xf32>
    %745 = vector.shape_cast %739 : vector<1x50xi1> to vector<1x50xi1>
    %746 = vector.broadcast %745 : vector<1x50xi1> to vector<8x50xi1>
    %747 = vector.shape_cast %737 : vector<8x1xi32> to vector<8x1xi32>
    %748 = vector.broadcast %747 : vector<8x1xi32> to vector<8x50xi32>
    %749 = arith.select %746, %748, %725 : vector<8x50xi1>, vector<8x50xi32>
    %c30_i32 = arith.constant 30 : i32
    %cst_133 = arith.constant dense<0xFF800000> : vector<8xf32>
    %750 = vector.multi_reduction <maximumf>, %731, %cst_133 [1] : vector<8x256xf32> to vector<8xf32>
    %751 = vector.shape_cast %750 : vector<8xf32> to vector<8x1xf32>
    %752 = vector.broadcast %751 : vector<8x1xf32> to vector<8x256xf32>
    %753 = arith.cmpf oeq, %731, %752 : vector<8x256xf32>
    %cst_134 = arith.constant 0.000000e+00 : f32
    %754 = vector.broadcast %cst_134 : f32 to vector<8x256xf32>
    %755 = arith.select %753, %754, %731 : vector<8x256xi1>, vector<8x256xf32>
    %c256_i32_135 = arith.constant 256 : i32
    %756 = vector.shape_cast %26 : vector<1x256xi32> to vector<1x256xi32>
    %757 = vector.broadcast %756 : vector<1x256xi32> to vector<8x256xi32>
    %758 = vector.broadcast %c256_i32_135 : i32 to vector<8x256xi32>
    %759 = arith.select %753, %757, %758 : vector<8x256xi1>, vector<8x256xi32>
    %cst_136 = arith.constant dense<2147483647> : vector<8xi32>
    %760 = vector.multi_reduction <minsi>, %759, %cst_136 [1] : vector<8x256xi32> to vector<8xi32>
    %761 = vector.shape_cast %760 : vector<8xi32> to vector<8x1xi32>
    %762 = vector.broadcast %c30_i32 : i32 to vector<1x50xi32>
    %763 = arith.cmpi eq, %27, %762 : vector<1x50xi32>
    %764 = vector.shape_cast %763 : vector<1x50xi1> to vector<1x50xi1>
    %765 = vector.broadcast %764 : vector<1x50xi1> to vector<8x50xi1>
    %766 = vector.shape_cast %751 : vector<8x1xf32> to vector<8x1xf32>
    %767 = vector.broadcast %766 : vector<8x1xf32> to vector<8x50xf32>
    %768 = arith.select %765, %767, %744 : vector<8x50xi1>, vector<8x50xf32>
    %769 = vector.shape_cast %763 : vector<1x50xi1> to vector<1x50xi1>
    %770 = vector.broadcast %769 : vector<1x50xi1> to vector<8x50xi1>
    %771 = vector.shape_cast %761 : vector<8x1xi32> to vector<8x1xi32>
    %772 = vector.broadcast %771 : vector<8x1xi32> to vector<8x50xi32>
    %773 = arith.select %770, %772, %749 : vector<8x50xi1>, vector<8x50xi32>
    %c31_i32 = arith.constant 31 : i32
    %cst_137 = arith.constant dense<0xFF800000> : vector<8xf32>
    %774 = vector.multi_reduction <maximumf>, %755, %cst_137 [1] : vector<8x256xf32> to vector<8xf32>
    %775 = vector.shape_cast %774 : vector<8xf32> to vector<8x1xf32>
    %776 = vector.broadcast %775 : vector<8x1xf32> to vector<8x256xf32>
    %777 = arith.cmpf oeq, %755, %776 : vector<8x256xf32>
    %cst_138 = arith.constant 0.000000e+00 : f32
    %778 = vector.broadcast %cst_138 : f32 to vector<8x256xf32>
    %779 = arith.select %777, %778, %755 : vector<8x256xi1>, vector<8x256xf32>
    %c256_i32_139 = arith.constant 256 : i32
    %780 = vector.shape_cast %26 : vector<1x256xi32> to vector<1x256xi32>
    %781 = vector.broadcast %780 : vector<1x256xi32> to vector<8x256xi32>
    %782 = vector.broadcast %c256_i32_139 : i32 to vector<8x256xi32>
    %783 = arith.select %777, %781, %782 : vector<8x256xi1>, vector<8x256xi32>
    %cst_140 = arith.constant dense<2147483647> : vector<8xi32>
    %784 = vector.multi_reduction <minsi>, %783, %cst_140 [1] : vector<8x256xi32> to vector<8xi32>
    %785 = vector.shape_cast %784 : vector<8xi32> to vector<8x1xi32>
    %786 = vector.broadcast %c31_i32 : i32 to vector<1x50xi32>
    %787 = arith.cmpi eq, %27, %786 : vector<1x50xi32>
    %788 = vector.shape_cast %787 : vector<1x50xi1> to vector<1x50xi1>
    %789 = vector.broadcast %788 : vector<1x50xi1> to vector<8x50xi1>
    %790 = vector.shape_cast %775 : vector<8x1xf32> to vector<8x1xf32>
    %791 = vector.broadcast %790 : vector<8x1xf32> to vector<8x50xf32>
    %792 = arith.select %789, %791, %768 : vector<8x50xi1>, vector<8x50xf32>
    %793 = vector.shape_cast %787 : vector<1x50xi1> to vector<1x50xi1>
    %794 = vector.broadcast %793 : vector<1x50xi1> to vector<8x50xi1>
    %795 = vector.shape_cast %785 : vector<8x1xi32> to vector<8x1xi32>
    %796 = vector.broadcast %795 : vector<8x1xi32> to vector<8x50xi32>
    %797 = arith.select %794, %796, %773 : vector<8x50xi1>, vector<8x50xi32>
    %c32_i32 = arith.constant 32 : i32
    %cst_141 = arith.constant dense<0xFF800000> : vector<8xf32>
    %798 = vector.multi_reduction <maximumf>, %779, %cst_141 [1] : vector<8x256xf32> to vector<8xf32>
    %799 = vector.shape_cast %798 : vector<8xf32> to vector<8x1xf32>
    %800 = vector.broadcast %799 : vector<8x1xf32> to vector<8x256xf32>
    %801 = arith.cmpf oeq, %779, %800 : vector<8x256xf32>
    %cst_142 = arith.constant 0.000000e+00 : f32
    %802 = vector.broadcast %cst_142 : f32 to vector<8x256xf32>
    %803 = arith.select %801, %802, %779 : vector<8x256xi1>, vector<8x256xf32>
    %c256_i32_143 = arith.constant 256 : i32
    %804 = vector.shape_cast %26 : vector<1x256xi32> to vector<1x256xi32>
    %805 = vector.broadcast %804 : vector<1x256xi32> to vector<8x256xi32>
    %806 = vector.broadcast %c256_i32_143 : i32 to vector<8x256xi32>
    %807 = arith.select %801, %805, %806 : vector<8x256xi1>, vector<8x256xi32>
    %cst_144 = arith.constant dense<2147483647> : vector<8xi32>
    %808 = vector.multi_reduction <minsi>, %807, %cst_144 [1] : vector<8x256xi32> to vector<8xi32>
    %809 = vector.shape_cast %808 : vector<8xi32> to vector<8x1xi32>
    %810 = vector.broadcast %c32_i32 : i32 to vector<1x50xi32>
    %811 = arith.cmpi eq, %27, %810 : vector<1x50xi32>
    %812 = vector.shape_cast %811 : vector<1x50xi1> to vector<1x50xi1>
    %813 = vector.broadcast %812 : vector<1x50xi1> to vector<8x50xi1>
    %814 = vector.shape_cast %799 : vector<8x1xf32> to vector<8x1xf32>
    %815 = vector.broadcast %814 : vector<8x1xf32> to vector<8x50xf32>
    %816 = arith.select %813, %815, %792 : vector<8x50xi1>, vector<8x50xf32>
    %817 = vector.shape_cast %811 : vector<1x50xi1> to vector<1x50xi1>
    %818 = vector.broadcast %817 : vector<1x50xi1> to vector<8x50xi1>
    %819 = vector.shape_cast %809 : vector<8x1xi32> to vector<8x1xi32>
    %820 = vector.broadcast %819 : vector<8x1xi32> to vector<8x50xi32>
    %821 = arith.select %818, %820, %797 : vector<8x50xi1>, vector<8x50xi32>
    %c33_i32 = arith.constant 33 : i32
    %cst_145 = arith.constant dense<0xFF800000> : vector<8xf32>
    %822 = vector.multi_reduction <maximumf>, %803, %cst_145 [1] : vector<8x256xf32> to vector<8xf32>
    %823 = vector.shape_cast %822 : vector<8xf32> to vector<8x1xf32>
    %824 = vector.broadcast %823 : vector<8x1xf32> to vector<8x256xf32>
    %825 = arith.cmpf oeq, %803, %824 : vector<8x256xf32>
    %cst_146 = arith.constant 0.000000e+00 : f32
    %826 = vector.broadcast %cst_146 : f32 to vector<8x256xf32>
    %827 = arith.select %825, %826, %803 : vector<8x256xi1>, vector<8x256xf32>
    %c256_i32_147 = arith.constant 256 : i32
    %828 = vector.shape_cast %26 : vector<1x256xi32> to vector<1x256xi32>
    %829 = vector.broadcast %828 : vector<1x256xi32> to vector<8x256xi32>
    %830 = vector.broadcast %c256_i32_147 : i32 to vector<8x256xi32>
    %831 = arith.select %825, %829, %830 : vector<8x256xi1>, vector<8x256xi32>
    %cst_148 = arith.constant dense<2147483647> : vector<8xi32>
    %832 = vector.multi_reduction <minsi>, %831, %cst_148 [1] : vector<8x256xi32> to vector<8xi32>
    %833 = vector.shape_cast %832 : vector<8xi32> to vector<8x1xi32>
    %834 = vector.broadcast %c33_i32 : i32 to vector<1x50xi32>
    %835 = arith.cmpi eq, %27, %834 : vector<1x50xi32>
    %836 = vector.shape_cast %835 : vector<1x50xi1> to vector<1x50xi1>
    %837 = vector.broadcast %836 : vector<1x50xi1> to vector<8x50xi1>
    %838 = vector.shape_cast %823 : vector<8x1xf32> to vector<8x1xf32>
    %839 = vector.broadcast %838 : vector<8x1xf32> to vector<8x50xf32>
    %840 = arith.select %837, %839, %816 : vector<8x50xi1>, vector<8x50xf32>
    %841 = vector.shape_cast %835 : vector<1x50xi1> to vector<1x50xi1>
    %842 = vector.broadcast %841 : vector<1x50xi1> to vector<8x50xi1>
    %843 = vector.shape_cast %833 : vector<8x1xi32> to vector<8x1xi32>
    %844 = vector.broadcast %843 : vector<8x1xi32> to vector<8x50xi32>
    %845 = arith.select %842, %844, %821 : vector<8x50xi1>, vector<8x50xi32>
    %c34_i32 = arith.constant 34 : i32
    %cst_149 = arith.constant dense<0xFF800000> : vector<8xf32>
    %846 = vector.multi_reduction <maximumf>, %827, %cst_149 [1] : vector<8x256xf32> to vector<8xf32>
    %847 = vector.shape_cast %846 : vector<8xf32> to vector<8x1xf32>
    %848 = vector.broadcast %847 : vector<8x1xf32> to vector<8x256xf32>
    %849 = arith.cmpf oeq, %827, %848 : vector<8x256xf32>
    %cst_150 = arith.constant 0.000000e+00 : f32
    %850 = vector.broadcast %cst_150 : f32 to vector<8x256xf32>
    %851 = arith.select %849, %850, %827 : vector<8x256xi1>, vector<8x256xf32>
    %c256_i32_151 = arith.constant 256 : i32
    %852 = vector.shape_cast %26 : vector<1x256xi32> to vector<1x256xi32>
    %853 = vector.broadcast %852 : vector<1x256xi32> to vector<8x256xi32>
    %854 = vector.broadcast %c256_i32_151 : i32 to vector<8x256xi32>
    %855 = arith.select %849, %853, %854 : vector<8x256xi1>, vector<8x256xi32>
    %cst_152 = arith.constant dense<2147483647> : vector<8xi32>
    %856 = vector.multi_reduction <minsi>, %855, %cst_152 [1] : vector<8x256xi32> to vector<8xi32>
    %857 = vector.shape_cast %856 : vector<8xi32> to vector<8x1xi32>
    %858 = vector.broadcast %c34_i32 : i32 to vector<1x50xi32>
    %859 = arith.cmpi eq, %27, %858 : vector<1x50xi32>
    %860 = vector.shape_cast %859 : vector<1x50xi1> to vector<1x50xi1>
    %861 = vector.broadcast %860 : vector<1x50xi1> to vector<8x50xi1>
    %862 = vector.shape_cast %847 : vector<8x1xf32> to vector<8x1xf32>
    %863 = vector.broadcast %862 : vector<8x1xf32> to vector<8x50xf32>
    %864 = arith.select %861, %863, %840 : vector<8x50xi1>, vector<8x50xf32>
    %865 = vector.shape_cast %859 : vector<1x50xi1> to vector<1x50xi1>
    %866 = vector.broadcast %865 : vector<1x50xi1> to vector<8x50xi1>
    %867 = vector.shape_cast %857 : vector<8x1xi32> to vector<8x1xi32>
    %868 = vector.broadcast %867 : vector<8x1xi32> to vector<8x50xi32>
    %869 = arith.select %866, %868, %845 : vector<8x50xi1>, vector<8x50xi32>
    %c35_i32 = arith.constant 35 : i32
    %cst_153 = arith.constant dense<0xFF800000> : vector<8xf32>
    %870 = vector.multi_reduction <maximumf>, %851, %cst_153 [1] : vector<8x256xf32> to vector<8xf32>
    %871 = vector.shape_cast %870 : vector<8xf32> to vector<8x1xf32>
    %872 = vector.broadcast %871 : vector<8x1xf32> to vector<8x256xf32>
    %873 = arith.cmpf oeq, %851, %872 : vector<8x256xf32>
    %cst_154 = arith.constant 0.000000e+00 : f32
    %874 = vector.broadcast %cst_154 : f32 to vector<8x256xf32>
    %875 = arith.select %873, %874, %851 : vector<8x256xi1>, vector<8x256xf32>
    %c256_i32_155 = arith.constant 256 : i32
    %876 = vector.shape_cast %26 : vector<1x256xi32> to vector<1x256xi32>
    %877 = vector.broadcast %876 : vector<1x256xi32> to vector<8x256xi32>
    %878 = vector.broadcast %c256_i32_155 : i32 to vector<8x256xi32>
    %879 = arith.select %873, %877, %878 : vector<8x256xi1>, vector<8x256xi32>
    %cst_156 = arith.constant dense<2147483647> : vector<8xi32>
    %880 = vector.multi_reduction <minsi>, %879, %cst_156 [1] : vector<8x256xi32> to vector<8xi32>
    %881 = vector.shape_cast %880 : vector<8xi32> to vector<8x1xi32>
    %882 = vector.broadcast %c35_i32 : i32 to vector<1x50xi32>
    %883 = arith.cmpi eq, %27, %882 : vector<1x50xi32>
    %884 = vector.shape_cast %883 : vector<1x50xi1> to vector<1x50xi1>
    %885 = vector.broadcast %884 : vector<1x50xi1> to vector<8x50xi1>
    %886 = vector.shape_cast %871 : vector<8x1xf32> to vector<8x1xf32>
    %887 = vector.broadcast %886 : vector<8x1xf32> to vector<8x50xf32>
    %888 = arith.select %885, %887, %864 : vector<8x50xi1>, vector<8x50xf32>
    %889 = vector.shape_cast %883 : vector<1x50xi1> to vector<1x50xi1>
    %890 = vector.broadcast %889 : vector<1x50xi1> to vector<8x50xi1>
    %891 = vector.shape_cast %881 : vector<8x1xi32> to vector<8x1xi32>
    %892 = vector.broadcast %891 : vector<8x1xi32> to vector<8x50xi32>
    %893 = arith.select %890, %892, %869 : vector<8x50xi1>, vector<8x50xi32>
    %c36_i32 = arith.constant 36 : i32
    %cst_157 = arith.constant dense<0xFF800000> : vector<8xf32>
    %894 = vector.multi_reduction <maximumf>, %875, %cst_157 [1] : vector<8x256xf32> to vector<8xf32>
    %895 = vector.shape_cast %894 : vector<8xf32> to vector<8x1xf32>
    %896 = vector.broadcast %895 : vector<8x1xf32> to vector<8x256xf32>
    %897 = arith.cmpf oeq, %875, %896 : vector<8x256xf32>
    %cst_158 = arith.constant 0.000000e+00 : f32
    %898 = vector.broadcast %cst_158 : f32 to vector<8x256xf32>
    %899 = arith.select %897, %898, %875 : vector<8x256xi1>, vector<8x256xf32>
    %c256_i32_159 = arith.constant 256 : i32
    %900 = vector.shape_cast %26 : vector<1x256xi32> to vector<1x256xi32>
    %901 = vector.broadcast %900 : vector<1x256xi32> to vector<8x256xi32>
    %902 = vector.broadcast %c256_i32_159 : i32 to vector<8x256xi32>
    %903 = arith.select %897, %901, %902 : vector<8x256xi1>, vector<8x256xi32>
    %cst_160 = arith.constant dense<2147483647> : vector<8xi32>
    %904 = vector.multi_reduction <minsi>, %903, %cst_160 [1] : vector<8x256xi32> to vector<8xi32>
    %905 = vector.shape_cast %904 : vector<8xi32> to vector<8x1xi32>
    %906 = vector.broadcast %c36_i32 : i32 to vector<1x50xi32>
    %907 = arith.cmpi eq, %27, %906 : vector<1x50xi32>
    %908 = vector.shape_cast %907 : vector<1x50xi1> to vector<1x50xi1>
    %909 = vector.broadcast %908 : vector<1x50xi1> to vector<8x50xi1>
    %910 = vector.shape_cast %895 : vector<8x1xf32> to vector<8x1xf32>
    %911 = vector.broadcast %910 : vector<8x1xf32> to vector<8x50xf32>
    %912 = arith.select %909, %911, %888 : vector<8x50xi1>, vector<8x50xf32>
    %913 = vector.shape_cast %907 : vector<1x50xi1> to vector<1x50xi1>
    %914 = vector.broadcast %913 : vector<1x50xi1> to vector<8x50xi1>
    %915 = vector.shape_cast %905 : vector<8x1xi32> to vector<8x1xi32>
    %916 = vector.broadcast %915 : vector<8x1xi32> to vector<8x50xi32>
    %917 = arith.select %914, %916, %893 : vector<8x50xi1>, vector<8x50xi32>
    %c37_i32 = arith.constant 37 : i32
    %cst_161 = arith.constant dense<0xFF800000> : vector<8xf32>
    %918 = vector.multi_reduction <maximumf>, %899, %cst_161 [1] : vector<8x256xf32> to vector<8xf32>
    %919 = vector.shape_cast %918 : vector<8xf32> to vector<8x1xf32>
    %920 = vector.broadcast %919 : vector<8x1xf32> to vector<8x256xf32>
    %921 = arith.cmpf oeq, %899, %920 : vector<8x256xf32>
    %cst_162 = arith.constant 0.000000e+00 : f32
    %922 = vector.broadcast %cst_162 : f32 to vector<8x256xf32>
    %923 = arith.select %921, %922, %899 : vector<8x256xi1>, vector<8x256xf32>
    %c256_i32_163 = arith.constant 256 : i32
    %924 = vector.shape_cast %26 : vector<1x256xi32> to vector<1x256xi32>
    %925 = vector.broadcast %924 : vector<1x256xi32> to vector<8x256xi32>
    %926 = vector.broadcast %c256_i32_163 : i32 to vector<8x256xi32>
    %927 = arith.select %921, %925, %926 : vector<8x256xi1>, vector<8x256xi32>
    %cst_164 = arith.constant dense<2147483647> : vector<8xi32>
    %928 = vector.multi_reduction <minsi>, %927, %cst_164 [1] : vector<8x256xi32> to vector<8xi32>
    %929 = vector.shape_cast %928 : vector<8xi32> to vector<8x1xi32>
    %930 = vector.broadcast %c37_i32 : i32 to vector<1x50xi32>
    %931 = arith.cmpi eq, %27, %930 : vector<1x50xi32>
    %932 = vector.shape_cast %931 : vector<1x50xi1> to vector<1x50xi1>
    %933 = vector.broadcast %932 : vector<1x50xi1> to vector<8x50xi1>
    %934 = vector.shape_cast %919 : vector<8x1xf32> to vector<8x1xf32>
    %935 = vector.broadcast %934 : vector<8x1xf32> to vector<8x50xf32>
    %936 = arith.select %933, %935, %912 : vector<8x50xi1>, vector<8x50xf32>
    %937 = vector.shape_cast %931 : vector<1x50xi1> to vector<1x50xi1>
    %938 = vector.broadcast %937 : vector<1x50xi1> to vector<8x50xi1>
    %939 = vector.shape_cast %929 : vector<8x1xi32> to vector<8x1xi32>
    %940 = vector.broadcast %939 : vector<8x1xi32> to vector<8x50xi32>
    %941 = arith.select %938, %940, %917 : vector<8x50xi1>, vector<8x50xi32>
    %c38_i32 = arith.constant 38 : i32
    %cst_165 = arith.constant dense<0xFF800000> : vector<8xf32>
    %942 = vector.multi_reduction <maximumf>, %923, %cst_165 [1] : vector<8x256xf32> to vector<8xf32>
    %943 = vector.shape_cast %942 : vector<8xf32> to vector<8x1xf32>
    %944 = vector.broadcast %943 : vector<8x1xf32> to vector<8x256xf32>
    %945 = arith.cmpf oeq, %923, %944 : vector<8x256xf32>
    %cst_166 = arith.constant 0.000000e+00 : f32
    %946 = vector.broadcast %cst_166 : f32 to vector<8x256xf32>
    %947 = arith.select %945, %946, %923 : vector<8x256xi1>, vector<8x256xf32>
    %c256_i32_167 = arith.constant 256 : i32
    %948 = vector.shape_cast %26 : vector<1x256xi32> to vector<1x256xi32>
    %949 = vector.broadcast %948 : vector<1x256xi32> to vector<8x256xi32>
    %950 = vector.broadcast %c256_i32_167 : i32 to vector<8x256xi32>
    %951 = arith.select %945, %949, %950 : vector<8x256xi1>, vector<8x256xi32>
    %cst_168 = arith.constant dense<2147483647> : vector<8xi32>
    %952 = vector.multi_reduction <minsi>, %951, %cst_168 [1] : vector<8x256xi32> to vector<8xi32>
    %953 = vector.shape_cast %952 : vector<8xi32> to vector<8x1xi32>
    %954 = vector.broadcast %c38_i32 : i32 to vector<1x50xi32>
    %955 = arith.cmpi eq, %27, %954 : vector<1x50xi32>
    %956 = vector.shape_cast %955 : vector<1x50xi1> to vector<1x50xi1>
    %957 = vector.broadcast %956 : vector<1x50xi1> to vector<8x50xi1>
    %958 = vector.shape_cast %943 : vector<8x1xf32> to vector<8x1xf32>
    %959 = vector.broadcast %958 : vector<8x1xf32> to vector<8x50xf32>
    %960 = arith.select %957, %959, %936 : vector<8x50xi1>, vector<8x50xf32>
    %961 = vector.shape_cast %955 : vector<1x50xi1> to vector<1x50xi1>
    %962 = vector.broadcast %961 : vector<1x50xi1> to vector<8x50xi1>
    %963 = vector.shape_cast %953 : vector<8x1xi32> to vector<8x1xi32>
    %964 = vector.broadcast %963 : vector<8x1xi32> to vector<8x50xi32>
    %965 = arith.select %962, %964, %941 : vector<8x50xi1>, vector<8x50xi32>
    %c39_i32 = arith.constant 39 : i32
    %cst_169 = arith.constant dense<0xFF800000> : vector<8xf32>
    %966 = vector.multi_reduction <maximumf>, %947, %cst_169 [1] : vector<8x256xf32> to vector<8xf32>
    %967 = vector.shape_cast %966 : vector<8xf32> to vector<8x1xf32>
    %968 = vector.broadcast %967 : vector<8x1xf32> to vector<8x256xf32>
    %969 = arith.cmpf oeq, %947, %968 : vector<8x256xf32>
    %cst_170 = arith.constant 0.000000e+00 : f32
    %970 = vector.broadcast %cst_170 : f32 to vector<8x256xf32>
    %971 = arith.select %969, %970, %947 : vector<8x256xi1>, vector<8x256xf32>
    %c256_i32_171 = arith.constant 256 : i32
    %972 = vector.shape_cast %26 : vector<1x256xi32> to vector<1x256xi32>
    %973 = vector.broadcast %972 : vector<1x256xi32> to vector<8x256xi32>
    %974 = vector.broadcast %c256_i32_171 : i32 to vector<8x256xi32>
    %975 = arith.select %969, %973, %974 : vector<8x256xi1>, vector<8x256xi32>
    %cst_172 = arith.constant dense<2147483647> : vector<8xi32>
    %976 = vector.multi_reduction <minsi>, %975, %cst_172 [1] : vector<8x256xi32> to vector<8xi32>
    %977 = vector.shape_cast %976 : vector<8xi32> to vector<8x1xi32>
    %978 = vector.broadcast %c39_i32 : i32 to vector<1x50xi32>
    %979 = arith.cmpi eq, %27, %978 : vector<1x50xi32>
    %980 = vector.shape_cast %979 : vector<1x50xi1> to vector<1x50xi1>
    %981 = vector.broadcast %980 : vector<1x50xi1> to vector<8x50xi1>
    %982 = vector.shape_cast %967 : vector<8x1xf32> to vector<8x1xf32>
    %983 = vector.broadcast %982 : vector<8x1xf32> to vector<8x50xf32>
    %984 = arith.select %981, %983, %960 : vector<8x50xi1>, vector<8x50xf32>
    %985 = vector.shape_cast %979 : vector<1x50xi1> to vector<1x50xi1>
    %986 = vector.broadcast %985 : vector<1x50xi1> to vector<8x50xi1>
    %987 = vector.shape_cast %977 : vector<8x1xi32> to vector<8x1xi32>
    %988 = vector.broadcast %987 : vector<8x1xi32> to vector<8x50xi32>
    %989 = arith.select %986, %988, %965 : vector<8x50xi1>, vector<8x50xi32>
    %c40_i32 = arith.constant 40 : i32
    %cst_173 = arith.constant dense<0xFF800000> : vector<8xf32>
    %990 = vector.multi_reduction <maximumf>, %971, %cst_173 [1] : vector<8x256xf32> to vector<8xf32>
    %991 = vector.shape_cast %990 : vector<8xf32> to vector<8x1xf32>
    %992 = vector.broadcast %991 : vector<8x1xf32> to vector<8x256xf32>
    %993 = arith.cmpf oeq, %971, %992 : vector<8x256xf32>
    %cst_174 = arith.constant 0.000000e+00 : f32
    %994 = vector.broadcast %cst_174 : f32 to vector<8x256xf32>
    %995 = arith.select %993, %994, %971 : vector<8x256xi1>, vector<8x256xf32>
    %c256_i32_175 = arith.constant 256 : i32
    %996 = vector.shape_cast %26 : vector<1x256xi32> to vector<1x256xi32>
    %997 = vector.broadcast %996 : vector<1x256xi32> to vector<8x256xi32>
    %998 = vector.broadcast %c256_i32_175 : i32 to vector<8x256xi32>
    %999 = arith.select %993, %997, %998 : vector<8x256xi1>, vector<8x256xi32>
    %cst_176 = arith.constant dense<2147483647> : vector<8xi32>
    %1000 = vector.multi_reduction <minsi>, %999, %cst_176 [1] : vector<8x256xi32> to vector<8xi32>
    %1001 = vector.shape_cast %1000 : vector<8xi32> to vector<8x1xi32>
    %1002 = vector.broadcast %c40_i32 : i32 to vector<1x50xi32>
    %1003 = arith.cmpi eq, %27, %1002 : vector<1x50xi32>
    %1004 = vector.shape_cast %1003 : vector<1x50xi1> to vector<1x50xi1>
    %1005 = vector.broadcast %1004 : vector<1x50xi1> to vector<8x50xi1>
    %1006 = vector.shape_cast %991 : vector<8x1xf32> to vector<8x1xf32>
    %1007 = vector.broadcast %1006 : vector<8x1xf32> to vector<8x50xf32>
    %1008 = arith.select %1005, %1007, %984 : vector<8x50xi1>, vector<8x50xf32>
    %1009 = vector.shape_cast %1003 : vector<1x50xi1> to vector<1x50xi1>
    %1010 = vector.broadcast %1009 : vector<1x50xi1> to vector<8x50xi1>
    %1011 = vector.shape_cast %1001 : vector<8x1xi32> to vector<8x1xi32>
    %1012 = vector.broadcast %1011 : vector<8x1xi32> to vector<8x50xi32>
    %1013 = arith.select %1010, %1012, %989 : vector<8x50xi1>, vector<8x50xi32>
    %c41_i32 = arith.constant 41 : i32
    %cst_177 = arith.constant dense<0xFF800000> : vector<8xf32>
    %1014 = vector.multi_reduction <maximumf>, %995, %cst_177 [1] : vector<8x256xf32> to vector<8xf32>
    %1015 = vector.shape_cast %1014 : vector<8xf32> to vector<8x1xf32>
    %1016 = vector.broadcast %1015 : vector<8x1xf32> to vector<8x256xf32>
    %1017 = arith.cmpf oeq, %995, %1016 : vector<8x256xf32>
    %cst_178 = arith.constant 0.000000e+00 : f32
    %1018 = vector.broadcast %cst_178 : f32 to vector<8x256xf32>
    %1019 = arith.select %1017, %1018, %995 : vector<8x256xi1>, vector<8x256xf32>
    %c256_i32_179 = arith.constant 256 : i32
    %1020 = vector.shape_cast %26 : vector<1x256xi32> to vector<1x256xi32>
    %1021 = vector.broadcast %1020 : vector<1x256xi32> to vector<8x256xi32>
    %1022 = vector.broadcast %c256_i32_179 : i32 to vector<8x256xi32>
    %1023 = arith.select %1017, %1021, %1022 : vector<8x256xi1>, vector<8x256xi32>
    %cst_180 = arith.constant dense<2147483647> : vector<8xi32>
    %1024 = vector.multi_reduction <minsi>, %1023, %cst_180 [1] : vector<8x256xi32> to vector<8xi32>
    %1025 = vector.shape_cast %1024 : vector<8xi32> to vector<8x1xi32>
    %1026 = vector.broadcast %c41_i32 : i32 to vector<1x50xi32>
    %1027 = arith.cmpi eq, %27, %1026 : vector<1x50xi32>
    %1028 = vector.shape_cast %1027 : vector<1x50xi1> to vector<1x50xi1>
    %1029 = vector.broadcast %1028 : vector<1x50xi1> to vector<8x50xi1>
    %1030 = vector.shape_cast %1015 : vector<8x1xf32> to vector<8x1xf32>
    %1031 = vector.broadcast %1030 : vector<8x1xf32> to vector<8x50xf32>
    %1032 = arith.select %1029, %1031, %1008 : vector<8x50xi1>, vector<8x50xf32>
    %1033 = vector.shape_cast %1027 : vector<1x50xi1> to vector<1x50xi1>
    %1034 = vector.broadcast %1033 : vector<1x50xi1> to vector<8x50xi1>
    %1035 = vector.shape_cast %1025 : vector<8x1xi32> to vector<8x1xi32>
    %1036 = vector.broadcast %1035 : vector<8x1xi32> to vector<8x50xi32>
    %1037 = arith.select %1034, %1036, %1013 : vector<8x50xi1>, vector<8x50xi32>
    %c42_i32 = arith.constant 42 : i32
    %cst_181 = arith.constant dense<0xFF800000> : vector<8xf32>
    %1038 = vector.multi_reduction <maximumf>, %1019, %cst_181 [1] : vector<8x256xf32> to vector<8xf32>
    %1039 = vector.shape_cast %1038 : vector<8xf32> to vector<8x1xf32>
    %1040 = vector.broadcast %1039 : vector<8x1xf32> to vector<8x256xf32>
    %1041 = arith.cmpf oeq, %1019, %1040 : vector<8x256xf32>
    %cst_182 = arith.constant 0.000000e+00 : f32
    %1042 = vector.broadcast %cst_182 : f32 to vector<8x256xf32>
    %1043 = arith.select %1041, %1042, %1019 : vector<8x256xi1>, vector<8x256xf32>
    %c256_i32_183 = arith.constant 256 : i32
    %1044 = vector.shape_cast %26 : vector<1x256xi32> to vector<1x256xi32>
    %1045 = vector.broadcast %1044 : vector<1x256xi32> to vector<8x256xi32>
    %1046 = vector.broadcast %c256_i32_183 : i32 to vector<8x256xi32>
    %1047 = arith.select %1041, %1045, %1046 : vector<8x256xi1>, vector<8x256xi32>
    %cst_184 = arith.constant dense<2147483647> : vector<8xi32>
    %1048 = vector.multi_reduction <minsi>, %1047, %cst_184 [1] : vector<8x256xi32> to vector<8xi32>
    %1049 = vector.shape_cast %1048 : vector<8xi32> to vector<8x1xi32>
    %1050 = vector.broadcast %c42_i32 : i32 to vector<1x50xi32>
    %1051 = arith.cmpi eq, %27, %1050 : vector<1x50xi32>
    %1052 = vector.shape_cast %1051 : vector<1x50xi1> to vector<1x50xi1>
    %1053 = vector.broadcast %1052 : vector<1x50xi1> to vector<8x50xi1>
    %1054 = vector.shape_cast %1039 : vector<8x1xf32> to vector<8x1xf32>
    %1055 = vector.broadcast %1054 : vector<8x1xf32> to vector<8x50xf32>
    %1056 = arith.select %1053, %1055, %1032 : vector<8x50xi1>, vector<8x50xf32>
    %1057 = vector.shape_cast %1051 : vector<1x50xi1> to vector<1x50xi1>
    %1058 = vector.broadcast %1057 : vector<1x50xi1> to vector<8x50xi1>
    %1059 = vector.shape_cast %1049 : vector<8x1xi32> to vector<8x1xi32>
    %1060 = vector.broadcast %1059 : vector<8x1xi32> to vector<8x50xi32>
    %1061 = arith.select %1058, %1060, %1037 : vector<8x50xi1>, vector<8x50xi32>
    %c43_i32 = arith.constant 43 : i32
    %cst_185 = arith.constant dense<0xFF800000> : vector<8xf32>
    %1062 = vector.multi_reduction <maximumf>, %1043, %cst_185 [1] : vector<8x256xf32> to vector<8xf32>
    %1063 = vector.shape_cast %1062 : vector<8xf32> to vector<8x1xf32>
    %1064 = vector.broadcast %1063 : vector<8x1xf32> to vector<8x256xf32>
    %1065 = arith.cmpf oeq, %1043, %1064 : vector<8x256xf32>
    %cst_186 = arith.constant 0.000000e+00 : f32
    %1066 = vector.broadcast %cst_186 : f32 to vector<8x256xf32>
    %1067 = arith.select %1065, %1066, %1043 : vector<8x256xi1>, vector<8x256xf32>
    %c256_i32_187 = arith.constant 256 : i32
    %1068 = vector.shape_cast %26 : vector<1x256xi32> to vector<1x256xi32>
    %1069 = vector.broadcast %1068 : vector<1x256xi32> to vector<8x256xi32>
    %1070 = vector.broadcast %c256_i32_187 : i32 to vector<8x256xi32>
    %1071 = arith.select %1065, %1069, %1070 : vector<8x256xi1>, vector<8x256xi32>
    %cst_188 = arith.constant dense<2147483647> : vector<8xi32>
    %1072 = vector.multi_reduction <minsi>, %1071, %cst_188 [1] : vector<8x256xi32> to vector<8xi32>
    %1073 = vector.shape_cast %1072 : vector<8xi32> to vector<8x1xi32>
    %1074 = vector.broadcast %c43_i32 : i32 to vector<1x50xi32>
    %1075 = arith.cmpi eq, %27, %1074 : vector<1x50xi32>
    %1076 = vector.shape_cast %1075 : vector<1x50xi1> to vector<1x50xi1>
    %1077 = vector.broadcast %1076 : vector<1x50xi1> to vector<8x50xi1>
    %1078 = vector.shape_cast %1063 : vector<8x1xf32> to vector<8x1xf32>
    %1079 = vector.broadcast %1078 : vector<8x1xf32> to vector<8x50xf32>
    %1080 = arith.select %1077, %1079, %1056 : vector<8x50xi1>, vector<8x50xf32>
    %1081 = vector.shape_cast %1075 : vector<1x50xi1> to vector<1x50xi1>
    %1082 = vector.broadcast %1081 : vector<1x50xi1> to vector<8x50xi1>
    %1083 = vector.shape_cast %1073 : vector<8x1xi32> to vector<8x1xi32>
    %1084 = vector.broadcast %1083 : vector<8x1xi32> to vector<8x50xi32>
    %1085 = arith.select %1082, %1084, %1061 : vector<8x50xi1>, vector<8x50xi32>
    %c44_i32 = arith.constant 44 : i32
    %cst_189 = arith.constant dense<0xFF800000> : vector<8xf32>
    %1086 = vector.multi_reduction <maximumf>, %1067, %cst_189 [1] : vector<8x256xf32> to vector<8xf32>
    %1087 = vector.shape_cast %1086 : vector<8xf32> to vector<8x1xf32>
    %1088 = vector.broadcast %1087 : vector<8x1xf32> to vector<8x256xf32>
    %1089 = arith.cmpf oeq, %1067, %1088 : vector<8x256xf32>
    %cst_190 = arith.constant 0.000000e+00 : f32
    %1090 = vector.broadcast %cst_190 : f32 to vector<8x256xf32>
    %1091 = arith.select %1089, %1090, %1067 : vector<8x256xi1>, vector<8x256xf32>
    %c256_i32_191 = arith.constant 256 : i32
    %1092 = vector.shape_cast %26 : vector<1x256xi32> to vector<1x256xi32>
    %1093 = vector.broadcast %1092 : vector<1x256xi32> to vector<8x256xi32>
    %1094 = vector.broadcast %c256_i32_191 : i32 to vector<8x256xi32>
    %1095 = arith.select %1089, %1093, %1094 : vector<8x256xi1>, vector<8x256xi32>
    %cst_192 = arith.constant dense<2147483647> : vector<8xi32>
    %1096 = vector.multi_reduction <minsi>, %1095, %cst_192 [1] : vector<8x256xi32> to vector<8xi32>
    %1097 = vector.shape_cast %1096 : vector<8xi32> to vector<8x1xi32>
    %1098 = vector.broadcast %c44_i32 : i32 to vector<1x50xi32>
    %1099 = arith.cmpi eq, %27, %1098 : vector<1x50xi32>
    %1100 = vector.shape_cast %1099 : vector<1x50xi1> to vector<1x50xi1>
    %1101 = vector.broadcast %1100 : vector<1x50xi1> to vector<8x50xi1>
    %1102 = vector.shape_cast %1087 : vector<8x1xf32> to vector<8x1xf32>
    %1103 = vector.broadcast %1102 : vector<8x1xf32> to vector<8x50xf32>
    %1104 = arith.select %1101, %1103, %1080 : vector<8x50xi1>, vector<8x50xf32>
    %1105 = vector.shape_cast %1099 : vector<1x50xi1> to vector<1x50xi1>
    %1106 = vector.broadcast %1105 : vector<1x50xi1> to vector<8x50xi1>
    %1107 = vector.shape_cast %1097 : vector<8x1xi32> to vector<8x1xi32>
    %1108 = vector.broadcast %1107 : vector<8x1xi32> to vector<8x50xi32>
    %1109 = arith.select %1106, %1108, %1085 : vector<8x50xi1>, vector<8x50xi32>
    %c45_i32 = arith.constant 45 : i32
    %cst_193 = arith.constant dense<0xFF800000> : vector<8xf32>
    %1110 = vector.multi_reduction <maximumf>, %1091, %cst_193 [1] : vector<8x256xf32> to vector<8xf32>
    %1111 = vector.shape_cast %1110 : vector<8xf32> to vector<8x1xf32>
    %1112 = vector.broadcast %1111 : vector<8x1xf32> to vector<8x256xf32>
    %1113 = arith.cmpf oeq, %1091, %1112 : vector<8x256xf32>
    %cst_194 = arith.constant 0.000000e+00 : f32
    %1114 = vector.broadcast %cst_194 : f32 to vector<8x256xf32>
    %1115 = arith.select %1113, %1114, %1091 : vector<8x256xi1>, vector<8x256xf32>
    %c256_i32_195 = arith.constant 256 : i32
    %1116 = vector.shape_cast %26 : vector<1x256xi32> to vector<1x256xi32>
    %1117 = vector.broadcast %1116 : vector<1x256xi32> to vector<8x256xi32>
    %1118 = vector.broadcast %c256_i32_195 : i32 to vector<8x256xi32>
    %1119 = arith.select %1113, %1117, %1118 : vector<8x256xi1>, vector<8x256xi32>
    %cst_196 = arith.constant dense<2147483647> : vector<8xi32>
    %1120 = vector.multi_reduction <minsi>, %1119, %cst_196 [1] : vector<8x256xi32> to vector<8xi32>
    %1121 = vector.shape_cast %1120 : vector<8xi32> to vector<8x1xi32>
    %1122 = vector.broadcast %c45_i32 : i32 to vector<1x50xi32>
    %1123 = arith.cmpi eq, %27, %1122 : vector<1x50xi32>
    %1124 = vector.shape_cast %1123 : vector<1x50xi1> to vector<1x50xi1>
    %1125 = vector.broadcast %1124 : vector<1x50xi1> to vector<8x50xi1>
    %1126 = vector.shape_cast %1111 : vector<8x1xf32> to vector<8x1xf32>
    %1127 = vector.broadcast %1126 : vector<8x1xf32> to vector<8x50xf32>
    %1128 = arith.select %1125, %1127, %1104 : vector<8x50xi1>, vector<8x50xf32>
    %1129 = vector.shape_cast %1123 : vector<1x50xi1> to vector<1x50xi1>
    %1130 = vector.broadcast %1129 : vector<1x50xi1> to vector<8x50xi1>
    %1131 = vector.shape_cast %1121 : vector<8x1xi32> to vector<8x1xi32>
    %1132 = vector.broadcast %1131 : vector<8x1xi32> to vector<8x50xi32>
    %1133 = arith.select %1130, %1132, %1109 : vector<8x50xi1>, vector<8x50xi32>
    %c46_i32 = arith.constant 46 : i32
    %cst_197 = arith.constant dense<0xFF800000> : vector<8xf32>
    %1134 = vector.multi_reduction <maximumf>, %1115, %cst_197 [1] : vector<8x256xf32> to vector<8xf32>
    %1135 = vector.shape_cast %1134 : vector<8xf32> to vector<8x1xf32>
    %1136 = vector.broadcast %1135 : vector<8x1xf32> to vector<8x256xf32>
    %1137 = arith.cmpf oeq, %1115, %1136 : vector<8x256xf32>
    %cst_198 = arith.constant 0.000000e+00 : f32
    %1138 = vector.broadcast %cst_198 : f32 to vector<8x256xf32>
    %1139 = arith.select %1137, %1138, %1115 : vector<8x256xi1>, vector<8x256xf32>
    %c256_i32_199 = arith.constant 256 : i32
    %1140 = vector.shape_cast %26 : vector<1x256xi32> to vector<1x256xi32>
    %1141 = vector.broadcast %1140 : vector<1x256xi32> to vector<8x256xi32>
    %1142 = vector.broadcast %c256_i32_199 : i32 to vector<8x256xi32>
    %1143 = arith.select %1137, %1141, %1142 : vector<8x256xi1>, vector<8x256xi32>
    %cst_200 = arith.constant dense<2147483647> : vector<8xi32>
    %1144 = vector.multi_reduction <minsi>, %1143, %cst_200 [1] : vector<8x256xi32> to vector<8xi32>
    %1145 = vector.shape_cast %1144 : vector<8xi32> to vector<8x1xi32>
    %1146 = vector.broadcast %c46_i32 : i32 to vector<1x50xi32>
    %1147 = arith.cmpi eq, %27, %1146 : vector<1x50xi32>
    %1148 = vector.shape_cast %1147 : vector<1x50xi1> to vector<1x50xi1>
    %1149 = vector.broadcast %1148 : vector<1x50xi1> to vector<8x50xi1>
    %1150 = vector.shape_cast %1135 : vector<8x1xf32> to vector<8x1xf32>
    %1151 = vector.broadcast %1150 : vector<8x1xf32> to vector<8x50xf32>
    %1152 = arith.select %1149, %1151, %1128 : vector<8x50xi1>, vector<8x50xf32>
    %1153 = vector.shape_cast %1147 : vector<1x50xi1> to vector<1x50xi1>
    %1154 = vector.broadcast %1153 : vector<1x50xi1> to vector<8x50xi1>
    %1155 = vector.shape_cast %1145 : vector<8x1xi32> to vector<8x1xi32>
    %1156 = vector.broadcast %1155 : vector<8x1xi32> to vector<8x50xi32>
    %1157 = arith.select %1154, %1156, %1133 : vector<8x50xi1>, vector<8x50xi32>
    %c47_i32 = arith.constant 47 : i32
    %cst_201 = arith.constant dense<0xFF800000> : vector<8xf32>
    %1158 = vector.multi_reduction <maximumf>, %1139, %cst_201 [1] : vector<8x256xf32> to vector<8xf32>
    %1159 = vector.shape_cast %1158 : vector<8xf32> to vector<8x1xf32>
    %1160 = vector.broadcast %1159 : vector<8x1xf32> to vector<8x256xf32>
    %1161 = arith.cmpf oeq, %1139, %1160 : vector<8x256xf32>
    %cst_202 = arith.constant 0.000000e+00 : f32
    %1162 = vector.broadcast %cst_202 : f32 to vector<8x256xf32>
    %1163 = arith.select %1161, %1162, %1139 : vector<8x256xi1>, vector<8x256xf32>
    %c256_i32_203 = arith.constant 256 : i32
    %1164 = vector.shape_cast %26 : vector<1x256xi32> to vector<1x256xi32>
    %1165 = vector.broadcast %1164 : vector<1x256xi32> to vector<8x256xi32>
    %1166 = vector.broadcast %c256_i32_203 : i32 to vector<8x256xi32>
    %1167 = arith.select %1161, %1165, %1166 : vector<8x256xi1>, vector<8x256xi32>
    %cst_204 = arith.constant dense<2147483647> : vector<8xi32>
    %1168 = vector.multi_reduction <minsi>, %1167, %cst_204 [1] : vector<8x256xi32> to vector<8xi32>
    %1169 = vector.shape_cast %1168 : vector<8xi32> to vector<8x1xi32>
    %1170 = vector.broadcast %c47_i32 : i32 to vector<1x50xi32>
    %1171 = arith.cmpi eq, %27, %1170 : vector<1x50xi32>
    %1172 = vector.shape_cast %1171 : vector<1x50xi1> to vector<1x50xi1>
    %1173 = vector.broadcast %1172 : vector<1x50xi1> to vector<8x50xi1>
    %1174 = vector.shape_cast %1159 : vector<8x1xf32> to vector<8x1xf32>
    %1175 = vector.broadcast %1174 : vector<8x1xf32> to vector<8x50xf32>
    %1176 = arith.select %1173, %1175, %1152 : vector<8x50xi1>, vector<8x50xf32>
    %1177 = vector.shape_cast %1171 : vector<1x50xi1> to vector<1x50xi1>
    %1178 = vector.broadcast %1177 : vector<1x50xi1> to vector<8x50xi1>
    %1179 = vector.shape_cast %1169 : vector<8x1xi32> to vector<8x1xi32>
    %1180 = vector.broadcast %1179 : vector<8x1xi32> to vector<8x50xi32>
    %1181 = arith.select %1178, %1180, %1157 : vector<8x50xi1>, vector<8x50xi32>
    %c48_i32 = arith.constant 48 : i32
    %cst_205 = arith.constant dense<0xFF800000> : vector<8xf32>
    %1182 = vector.multi_reduction <maximumf>, %1163, %cst_205 [1] : vector<8x256xf32> to vector<8xf32>
    %1183 = vector.shape_cast %1182 : vector<8xf32> to vector<8x1xf32>
    %1184 = vector.broadcast %1183 : vector<8x1xf32> to vector<8x256xf32>
    %1185 = arith.cmpf oeq, %1163, %1184 : vector<8x256xf32>
    %cst_206 = arith.constant 0.000000e+00 : f32
    %1186 = vector.broadcast %cst_206 : f32 to vector<8x256xf32>
    %1187 = arith.select %1185, %1186, %1163 : vector<8x256xi1>, vector<8x256xf32>
    %c256_i32_207 = arith.constant 256 : i32
    %1188 = vector.shape_cast %26 : vector<1x256xi32> to vector<1x256xi32>
    %1189 = vector.broadcast %1188 : vector<1x256xi32> to vector<8x256xi32>
    %1190 = vector.broadcast %c256_i32_207 : i32 to vector<8x256xi32>
    %1191 = arith.select %1185, %1189, %1190 : vector<8x256xi1>, vector<8x256xi32>
    %cst_208 = arith.constant dense<2147483647> : vector<8xi32>
    %1192 = vector.multi_reduction <minsi>, %1191, %cst_208 [1] : vector<8x256xi32> to vector<8xi32>
    %1193 = vector.shape_cast %1192 : vector<8xi32> to vector<8x1xi32>
    %1194 = vector.broadcast %c48_i32 : i32 to vector<1x50xi32>
    %1195 = arith.cmpi eq, %27, %1194 : vector<1x50xi32>
    %1196 = vector.shape_cast %1195 : vector<1x50xi1> to vector<1x50xi1>
    %1197 = vector.broadcast %1196 : vector<1x50xi1> to vector<8x50xi1>
    %1198 = vector.shape_cast %1183 : vector<8x1xf32> to vector<8x1xf32>
    %1199 = vector.broadcast %1198 : vector<8x1xf32> to vector<8x50xf32>
    %1200 = arith.select %1197, %1199, %1176 : vector<8x50xi1>, vector<8x50xf32>
    %1201 = vector.shape_cast %1195 : vector<1x50xi1> to vector<1x50xi1>
    %1202 = vector.broadcast %1201 : vector<1x50xi1> to vector<8x50xi1>
    %1203 = vector.shape_cast %1193 : vector<8x1xi32> to vector<8x1xi32>
    %1204 = vector.broadcast %1203 : vector<8x1xi32> to vector<8x50xi32>
    %1205 = arith.select %1202, %1204, %1181 : vector<8x50xi1>, vector<8x50xi32>
    %c49_i32 = arith.constant 49 : i32
    %cst_209 = arith.constant dense<0xFF800000> : vector<8xf32>
    %1206 = vector.multi_reduction <maximumf>, %1187, %cst_209 [1] : vector<8x256xf32> to vector<8xf32>
    %1207 = vector.shape_cast %1206 : vector<8xf32> to vector<8x1xf32>
    %1208 = vector.broadcast %1207 : vector<8x1xf32> to vector<8x256xf32>
    %1209 = arith.cmpf oeq, %1187, %1208 : vector<8x256xf32>
    %cst_210 = arith.constant 0.000000e+00 : f32
    %1210 = vector.broadcast %cst_210 : f32 to vector<8x256xf32>
    %1211 = arith.select %1209, %1210, %1187 : vector<8x256xi1>, vector<8x256xf32>
    %c256_i32_211 = arith.constant 256 : i32
    %1212 = vector.shape_cast %26 : vector<1x256xi32> to vector<1x256xi32>
    %1213 = vector.broadcast %1212 : vector<1x256xi32> to vector<8x256xi32>
    %1214 = vector.broadcast %c256_i32_211 : i32 to vector<8x256xi32>
    %1215 = arith.select %1209, %1213, %1214 : vector<8x256xi1>, vector<8x256xi32>
    %cst_212 = arith.constant dense<2147483647> : vector<8xi32>
    %1216 = vector.multi_reduction <minsi>, %1215, %cst_212 [1] : vector<8x256xi32> to vector<8xi32>
    %1217 = vector.shape_cast %1216 : vector<8xi32> to vector<8x1xi32>
    %1218 = vector.broadcast %c49_i32 : i32 to vector<1x50xi32>
    %1219 = arith.cmpi eq, %27, %1218 : vector<1x50xi32>
    %1220 = vector.shape_cast %1219 : vector<1x50xi1> to vector<1x50xi1>
    %1221 = vector.broadcast %1220 : vector<1x50xi1> to vector<8x50xi1>
    %1222 = vector.shape_cast %1207 : vector<8x1xf32> to vector<8x1xf32>
    %1223 = vector.broadcast %1222 : vector<8x1xf32> to vector<8x50xf32>
    %1224 = arith.select %1221, %1223, %1200 : vector<8x50xi1>, vector<8x50xf32>
    %1225 = vector.shape_cast %1219 : vector<1x50xi1> to vector<1x50xi1>
    %1226 = vector.broadcast %1225 : vector<1x50xi1> to vector<8x50xi1>
    %1227 = vector.shape_cast %1217 : vector<8x1xi32> to vector<8x1xi32>
    %1228 = vector.broadcast %1227 : vector<8x1xi32> to vector<8x50xi32>
    %1229 = arith.select %1226, %1228, %1205 : vector<8x50xi1>, vector<8x50xi32>
    %c50_i32 = arith.constant 50 : i32
    %1230 = vector.broadcast %25 : vector<8x1xf32> to vector<8x50xf32>
    %1231 = arith.mulf %1224, %1230 : vector<8x50xf32>
    %c0_213 = arith.constant 0 : index
    %c0_214 = arith.constant 0 : index
    %1232 = vector.load %arg7[%c0_213, %c0_214] : memref<8x50xf32, #tpu.memory_space<vmem>>, vector<8x50xf32>
    tpu.vector_store %arg7[%c0_213, %c0_214], %1231 {strides = array<i32>} : memref<8x50xf32, #tpu.memory_space<vmem>>, vector<8x50xf32>,
    %c0_215 = arith.constant 0 : index
    %c0_216 = arith.constant 0 : index
    %1233 = vector.load %arg6[%c0_215, %c0_216] : memref<8x50xi32, #tpu.memory_space<vmem>>, vector<8x50xi32>
    tpu.vector_store %arg6[%c0_215, %c0_216], %1229 {strides = array<i32>} : memref<8x50xi32, #tpu.memory_space<vmem>>, vector<8x50xi32>,
    %1234 = arith.subf %18, %1211 : vector<8x256xf32>
    %1235 = vector.broadcast %25 : vector<8x1xf32> to vector<8x256xf32>
    %1236 = arith.mulf %1234, %1235 : vector<8x256xf32>
    %c0_217 = arith.constant 0 : index
    %c0_218 = arith.constant 0 : index
    %1237 = vector.load %arg4[%c0_217, %c0_218] : memref<256x32xf32, #tpu.memory_space<vmem>>, vector<256x32xf32>
    %cst_219 = arith.constant dense<0.000000e+00> : vector<8x32xf32>
    %1238 = tpu.matmul %1236, %1237, %cst_219 {dimension_numbers = #tpu.dot_dimension_numbers<[1], [0], [0], [1], [0, 0, 1, 1], [], []>} : vector<8x256xf32>, vector<256x32xf32>, vector<8x32xf32> -> vector<8x32xf32>
    %c0_220 = arith.constant 0 : index
    %c0_221 = arith.constant 0 : index
    %1239 = vector.load %arg5[%c0_220, %c0_221] : memref<8x32xf32, #tpu.memory_space<vmem>>, vector<8x32xf32>
    tpu.vector_store %arg5[%c0_220, %c0_221], %1238 {strides = array<i32>} : memref<8x32xf32, #tpu.memory_space<vmem>>, vector<8x32xf32>,
    return
  }
  func.func @transform_0(%arg0: i32) -> (i32, i32) {
    %c0_i32 = arith.constant 0 : i32
    %c0_i32_0 = arith.constant 0 : i32
    return %arg0, %c0_i32 : i32, i32
  }
  func.func @transform_1(%arg0: i32) -> (i32, i32) {
    %c0_i32 = arith.constant 0 : i32
    %c0_i32_0 = arith.constant 0 : i32
    %c0_i32_1 = arith.constant 0 : i32
    return %c0_i32, %c0_i32_0 : i32, i32
  }
  func.func @transform_2(%arg0: i32) -> (i32, i32) {
    %c0_i32 = arith.constant 0 : i32
    %c0_i32_0 = arith.constant 0 : i32
    %c0_i32_1 = arith.constant 0 : i32
    return %c0_i32, %c0_i32_0 : i32, i32
  }
  func.func @transform_3(%arg0: i32) -> (i32, i32) {
    %c0_i32 = arith.constant 0 : i32
    %c0_i32_0 = arith.constant 0 : i32
    %c0_i32_1 = arith.constant 0 : i32
    return %c0_i32, %c0_i32_0 : i32, i32
  }
  func.func @transform_4(%arg0: i32) -> (i32, i32) {
    %c0_i32 = arith.constant 0 : i32
    %c0_i32_0 = arith.constant 0 : i32
    return %arg0, %c0_i32 : i32, i32
  }
  func.func @transform_5(%arg0: i32) -> (i32, i32) {
    %c0_i32 = arith.constant 0 : i32
    %c0_i32_0 = arith.constant 0 : i32
    return %arg0, %c0_i32 : i32, i32
  }
  func.func @transform_6(%arg0: i32) -> (i32, i32) {
    %c0_i32 = arith.constant 0 : i32
    %c0_i32_0 = arith.constant 0 : i32
    return %arg0, %c0_i32 : i32, i32
  }
}

</mosaic_0001>

<llo_original>
// kernel: tpu_custom_call.1
$region0: #{tpu_custom_call.1}
  #allocation0 [shape = 'u32[]', space=smem, size = 0x4, offset = 0x4, fixed_abs, tag = 'smem constant byte address 0x4 - core index']
  #allocation1 [shape = 'u32[144,128]{1,0:T(1,128)}', space=vmem, size = 0x12000, scoped, tag = 'internal scratch']
  %s0 = inlined_call_operand.vmem [shape: f32[8,16], index: 0, kind: input, shape index: {}]
  %s1 = inlined_call_operand.vmem [shape: f32[16,256], index: 1, kind: input, shape index: {}]
  %s2 = inlined_call_operand.vmem [shape: f32[1,256], index: 2, kind: input, shape index: {}]
  %s3 = inlined_call_operand.vmem [shape: f32[256,32], index: 3, kind: input, shape index: {}]
  %s4 = inlined_call_operand.hbm [shape: f32[8,32], index: 4, kind: output, shape index: {0}]
  %s5 = inlined_call_operand.hbm [shape: s32[8,50], index: 5, kind: output, shape index: {1}]
  %s6 = inlined_call_operand.hbm [shape: f32[8,50], index: 6, kind: output, shape index: {2}]
  %7 = xla_tuple %s4, %s5, %s6
  %s8 = sld [smem:[#allocation0]]
  $region42: #{tpu_custom_call.1} parent=0
    _
  %s10 = ssub.s32 1, %s8
  %s11 = scalar_select 0, %s10, %s8
  $region1: #{tpu_custom_call.1} parent=0
    #allocation2 [shape = 'u8[4096]{0}', space=vmem, size = 0x1000, scoped, tag = 'output window, operand 0, single buffered']
    #allocation3 [shape = 's32[1]{0}', space=sflag, size = 0x4, scoped, tag = 'scoped memory for tpu_custom_call.1']
    #allocation4 [shape = 'u8[4096]{0}', space=vmem, size = 0x1000, scoped, tag = 'output window, operand 1, single buffered']
    #allocation5 [shape = 's32[1]{0}', space=sflag, size = 0x4, scoped, tag = 'scoped memory for tpu_custom_call.1']
    #allocation6 [shape = 'u8[4096]{0}', space=vmem, size = 0x1000, scoped, tag = 'output window, operand 2, single buffered']
    %12 = vsyncpa [#allocation3], 0
    %13 = vsyncpa [#allocation5], 0
    // Predicated region
    $region2: #{tpu_custom_call.1} parent=1 // pred_check
      _
    $region3: #{tpu_custom_call.1} parent=1 // pred_check_branch
      %15 = sbr.rel (0) target = $region5
    $region4: #{tpu_custom_call.1} parent=1 // pred_region
      _
    $region5: #{tpu_custom_call.1} parent=1 // pred_fallthru
      _
    // Predicated region
    $region6: #{tpu_custom_call.1} parent=1 // pred_check
      _
    $region7: #{tpu_custom_call.1} parent=1 // pred_check_branch
      %17 = sbr.rel (0) target = $region9
    $region8: #{tpu_custom_call.1} parent=1 // pred_region
      _
    $region9: #{tpu_custom_call.1} parent=1 // pred_fallthru
      _
    // Predicated region
    $region10: #{tpu_custom_call.1} parent=1 // pred_check
      _
    $region11: #{tpu_custom_call.1} parent=1 // pred_check_branch
      %19 = sbr.rel (0) target = $region13
    $region12: #{tpu_custom_call.1} parent=1 // pred_region
      _
    $region13: #{tpu_custom_call.1} parent=1 // pred_fallthru
      _
    // Predicated region
    $region14: #{tpu_custom_call.1} parent=1 // pred_check
      _
    $region15: #{tpu_custom_call.1} parent=1 // pred_check_branch
      %21 = sbr.rel (0) target = $region17
    $region16: #{tpu_custom_call.1} parent=1 // pred_region
      _
    $region17: #{tpu_custom_call.1} parent=1 // pred_fallthru
      _
    %v22 = vld [vmem:[%s0] sm:$0xff]
    %v23 = vld [vmem:[%s1] sm:$0xff]
    %v24 = vld [vmem:[%s1 + $0x8] sm:$0xff]
    %v25 = vld [vmem:[%s1 + $0x10] sm:$0xff]
    %v26 = vld [vmem:[%s1 + $0x18] sm:$0xff]
    %vm27 = vcmask 130048
    %v29 = vsel %vm27, %v22, 0
    %31 = vmatprep.subr.mxu0 %v24
    %32 = vmatpush1.msra.mxu0 %v23
    %33 = vmatprep.subr.mxu0 %v26
    %34 = vmatpush1.msra.mxu0 %v25
    %35 = vmatprep.subr.mxu0 0.0
    %36 = vmatpush1.msra.mxu0 0.0
    %37 = vmatprep.subr.mxu0 0.0
    %38 = vmatpush1.msra.mxu0 0.0
    %39 = vmatprep.subr.mxu0 0.0
    %40 = vmatpush1.msra.mxu0 0.0
    %41 = vmatprep.subr.mxu0 0.0
    %42 = vmatpush1.msra.mxu0 0.0
    %43 = vmatprep.subr.mxu0 0.0
    %44 = vmatpush1.msra.mxu0 0.0
    %45 = vmatprep.subr.mxu0 0.0
    %46 = vmatpush1.msra.mxu0 0.0
    %47 = vmatprep.subr.mxu0 0.0
    %48 = vmatpush1.msra.mxu0 0.0
    %49 = vmatprep.subr.mxu0 0.0
    %50 = vmatpush1.msra.mxu0 0.0
    %51 = vmatprep.subr.mxu0 0.0
    %52 = vmatpush1.msra.mxu0 0.0
    %53 = vmatprep.subr.mxu0 0.0
    %54 = vmatpush1.msra.mxu0 0.0
    %55 = vmatprep.subr.mxu0 0.0
    %56 = vmatpush1.msra.mxu0 0.0
    %57 = vmatprep.subr.mxu0 0.0
    %58 = vmatpush1.msra.mxu0 0.0
    %59 = vmatprep.subr.mxu0 0.0
    %60 = vmatpush1.msra.mxu0 0.0
    %61 = vmatprep.subr.mxu0 0.0
    %62 = vmatpush1.msra.mxu0 0.0
    %63 = vmatprep.subr.mxu0 0.0
    %64 = vmatpush1.msra.mxu0 0.0
    %65 = vmatprep.subr.mxu0 0.0
    %66 = vmatpush1.msra.mxu0 0.0
    %67 = vmatprep.subr.mxu0 0.0
    %68 = vmatpush1.msra.mxu0 0.0
    %69 = vmatprep.subr.mxu0 0.0
    %70 = vmatpush1.msra.mxu0 0.0
    %71 = vmatprep.subr.mxu0 0.0
    %72 = vmatpush1.msra.mxu0 0.0
    %73 = vmatprep.subr.mxu0 0.0
    %74 = vmatpush1.msra.mxu0 0.0
    %75 = vmatprep.subr.mxu0 0.0
    %76 = vmatpush1.msra.mxu0 0.0
    %77 = vmatprep.subr.mxu0 0.0
    %78 = vmatpush1.msra.mxu0 0.0
    %79 = vmatprep.subr.mxu0 0.0
    %80 = vmatpush1.msra.mxu0 0.0
    %81 = vmatprep.subr.mxu0 0.0
    %82 = vmatpush1.msra.mxu0 0.0
    %83 = vmatprep.subr.mxu0 0.0
    %84 = vmatpush1.msra.mxu0 0.0
    %85 = vmatprep.subr.mxu0 0.0
    %86 = vmatpush1.msra.mxu0 0.0
    %87 = vmatprep.subr.mxu0 0.0
    %88 = vmatpush1.msra.mxu0 0.0
    %89 = vmatprep.subr.mxu0 0.0
    %90 = vmatpush1.msra.mxu0 0.0
    %91 = vmatprep.subr.mxu0 0.0
    %92 = vmatpush1.msra.mxu0 0.0
    %93 = vmatprep.subr.mxu0 0.0
    %94 = vmatpush1.msra.mxu0 0.0
    %95 = vmatprep.mubr.f32.mxu0 0.0
    %96 = vmatmul.mubr.f32.gmra.mrb[0].mxu0 %v29
    %v97 = vpop.f32.mrb[0].mxu0
    %v98 = vadd.f32 0.0, %v97
    %v99 = vpop.f32.mrb[0].mxu0
    %v100 = vadd.f32 0.0, %v99
    %101 = vdwg.mxu0
    %v102 = vmul.f32 %v22, %v22
    %v103 = vsel %vm27, %v102, 0.0
    %104 = vadd.xlane.f32.xlu0 %v103
    %v105 = vpop.xlane.xlu0 %104
    %v106 = vld [vmem:[%s2] sm:$0x3]
    %v108 = vlaneseq
    %v109 = vshrl.u32 %v108, 7
    %v110 = vsub.s32 0, %v109
    %v111 = vrot.slane %v106, %v110
    %v112 = vlaneseq
    %v113 = vshrl.u32 %v112, 7
    %v114 = vsub.s32 1, %v113
    %v115 = vrot.slane %v106, %v114
    %v118 = vadd.f32 %v111, %v105
    %v119 = vadd.f32 %v115, %v105
    %v120 = vmul.f32 %v98, 2.0
    %v121 = vmul.f32 %v100, 2.0
    %v122 = vsub.f32 %v118, %v120
    %v123 = vsub.f32 %v119, %v121
    %v124 = vmax.f32 %v122, 0.0
    %v125 = vmax.f32 %v123, 0.0
    %v126 = vadd.f32 %v124, 0.001
    %v127 = vadd.f32 %v125, 0.001
    %v128 = vrcp.pop %v126
    %v129 = vmul.f32 1.0, %v128
    %v130 = vrcp.pop %v127
    %v131 = vmul.f32 1.0, %v130
    %v132 = vadd.f32 %v129, %v131
    %133 = vadd.xlane.f32.xlu0 %v132
    %v134 = vpop.xlane.xlu0 %133
    %v135 = vrcp.pop %v134
    %v136 = vmul.f32 %v134, %v135
    %v137 = vsub.f32 2.0, %v136
    %v138 = vmul.f32 %v135, %v137
    %v139 = vlaneseq
    %v140 = vand.u32 %v139, 127
    %v141 = vadd.s32 %v140, 128
    %v142 = vmax.f32 %v129, %v131
    %143 = vmax.xlane.f32.xlu0 %v142
    %v144 = vpop.xlane.xlu0 %143
    %vm145 = vcmp.eq.f32.partialorder %v129, %v144
    %vm146 = vcmp.eq.f32.partialorder %v131, %v144
    %v147 = vsel %vm145, 0.0, %v129
    %v148 = vsel %vm146, 0.0, %v131
    %v149 = vsel %vm145, %v140, 256
    %v150 = vsel %vm146, %v141, 256
    %vm151 = vcmp.lt.s32.totalorder %v149, %v150
    %v152 = vsel %vm151, %v149, %v150
    %v153 = vand.u32 %v152, 65535
    %v154 = vshra.s32 %v152, 16
    %v155 = vcvt.s32.f32 %v153
    %v156 = vcvt.s32.f32 %v154
    %157 = vmin.xlane.f32.xlu0 %v156
    %v158 = vpop.xlane.xlu0 %157
    %vm159 = vcmp.eq.f32.partialorder %v156, %v158
    %v160 = vsel %vm159, %v155, inf
    %161 = vmin.xlane.f32.xlu0 %v160
    %v162 = vpop.xlane.xlu0 %161
    %v163 = vcvt.f32.s32 %v162
    %v164 = vcvt.f32.s32 %v158
    %v165 = vshll.u32 %v164, 16
    %v166 = vadd.s32 %v165, %v163
    %vm167 = vcmp.eq.s32.totalorder %v140, 0
    %v168 = vsel %vm167, 1, 0
    %vm169 = vcmp.eq.s32.totalorder %v168, 1
    %v170 = vsel %vm169, %v144, 0.0
    %v171 = vsel %vm169, %v166, 0
    %v172 = vmax.f32 %v147, %v148
    %173 = vmax.xlane.f32.xlu0 %v172
    %v174 = vpop.xlane.xlu0 %173
    %vm175 = vcmp.eq.f32.partialorder %v147, %v174
    %vm176 = vcmp.eq.f32.partialorder %v148, %v174
    %v177 = vsel %vm175, 0.0, %v147
    %v178 = vsel %vm176, 0.0, %v148
    %v179 = vsel %vm175, %v140, 256
    %v180 = vsel %vm176, %v141, 256
    %vm181 = vcmp.lt.s32.totalorder %v179, %v180
    %v182 = vsel %vm181, %v179, %v180
    %v183 = vand.u32 %v182, 65535
    %v184 = vshra.s32 %v182, 16
    %v185 = vcvt.s32.f32 %v183
    %v186 = vcvt.s32.f32 %v184
    %187 = vmin.xlane.f32.xlu0 %v186
    %v188 = vpop.xlane.xlu0 %187
    %vm189 = vcmp.eq.f32.partialorder %v186, %v188
    %v190 = vsel %vm189, %v185, inf
    %191 = vmin.xlane.f32.xlu0 %v190
    %v192 = vpop.xlane.xlu0 %191
    %v193 = vcvt.f32.s32 %v192
    %v194 = vcvt.f32.s32 %v188
    %v195 = vshll.u32 %v194, 16
    %v196 = vadd.s32 %v195, %v193
    %vm197 = vcmp.eq.s32.totalorder %v140, 1
    %v198 = vsel %vm197, 1, 0
    %vm199 = vcmp.eq.s32.totalorder %v198, 1
    %v200 = vsel %vm199, %v174, %v170
    %v201 = vsel %vm199, %v196, %v171
    %v202 = vmax.f32 %v177, %v178
    %203 = vmax.xlane.f32.xlu0 %v202
    %v204 = vpop.xlane.xlu0 %203
    %vm205 = vcmp.eq.f32.partialorder %v177, %v204
    %vm206 = vcmp.eq.f32.partialorder %v178, %v204
    %v207 = vsel %vm205, 0.0, %v177
    %v208 = vsel %vm206, 0.0, %v178
    %v209 = vsel %vm205, %v140, 256
    %v210 = vsel %vm206, %v141, 256
    %vm211 = vcmp.lt.s32.totalorder %v209, %v210
    %v212 = vsel %vm211, %v209, %v210
    %v213 = vand.u32 %v212, 65535
    %v214 = vshra.s32 %v212, 16
    %v215 = vcvt.s32.f32 %v213
    %v216 = vcvt.s32.f32 %v214
    %217 = vmin.xlane.f32.xlu0 %v216
    %v218 = vpop.xlane.xlu0 %217
    %vm219 = vcmp.eq.f32.partialorder %v216, %v218
    %v220 = vsel %vm219, %v215, inf
    %221 = vmin.xlane.f32.xlu0 %v220
    %v222 = vpop.xlane.xlu0 %221
    %v223 = vcvt.f32.s32 %v222
    %v224 = vcvt.f32.s32 %v218
    %v225 = vshll.u32 %v224, 16
    %v226 = vadd.s32 %v225, %v223
    %vm227 = vcmp.eq.s32.totalorder %v140, 2
    %v228 = vsel %vm227, 1, 0
    %vm229 = vcmp.eq.s32.totalorder %v228, 1
    %v230 = vsel %vm229, %v204, %v200
    %v231 = vsel %vm229, %v226, %v201
    %v232 = vmax.f32 %v207, %v208
    %233 = vmax.xlane.f32.xlu0 %v232
    %v234 = vpop.xlane.xlu0 %233
    %vm235 = vcmp.eq.f32.partialorder %v207, %v234
    %vm236 = vcmp.eq.f32.partialorder %v208, %v234
    %v237 = vsel %vm235, 0.0, %v207
    %v238 = vsel %vm236, 0.0, %v208
    %v239 = vsel %vm235, %v140, 256
    %v240 = vsel %vm236, %v141, 256
    %vm241 = vcmp.lt.s32.totalorder %v239, %v240
    %v242 = vsel %vm241, %v239, %v240
    %v243 = vand.u32 %v242, 65535
    %v244 = vshra.s32 %v242, 16
    %v245 = vcvt.s32.f32 %v243
    %v246 = vcvt.s32.f32 %v244
    %247 = vmin.xlane.f32.xlu0 %v246
    %v248 = vpop.xlane.xlu0 %247
    %vm249 = vcmp.eq.f32.partialorder %v246, %v248
    %v250 = vsel %vm249, %v245, inf
    %251 = vmin.xlane.f32.xlu0 %v250
    %v252 = vpop.xlane.xlu0 %251
    %v253 = vcvt.f32.s32 %v252
    %v254 = vcvt.f32.s32 %v248
    %v255 = vshll.u32 %v254, 16
    %v256 = vadd.s32 %v255, %v253
    %vm257 = vcmp.eq.s32.totalorder %v140, 3
    %v258 = vsel %vm257, 1, 0
    %vm259 = vcmp.eq.s32.totalorder %v258, 1
    %v260 = vsel %vm259, %v234, %v230
    %v261 = vsel %vm259, %v256, %v231
    %v262 = vmax.f32 %v237, %v238
    %263 = vmax.xlane.f32.xlu0 %v262
    %v264 = vpop.xlane.xlu0 %263
    %vm265 = vcmp.eq.f32.partialorder %v237, %v264
    %vm266 = vcmp.eq.f32.partialorder %v238, %v264
    %v267 = vsel %vm265, 0.0, %v237
    %v268 = vsel %vm266, 0.0, %v238
    %v269 = vsel %vm265, %v140, 256
    %v270 = vsel %vm266, %v141, 256
    %vm271 = vcmp.lt.s32.totalorder %v269, %v270
    %v272 = vsel %vm271, %v269, %v270
    %v273 = vand.u32 %v272, 65535
    %v274 = vshra.s32 %v272, 16
    %v275 = vcvt.s32.f32 %v273
    %v276 = vcvt.s32.f32 %v274
    %277 = vmin.xlane.f32.xlu0 %v276
    %v278 = vpop.xlane.xlu0 %277
    %vm279 = vcmp.eq.f32.partialorder %v276, %v278
    %v280 = vsel %vm279, %v275, inf
    %281 = vmin.xlane.f32.xlu0 %v280
    %v282 = vpop.xlane.xlu0 %281
    %v283 = vcvt.f32.s32 %v282
    %v284 = vcvt.f32.s32 %v278
    %v285 = vshll.u32 %v284, 16
    %v286 = vadd.s32 %v285, %v283
    %vm287 = vcmp.eq.s32.totalorder %v140, 4
    %v288 = vsel %vm287, 1, 0
    %vm289 = vcmp.eq.s32.totalorder %v288, 1
    %v290 = vsel %vm289, %v264, %v260
    %v291 = vsel %vm289, %v286, %v261
    %v292 = vmax.f32 %v267, %v268
    %293 = vmax.xlane.f32.xlu0 %v292
    %v294 = vpop.xlane.xlu0 %293
    %vm295 = vcmp.eq.f32.partialorder %v267, %v294
    %vm296 = vcmp.eq.f32.partialorder %v268, %v294
    %v297 = vsel %vm295, 0.0, %v267
    %v298 = vsel %vm296, 0.0, %v268
    %v299 = vsel %vm295, %v140, 256
    %v300 = vsel %vm296, %v141, 256
    %vm301 = vcmp.lt.s32.totalorder %v299, %v300
    %v302 = vsel %vm301, %v299, %v300
    %v303 = vand.u32 %v302, 65535
    %v304 = vshra.s32 %v302, 16
    %v305 = vcvt.s32.f32 %v303
    %v306 = vcvt.s32.f32 %v304
    %307 = vmin.xlane.f32.xlu0 %v306
    %v308 = vpop.xlane.xlu0 %307
    %vm309 = vcmp.eq.f32.partialorder %v306, %v308
    %v310 = vsel %vm309, %v305, inf
    %311 = vmin.xlane.f32.xlu0 %v310
    %v312 = vpop.xlane.xlu0 %311
    %v313 = vcvt.f32.s32 %v312
    %v314 = vcvt.f32.s32 %v308
    %v315 = vshll.u32 %v314, 16
    %v316 = vadd.s32 %v315, %v313
    %vm317 = vcmp.eq.s32.totalorder %v140, 5
    %v318 = vsel %vm317, 1, 0
    %vm319 = vcmp.eq.s32.totalorder %v318, 1
    %v320 = vsel %vm319, %v294, %v290
    %v321 = vsel %vm319, %v316, %v291
    %v322 = vmax.f32 %v297, %v298
    %323 = vmax.xlane.f32.xlu0 %v322
    %v324 = vpop.xlane.xlu0 %323
    %vm325 = vcmp.eq.f32.partialorder %v297, %v324
    %vm326 = vcmp.eq.f32.partialorder %v298, %v324
    %v327 = vsel %vm325, 0.0, %v297
    %v328 = vsel %vm326, 0.0, %v298
    %v329 = vsel %vm325, %v140, 256
    %v330 = vsel %vm326, %v141, 256
    %vm331 = vcmp.lt.s32.totalorder %v329, %v330
    %v332 = vsel %vm331, %v329, %v330
    %v333 = vand.u32 %v332, 65535
    %v334 = vshra.s32 %v332, 16
    %v335 = vcvt.s32.f32 %v333
    %v336 = vcvt.s32.f32 %v334
    %337 = vmin.xlane.f32.xlu0 %v336
    %v338 = vpop.xlane.xlu0 %337
    %vm339 = vcmp.eq.f32.partialorder %v336, %v338
    %v340 = vsel %vm339, %v335, inf
    %341 = vmin.xlane.f32.xlu0 %v340
    %v342 = vpop.xlane.xlu0 %341
    %v343 = vcvt.f32.s32 %v342
    %v344 = vcvt.f32.s32 %v338
    %v345 = vshll.u32 %v344, 16
    %v346 = vadd.s32 %v345, %v343
    %vm347 = vcmp.eq.s32.totalorder %v140, 6
    %v348 = vsel %vm347, 1, 0
    %vm349 = vcmp.eq.s32.totalorder %v348, 1
    %v350 = vsel %vm349, %v324, %v320
    %v351 = vsel %vm349, %v346, %v321
    %v352 = vmax.f32 %v327, %v328
    %353 = vmax.xlane.f32.xlu0 %v352
    %v354 = vpop.xlane.xlu0 %353
    %vm355 = vcmp.eq.f32.partialorder %v327, %v354
    %vm356 = vcmp.eq.f32.partialorder %v328, %v354
    %v357 = vsel %vm355, 0.0, %v327
    %v358 = vsel %vm356, 0.0, %v328
    %v359 = vsel %vm355, %v140, 256
    %v360 = vsel %vm356, %v141, 256
    %vm361 = vcmp.lt.s32.totalorder %v359, %v360
    %v362 = vsel %vm361, %v359, %v360
    %v363 = vand.u32 %v362, 65535
    %v364 = vshra.s32 %v362, 16
    %v365 = vcvt.s32.f32 %v363
    %v366 = vcvt.s32.f32 %v364
    %367 = vmin.xlane.f32.xlu0 %v366
    %v368 = vpop.xlane.xlu0 %367
    %vm369 = vcmp.eq.f32.partialorder %v366, %v368
    %v370 = vsel %vm369, %v365, inf
    %371 = vmin.xlane.f32.xlu0 %v370
    %v372 = vpop.xlane.xlu0 %371
    %v373 = vcvt.f32.s32 %v372
    %v374 = vcvt.f32.s32 %v368
    %v375 = vshll.u32 %v374, 16
    %v376 = vadd.s32 %v375, %v373
    %vm377 = vcmp.eq.s32.totalorder %v140, 7
    %v378 = vsel %vm377, 1, 0
    %vm379 = vcmp.eq.s32.totalorder %v378, 1
    %v380 = vsel %vm379, %v354, %v350
    %v381 = vsel %vm379, %v376, %v351
    %v382 = vmax.f32 %v357, %v358
    %383 = vmax.xlane.f32.xlu0 %v382
    %v384 = vpop.xlane.xlu0 %383
    %vm385 = vcmp.eq.f32.partialorder %v357, %v384
    %vm386 = vcmp.eq.f32.partialorder %v358, %v384
    %v387 = vsel %vm385, 0.0, %v357
    %v388 = vsel %vm386, 0.0, %v358
    %v389 = vsel %vm385, %v140, 256
    %v390 = vsel %vm386, %v141, 256
    %vm391 = vcmp.lt.s32.totalorder %v389, %v390
    %v392 = vsel %vm391, %v389, %v390
    %v393 = vand.u32 %v392, 65535
    %v394 = vshra.s32 %v392, 16
    %v395 = vcvt.s32.f32 %v393
    %v396 = vcvt.s32.f32 %v394
    %397 = vmin.xlane.f32.xlu0 %v396
    %v398 = vpop.xlane.xlu0 %397
    %vm399 = vcmp.eq.f32.partialorder %v396, %v398
    %v400 = vsel %vm399, %v395, inf
    %401 = vmin.xlane.f32.xlu0 %v400
    %v402 = vpop.xlane.xlu0 %401
    %v403 = vcvt.f32.s32 %v402
    %v404 = vcvt.f32.s32 %v398
    %v405 = vshll.u32 %v404, 16
    %v406 = vadd.s32 %v405, %v403
    %vm407 = vcmp.eq.s32.totalorder %v140, 8
    %v408 = vsel %vm407, 1, 0
    %vm409 = vcmp.eq.s32.totalorder %v408, 1
    %v410 = vsel %vm409, %v384, %v380
    %v411 = vsel %vm409, %v406, %v381
    %v412 = vmax.f32 %v387, %v388
    %413 = vmax.xlane.f32.xlu0 %v412
    %v414 = vpop.xlane.xlu0 %413
    %vm415 = vcmp.eq.f32.partialorder %v387, %v414
    %vm416 = vcmp.eq.f32.partialorder %v388, %v414
    %v417 = vsel %vm415, 0.0, %v387
    %v418 = vsel %vm416, 0.0, %v388
    %v419 = vsel %vm415, %v140, 256
    %v420 = vsel %vm416, %v141, 256
    %vm421 = vcmp.lt.s32.totalorder %v419, %v420
    %v422 = vsel %vm421, %v419, %v420
    %v423 = vand.u32 %v422, 65535
    %v424 = vshra.s32 %v422, 16
    %v425 = vcvt.s32.f32 %v423
    %v426 = vcvt.s32.f32 %v424
    %427 = vmin.xlane.f32.xlu0 %v426
    %v428 = vpop.xlane.xlu0 %427
    %vm429 = vcmp.eq.f32.partialorder %v426, %v428
    %v430 = vsel %vm429, %v425, inf
    %431 = vmin.xlane.f32.xlu0 %v430
    %v432 = vpop.xlane.xlu0 %431
    %v433 = vcvt.f32.s32 %v432
    %v434 = vcvt.f32.s32 %v428
    %v435 = vshll.u32 %v434, 16
    %v436 = vadd.s32 %v435, %v433
    %vm437 = vcmp.eq.s32.totalorder %v140, 9
    %v438 = vsel %vm437, 1, 0
    %vm439 = vcmp.eq.s32.totalorder %v438, 1
    %v440 = vsel %vm439, %v414, %v410
    %v441 = vsel %vm439, %v436, %v411
    %v442 = vmax.f32 %v417, %v418
    %443 = vmax.xlane.f32.xlu0 %v442
    %v444 = vpop.xlane.xlu0 %443
    %vm445 = vcmp.eq.f32.partialorder %v417, %v444
    %vm446 = vcmp.eq.f32.partialorder %v418, %v444
    %v447 = vsel %vm445, 0.0, %v417
    %v448 = vsel %vm446, 0.0, %v418
    %v449 = vsel %vm445, %v140, 256
    %v450 = vsel %vm446, %v141, 256
    %vm451 = vcmp.lt.s32.totalorder %v449, %v450
    %v452 = vsel %vm451, %v449, %v450
    %v453 = vand.u32 %v452, 65535
    %v454 = vshra.s32 %v452, 16
    %v455 = vcvt.s32.f32 %v453
    %v456 = vcvt.s32.f32 %v454
    %457 = vmin.xlane.f32.xlu0 %v456
    %v458 = vpop.xlane.xlu0 %457
    %vm459 = vcmp.eq.f32.partialorder %v456, %v458
    %v460 = vsel %vm459, %v455, inf
    %461 = vmin.xlane.f32.xlu0 %v460
    %v462 = vpop.xlane.xlu0 %461
    %v463 = vcvt.f32.s32 %v462
    %v464 = vcvt.f32.s32 %v458
    %v465 = vshll.u32 %v464, 16
    %v466 = vadd.s32 %v465, %v463
    %vm467 = vcmp.eq.s32.totalorder %v140, 10
    %v468 = vsel %vm467, 1, 0
    %vm469 = vcmp.eq.s32.totalorder %v468, 1
    %v470 = vsel %vm469, %v444, %v440
    %v471 = vsel %vm469, %v466, %v441
    %v472 = vmax.f32 %v447, %v448
    %473 = vmax.xlane.f32.xlu0 %v472
    %v474 = vpop.xlane.xlu0 %473
    %vm475 = vcmp.eq.f32.partialorder %v447, %v474
    %vm476 = vcmp.eq.f32.partialorder %v448, %v474
    %v477 = vsel %vm475, 0.0, %v447
    %v478 = vsel %vm476, 0.0, %v448
    %v479 = vsel %vm475, %v140, 256
    %v480 = vsel %vm476, %v141, 256
    %vm481 = vcmp.lt.s32.totalorder %v479, %v480
    %v482 = vsel %vm481, %v479, %v480
    %v483 = vand.u32 %v482, 65535
    %v484 = vshra.s32 %v482, 16
    %v485 = vcvt.s32.f32 %v483
    %v486 = vcvt.s32.f32 %v484
    %487 = vmin.xlane.f32.xlu0 %v486
    %v488 = vpop.xlane.xlu0 %487
    %vm489 = vcmp.eq.f32.partialorder %v486, %v488
    %v490 = vsel %vm489, %v485, inf
    %491 = vmin.xlane.f32.xlu0 %v490
    %v492 = vpop.xlane.xlu0 %491
    %v493 = vcvt.f32.s32 %v492
    %v494 = vcvt.f32.s32 %v488
    %v495 = vshll.u32 %v494, 16
    %v496 = vadd.s32 %v495, %v493
    %vm497 = vcmp.eq.s32.totalorder %v140, 11
    %v498 = vsel %vm497, 1, 0
    %vm499 = vcmp.eq.s32.totalorder %v498, 1
    %v500 = vsel %vm499, %v474, %v470
    %v501 = vsel %vm499, %v496, %v471
    %v502 = vmax.f32 %v477, %v478
    %503 = vmax.xlane.f32.xlu0 %v502
    %v504 = vpop.xlane.xlu0 %503
    %vm505 = vcmp.eq.f32.partialorder %v477, %v504
    %vm506 = vcmp.eq.f32.partialorder %v478, %v504
    %v507 = vsel %vm505, 0.0, %v477
    %v508 = vsel %vm506, 0.0, %v478
    %v509 = vsel %vm505, %v140, 256
    %v510 = vsel %vm506, %v141, 256
    %vm511 = vcmp.lt.s32.totalorder %v509, %v510
    %v512 = vsel %vm511, %v509, %v510
    %v513 = vand.u32 %v512, 65535
    %v514 = vshra.s32 %v512, 16
    %v515 = vcvt.s32.f32 %v513
    %v516 = vcvt.s32.f32 %v514
    %517 = vmin.xlane.f32.xlu0 %v516
    %v518 = vpop.xlane.xlu0 %517
    %vm519 = vcmp.eq.f32.partialorder %v516, %v518
    %v520 = vsel %vm519, %v515, inf
    %521 = vmin.xlane.f32.xlu0 %v520
    %v522 = vpop.xlane.xlu0 %521
    %v523 = vcvt.f32.s32 %v522
    %v524 = vcvt.f32.s32 %v518
    %v525 = vshll.u32 %v524, 16
    %v526 = vadd.s32 %v525, %v523
    %vm527 = vcmp.eq.s32.totalorder %v140, 12
    %v528 = vsel %vm527, 1, 0
    %vm529 = vcmp.eq.s32.totalorder %v528, 1
    %v530 = vsel %vm529, %v504, %v500
    %v531 = vsel %vm529, %v526, %v501
    %v532 = vmax.f32 %v507, %v508
    %533 = vmax.xlane.f32.xlu0 %v532
    %v534 = vpop.xlane.xlu0 %533
    %vm535 = vcmp.eq.f32.partialorder %v507, %v534
    %vm536 = vcmp.eq.f32.partialorder %v508, %v534
    %v537 = vsel %vm535, 0.0, %v507
    %v538 = vsel %vm536, 0.0, %v508
    %v539 = vsel %vm535, %v140, 256
    %v540 = vsel %vm536, %v141, 256
    %vm541 = vcmp.lt.s32.totalorder %v539, %v540
    %v542 = vsel %vm541, %v539, %v540
    %v543 = vand.u32 %v542, 65535
    %v544 = vshra.s32 %v542, 16
    %v545 = vcvt.s32.f32 %v543
    %v546 = vcvt.s32.f32 %v544
    %547 = vmin.xlane.f32.xlu0 %v546
    %v548 = vpop.xlane.xlu0 %547
    %vm549 = vcmp.eq.f32.partialorder %v546, %v548
    %v550 = vsel %vm549, %v545, inf
    %551 = vmin.xlane.f32.xlu0 %v550
    %v552 = vpop.xlane.xlu0 %551
    %v553 = vcvt.f32.s32 %v552
    %v554 = vcvt.f32.s32 %v548
    %v555 = vshll.u32 %v554, 16
    %v556 = vadd.s32 %v555, %v553
    %vm557 = vcmp.eq.s32.totalorder %v140, 13
    %v558 = vsel %vm557, 1, 0
    %vm559 = vcmp.eq.s32.totalorder %v558, 1
    %v560 = vsel %vm559, %v534, %v530
    %v561 = vsel %vm559, %v556, %v531
    %v562 = vmax.f32 %v537, %v538
    %563 = vmax.xlane.f32.xlu0 %v562
    %v564 = vpop.xlane.xlu0 %563
    %vm565 = vcmp.eq.f32.partialorder %v537, %v564
    %vm566 = vcmp.eq.f32.partialorder %v538, %v564
    %v567 = vsel %vm565, 0.0, %v537
    %v568 = vsel %vm566, 0.0, %v538
    %v569 = vsel %vm565, %v140, 256
    %v570 = vsel %vm566, %v141, 256
    %vm571 = vcmp.lt.s32.totalorder %v569, %v570
    %v572 = vsel %vm571, %v569, %v570
    %v573 = vand.u32 %v572, 65535
    %v574 = vshra.s32 %v572, 16
    %v575 = vcvt.s32.f32 %v573
    %v576 = vcvt.s32.f32 %v574
    %577 = vmin.xlane.f32.xlu0 %v576
    %v578 = vpop.xlane.xlu0 %577
    %vm579 = vcmp.eq.f32.partialorder %v576, %v578
    %v580 = vsel %vm579, %v575, inf
    %581 = vmin.xlane.f32.xlu0 %v580
    %v582 = vpop.xlane.xlu0 %581
    %v583 = vcvt.f32.s32 %v582
    %v584 = vcvt.f32.s32 %v578
    %v585 = vshll.u32 %v584, 16
    %v586 = vadd.s32 %v585, %v583
    %vm587 = vcmp.eq.s32.totalorder %v140, 14
    %v588 = vsel %vm587, 1, 0
    %vm589 = vcmp.eq.s32.totalorder %v588, 1
    %v590 = vsel %vm589, %v564, %v560
    %v591 = vsel %vm589, %v586, %v561
    %v592 = vmax.f32 %v567, %v568
    %593 = vmax.xlane.f32.xlu0 %v592
    %v594 = vpop.xlane.xlu0 %593
    %vm595 = vcmp.eq.f32.partialorder %v567, %v594
    %vm596 = vcmp.eq.f32.partialorder %v568, %v594
    %v597 = vsel %vm595, 0.0, %v567
    %v598 = vsel %vm596, 0.0, %v568
    %v599 = vsel %vm595, %v140, 256
    %v600 = vsel %vm596, %v141, 256
    %vm601 = vcmp.lt.s32.totalorder %v599, %v600
    %v602 = vsel %vm601, %v599, %v600
    %v603 = vand.u32 %v602, 65535
    %v604 = vshra.s32 %v602, 16
    %v605 = vcvt.s32.f32 %v603
    %v606 = vcvt.s32.f32 %v604
    %607 = vmin.xlane.f32.xlu0 %v606
    %v608 = vpop.xlane.xlu0 %607
    %vm609 = vcmp.eq.f32.partialorder %v606, %v608
    %v610 = vsel %vm609, %v605, inf
    %611 = vmin.xlane.f32.xlu0 %v610
    %v612 = vpop.xlane.xlu0 %611
    %v613 = vcvt.f32.s32 %v612
    %v614 = vcvt.f32.s32 %v608
    %v615 = vshll.u32 %v614, 16
    %v616 = vadd.s32 %v615, %v613
    %vm617 = vcmp.eq.s32.totalorder %v140, 15
    %v618 = vsel %vm617, 1, 0
    %vm619 = vcmp.eq.s32.totalorder %v618, 1
    %v620 = vsel %vm619, %v594, %v590
    %v621 = vsel %vm619, %v616, %v591
    %v622 = vmax.f32 %v597, %v598
    %623 = vmax.xlane.f32.xlu0 %v622
    %v624 = vpop.xlane.xlu0 %623
    %vm625 = vcmp.eq.f32.partialorder %v597, %v624
    %vm626 = vcmp.eq.f32.partialorder %v598, %v624
    %v627 = vsel %vm625, 0.0, %v597
    %v628 = vsel %vm626, 0.0, %v598
    %v629 = vsel %vm625, %v140, 256
    %v630 = vsel %vm626, %v141, 256
    %vm631 = vcmp.lt.s32.totalorder %v629, %v630
    %v632 = vsel %vm631, %v629, %v630
    %v633 = vand.u32 %v632, 65535
    %v634 = vshra.s32 %v632, 16
    %v635 = vcvt.s32.f32 %v633
    %v636 = vcvt.s32.f32 %v634
    %637 = vmin.xlane.f32.xlu0 %v636
    %v638 = vpop.xlane.xlu0 %637
    %vm639 = vcmp.eq.f32.partialorder %v636, %v638
    %v640 = vsel %vm639, %v635, inf
    %641 = vmin.xlane.f32.xlu0 %v640
    %v642 = vpop.xlane.xlu0 %641
    %v643 = vcvt.f32.s32 %v642
    %v644 = vcvt.f32.s32 %v638
    %v645 = vshll.u32 %v644, 16
    %v646 = vadd.s32 %v645, %v643
    %vm647 = vcmp.eq.s32.totalorder %v140, 16
    %v648 = vsel %vm647, 1, 0
    %vm649 = vcmp.eq.s32.totalorder %v648, 1
    %v650 = vsel %vm649, %v624, %v620
    %v651 = vsel %vm649, %v646, %v621
    %v652 = vmax.f32 %v627, %v628
    %653 = vmax.xlane.f32.xlu0 %v652
    %v654 = vpop.xlane.xlu0 %653
    %vm655 = vcmp.eq.f32.partialorder %v627, %v654
    %vm656 = vcmp.eq.f32.partialorder %v628, %v654
    %v657 = vsel %vm655, 0.0, %v627
    %v658 = vsel %vm656, 0.0, %v628
    %v659 = vsel %vm655, %v140, 256
    %v660 = vsel %vm656, %v141, 256
    %vm661 = vcmp.lt.s32.totalorder %v659, %v660
    %v662 = vsel %vm661, %v659, %v660
    %v663 = vand.u32 %v662, 65535
    %v664 = vshra.s32 %v662, 16
    %v665 = vcvt.s32.f32 %v663
    %v666 = vcvt.s32.f32 %v664
    %667 = vmin.xlane.f32.xlu0 %v666
    %v668 = vpop.xlane.xlu0 %667
    %vm669 = vcmp.eq.f32.partialorder %v666, %v668
    %v670 = vsel %vm669, %v665, inf
    %671 = vmin.xlane.f32.xlu0 %v670
    %v672 = vpop.xlane.xlu0 %671
    %v673 = vcvt.f32.s32 %v672
    %v674 = vcvt.f32.s32 %v668
    %v675 = vshll.u32 %v674, 16
    %v676 = vadd.s32 %v675, %v673
    %vm677 = vcmp.eq.s32.totalorder %v140, 17
    %v678 = vsel %vm677, 1, 0
    %vm679 = vcmp.eq.s32.totalorder %v678, 1
    %v680 = vsel %vm679, %v654, %v650
    %v681 = vsel %vm679, %v676, %v651
    %v682 = vmax.f32 %v657, %v658
    %683 = vmax.xlane.f32.xlu0 %v682
    %v684 = vpop.xlane.xlu0 %683
    %vm685 = vcmp.eq.f32.partialorder %v657, %v684
    %vm686 = vcmp.eq.f32.partialorder %v658, %v684
    %v687 = vsel %vm685, 0.0, %v657
    %v688 = vsel %vm686, 0.0, %v658
    %v689 = vsel %vm685, %v140, 256
    %v690 = vsel %vm686, %v141, 256
    %vm691 = vcmp.lt.s32.totalorder %v689, %v690
    %v692 = vsel %vm691, %v689, %v690
    %v693 = vand.u32 %v692, 65535
    %v694 = vshra.s32 %v692, 16
    %v695 = vcvt.s32.f32 %v693
    %v696 = vcvt.s32.f32 %v694
    %697 = vmin.xlane.f32.xlu0 %v696
    %v698 = vpop.xlane.xlu0 %697
    %vm699 = vcmp.eq.f32.partialorder %v696, %v698
    %v700 = vsel %vm699, %v695, inf
    %701 = vmin.xlane.f32.xlu0 %v700
    %v702 = vpop.xlane.xlu0 %701
    %v703 = vcvt.f32.s32 %v702
    %v704 = vcvt.f32.s32 %v698
    %v705 = vshll.u32 %v704, 16
    %v706 = vadd.s32 %v705, %v703
    %vm707 = vcmp.eq.s32.totalorder %v140, 18
    %v708 = vsel %vm707, 1, 0
    %vm709 = vcmp.eq.s32.totalorder %v708, 1
    %v710 = vsel %vm709, %v684, %v680
    %v711 = vsel %vm709, %v706, %v681
    %v712 = vmax.f32 %v687, %v688
    %713 = vmax.xlane.f32.xlu0 %v712
    %v714 = vpop.xlane.xlu0 %713
    %vm715 = vcmp.eq.f32.partialorder %v687, %v714
    %vm716 = vcmp.eq.f32.partialorder %v688, %v714
    %v717 = vsel %vm715, 0.0, %v687
    %v718 = vsel %vm716, 0.0, %v688
    %v719 = vsel %vm715, %v140, 256
    %v720 = vsel %vm716, %v141, 256
    %vm721 = vcmp.lt.s32.totalorder %v719, %v720
    %v722 = vsel %vm721, %v719, %v720
    %v723 = vand.u32 %v722, 65535
    %v724 = vshra.s32 %v722, 16
    %v725 = vcvt.s32.f32 %v723
    %v726 = vcvt.s32.f32 %v724
    %727 = vmin.xlane.f32.xlu0 %v726
    %v728 = vpop.xlane.xlu0 %727
    %vm729 = vcmp.eq.f32.partialorder %v726, %v728
    %v730 = vsel %vm729, %v725, inf
    %731 = vmin.xlane.f32.xlu0 %v730
    %v732 = vpop.xlane.xlu0 %731
    %v733 = vcvt.f32.s32 %v732
    %v734 = vcvt.f32.s32 %v728
    %v735 = vshll.u32 %v734, 16
    %v736 = vadd.s32 %v735, %v733
    %vm737 = vcmp.eq.s32.totalorder %v140, 19
    %v738 = vsel %vm737, 1, 0
    %vm739 = vcmp.eq.s32.totalorder %v738, 1
    %v740 = vsel %vm739, %v714, %v710
    %v741 = vsel %vm739, %v736, %v711
    %v742 = vmax.f32 %v717, %v718
    %743 = vmax.xlane.f32.xlu0 %v742
    %v744 = vpop.xlane.xlu0 %743
    %vm745 = vcmp.eq.f32.partialorder %v717, %v744
    %vm746 = vcmp.eq.f32.partialorder %v718, %v744
    %v747 = vsel %vm745, 0.0, %v717
    %v748 = vsel %vm746, 0.0, %v718
    %v749 = vsel %vm745, %v140, 256
    %v750 = vsel %vm746, %v141, 256
    %vm751 = vcmp.lt.s32.totalorder %v749, %v750
    %v752 = vsel %vm751, %v749, %v750
    %v753 = vand.u32 %v752, 65535
    %v754 = vshra.s32 %v752, 16
    %v755 = vcvt.s32.f32 %v753
    %v756 = vcvt.s32.f32 %v754
    %757 = vmin.xlane.f32.xlu0 %v756
    %v758 = vpop.xlane.xlu0 %757
    %vm759 = vcmp.eq.f32.partialorder %v756, %v758
    %v760 = vsel %vm759, %v755, inf
    %761 = vmin.xlane.f32.xlu0 %v760
    %v762 = vpop.xlane.xlu0 %761
    %v763 = vcvt.f32.s32 %v762
    %v764 = vcvt.f32.s32 %v758
    %v765 = vshll.u32 %v764, 16
    %v766 = vadd.s32 %v765, %v763
    %vm767 = vcmp.eq.s32.totalorder %v140, 20
    %v768 = vsel %vm767, 1, 0
    %vm769 = vcmp.eq.s32.totalorder %v768, 1
    %v770 = vsel %vm769, %v744, %v740
    %v771 = vsel %vm769, %v766, %v741
    %v772 = vmax.f32 %v747, %v748
    %773 = vmax.xlane.f32.xlu0 %v772
    %v774 = vpop.xlane.xlu0 %773
    %vm775 = vcmp.eq.f32.partialorder %v747, %v774
    %vm776 = vcmp.eq.f32.partialorder %v748, %v774
    %v777 = vsel %vm775, 0.0, %v747
    %v778 = vsel %vm776, 0.0, %v748
    %v779 = vsel %vm775, %v140, 256
    %v780 = vsel %vm776, %v141, 256
    %vm781 = vcmp.lt.s32.totalorder %v779, %v780
    %v782 = vsel %vm781, %v779, %v780
    %v783 = vand.u32 %v782, 65535
    %v784 = vshra.s32 %v782, 16
    %v785 = vcvt.s32.f32 %v783
    %v786 = vcvt.s32.f32 %v784
    %787 = vmin.xlane.f32.xlu0 %v786
    %v788 = vpop.xlane.xlu0 %787
    %vm789 = vcmp.eq.f32.partialorder %v786, %v788
    %v790 = vsel %vm789, %v785, inf
    %791 = vmin.xlane.f32.xlu0 %v790
    %v792 = vpop.xlane.xlu0 %791
    %v793 = vcvt.f32.s32 %v792
    %v794 = vcvt.f32.s32 %v788
    %v795 = vshll.u32 %v794, 16
    %v796 = vadd.s32 %v795, %v793
    %vm797 = vcmp.eq.s32.totalorder %v140, 21
    %v798 = vsel %vm797, 1, 0
    %vm799 = vcmp.eq.s32.totalorder %v798, 1
    %v800 = vsel %vm799, %v774, %v770
    %v801 = vsel %vm799, %v796, %v771
    %v802 = vmax.f32 %v777, %v778
    %803 = vmax.xlane.f32.xlu0 %v802
    %v804 = vpop.xlane.xlu0 %803
    %vm805 = vcmp.eq.f32.partialorder %v777, %v804
    %vm806 = vcmp.eq.f32.partialorder %v778, %v804
    %v807 = vsel %vm805, 0.0, %v777
    %v808 = vsel %vm806, 0.0, %v778
    %v809 = vsel %vm805, %v140, 256
    %v810 = vsel %vm806, %v141, 256
    %vm811 = vcmp.lt.s32.totalorder %v809, %v810
    %v812 = vsel %vm811, %v809, %v810
    %v813 = vand.u32 %v812, 65535
    %v814 = vshra.s32 %v812, 16
    %v815 = vcvt.s32.f32 %v813
    %v816 = vcvt.s32.f32 %v814
    %817 = vmin.xlane.f32.xlu0 %v816
    %v818 = vpop.xlane.xlu0 %817
    %vm819 = vcmp.eq.f32.partialorder %v816, %v818
    %v820 = vsel %vm819, %v815, inf
    %821 = vmin.xlane.f32.xlu0 %v820
    %v822 = vpop.xlane.xlu0 %821
    %v823 = vcvt.f32.s32 %v822
    %v824 = vcvt.f32.s32 %v818
    %v825 = vshll.u32 %v824, 16
    %v826 = vadd.s32 %v825, %v823
    %vm827 = vcmp.eq.s32.totalorder %v140, 22
    %v828 = vsel %vm827, 1, 0
    %vm829 = vcmp.eq.s32.totalorder %v828, 1
    %v830 = vsel %vm829, %v804, %v800
    %v831 = vsel %vm829, %v826, %v801
    %v832 = vmax.f32 %v807, %v808
    %833 = vmax.xlane.f32.xlu0 %v832
    %v834 = vpop.xlane.xlu0 %833
    %vm835 = vcmp.eq.f32.partialorder %v807, %v834
    %vm836 = vcmp.eq.f32.partialorder %v808, %v834
    %v837 = vsel %vm835, 0.0, %v807
    %v838 = vsel %vm836, 0.0, %v808
    %v839 = vsel %vm835, %v140, 256
    %v840 = vsel %vm836, %v141, 256
    %vm841 = vcmp.lt.s32.totalorder %v839, %v840
    %v842 = vsel %vm841, %v839, %v840
    %v843 = vand.u32 %v842, 65535
    %v844 = vshra.s32 %v842, 16
    %v845 = vcvt.s32.f32 %v843
    %v846 = vcvt.s32.f32 %v844
    %847 = vmin.xlane.f32.xlu0 %v846
    %v848 = vpop.xlane.xlu0 %847
    %vm849 = vcmp.eq.f32.partialorder %v846, %v848
    %v850 = vsel %vm849, %v845, inf
    %851 = vmin.xlane.f32.xlu0 %v850
    %v852 = vpop.xlane.xlu0 %851
    %v853 = vcvt.f32.s32 %v852
    %v854 = vcvt.f32.s32 %v848
    %v855 = vshll.u32 %v854, 16
    %v856 = vadd.s32 %v855, %v853
    %vm857 = vcmp.eq.s32.totalorder %v140, 23
    %v858 = vsel %vm857, 1, 0
    %vm859 = vcmp.eq.s32.totalorder %v858, 1
    %v860 = vsel %vm859, %v834, %v830
    %v861 = vsel %vm859, %v856, %v831
    %v862 = vmax.f32 %v837, %v838
    %863 = vmax.xlane.f32.xlu0 %v862
    %v864 = vpop.xlane.xlu0 %863
    %vm865 = vcmp.eq.f32.partialorder %v837, %v864
    %vm866 = vcmp.eq.f32.partialorder %v838, %v864
    %v867 = vsel %vm865, 0.0, %v837
    %v868 = vsel %vm866, 0.0, %v838
    %v869 = vsel %vm865, %v140, 256
    %v870 = vsel %vm866, %v141, 256
    %vm871 = vcmp.lt.s32.totalorder %v869, %v870
    %v872 = vsel %vm871, %v869, %v870
    %v873 = vand.u32 %v872, 65535
    %v874 = vshra.s32 %v872, 16
    %v875 = vcvt.s32.f32 %v873
    %v876 = vcvt.s32.f32 %v874
    %877 = vmin.xlane.f32.xlu0 %v876
    %v878 = vpop.xlane.xlu0 %877
    %vm879 = vcmp.eq.f32.partialorder %v876, %v878
    %v880 = vsel %vm879, %v875, inf
    %881 = vmin.xlane.f32.xlu0 %v880
    %v882 = vpop.xlane.xlu0 %881
    %v883 = vcvt.f32.s32 %v882
    %v884 = vcvt.f32.s32 %v878
    %v885 = vshll.u32 %v884, 16
    %v886 = vadd.s32 %v885, %v883
    %vm887 = vcmp.eq.s32.totalorder %v140, 24
    %v888 = vsel %vm887, 1, 0
    %vm889 = vcmp.eq.s32.totalorder %v888, 1
    %v890 = vsel %vm889, %v864, %v860
    %v891 = vsel %vm889, %v886, %v861
    %v892 = vmax.f32 %v867, %v868
    %893 = vmax.xlane.f32.xlu0 %v892
    %v894 = vpop.xlane.xlu0 %893
    %vm895 = vcmp.eq.f32.partialorder %v867, %v894
    %vm896 = vcmp.eq.f32.partialorder %v868, %v894
    %v897 = vsel %vm895, 0.0, %v867
    %v898 = vsel %vm896, 0.0, %v868
    %v899 = vsel %vm895, %v140, 256
    %v900 = vsel %vm896, %v141, 256
    %vm901 = vcmp.lt.s32.totalorder %v899, %v900
    %v902 = vsel %vm901, %v899, %v900
    %v903 = vand.u32 %v902, 65535
    %v904 = vshra.s32 %v902, 16
    %v905 = vcvt.s32.f32 %v903
    %v906 = vcvt.s32.f32 %v904
    %907 = vmin.xlane.f32.xlu0 %v906
    %v908 = vpop.xlane.xlu0 %907
    %vm909 = vcmp.eq.f32.partialorder %v906, %v908
    %v910 = vsel %vm909, %v905, inf
    %911 = vmin.xlane.f32.xlu0 %v910
    %v912 = vpop.xlane.xlu0 %911
    %v913 = vcvt.f32.s32 %v912
    %v914 = vcvt.f32.s32 %v908
    %v915 = vshll.u32 %v914, 16
    %v916 = vadd.s32 %v915, %v913
    %vm917 = vcmp.eq.s32.totalorder %v140, 25
    %v918 = vsel %vm917, 1, 0
    %vm919 = vcmp.eq.s32.totalorder %v918, 1
    %v920 = vsel %vm919, %v894, %v890
    %v921 = vsel %vm919, %v916, %v891
    %v922 = vmax.f32 %v897, %v898
    %923 = vmax.xlane.f32.xlu0 %v922
    %v924 = vpop.xlane.xlu0 %923
    %vm925 = vcmp.eq.f32.partialorder %v897, %v924
    %vm926 = vcmp.eq.f32.partialorder %v898, %v924
    %v927 = vsel %vm925, 0.0, %v897
    %v928 = vsel %vm926, 0.0, %v898
    %v929 = vsel %vm925, %v140, 256
    %v930 = vsel %vm926, %v141, 256
    %vm931 = vcmp.lt.s32.totalorder %v929, %v930
    %v932 = vsel %vm931, %v929, %v930
    %v933 = vand.u32 %v932, 65535
    %v934 = vshra.s32 %v932, 16
    %v935 = vcvt.s32.f32 %v933
    %v936 = vcvt.s32.f32 %v934
    %937 = vmin.xlane.f32.xlu0 %v936
    %v938 = vpop.xlane.xlu0 %937
    %vm939 = vcmp.eq.f32.partialorder %v936, %v938
    %v940 = vsel %vm939, %v935, inf
    %941 = vmin.xlane.f32.xlu0 %v940
    %v942 = vpop.xlane.xlu0 %941
    %v943 = vcvt.f32.s32 %v942
    %v944 = vcvt.f32.s32 %v938
    %v945 = vshll.u32 %v944, 16
    %v946 = vadd.s32 %v945, %v943
    %vm947 = vcmp.eq.s32.totalorder %v140, 26
    %v948 = vsel %vm947, 1, 0
    %vm949 = vcmp.eq.s32.totalorder %v948, 1
    %v950 = vsel %vm949, %v924, %v920
    %v951 = vsel %vm949, %v946, %v921
    %v952 = vmax.f32 %v927, %v928
    %953 = vmax.xlane.f32.xlu0 %v952
    %v954 = vpop.xlane.xlu0 %953
    %vm955 = vcmp.eq.f32.partialorder %v927, %v954
    %vm956 = vcmp.eq.f32.partialorder %v928, %v954
    %v957 = vsel %vm955, 0.0, %v927
    %v958 = vsel %vm956, 0.0, %v928
    %v959 = vsel %vm955, %v140, 256
    %v960 = vsel %vm956, %v141, 256
    %vm961 = vcmp.lt.s32.totalorder %v959, %v960
    %v962 = vsel %vm961, %v959, %v960
    %v963 = vand.u32 %v962, 65535
    %v964 = vshra.s32 %v962, 16
    %v965 = vcvt.s32.f32 %v963
    %v966 = vcvt.s32.f32 %v964
    %967 = vmin.xlane.f32.xlu0 %v966
    %v968 = vpop.xlane.xlu0 %967
    %vm969 = vcmp.eq.f32.partialorder %v966, %v968
    %v970 = vsel %vm969, %v965, inf
    %971 = vmin.xlane.f32.xlu0 %v970
    %v972 = vpop.xlane.xlu0 %971
    %v973 = vcvt.f32.s32 %v972
    %v974 = vcvt.f32.s32 %v968
    %v975 = vshll.u32 %v974, 16
    %v976 = vadd.s32 %v975, %v973
    %vm977 = vcmp.eq.s32.totalorder %v140, 27
    %v978 = vsel %vm977, 1, 0
    %vm979 = vcmp.eq.s32.totalorder %v978, 1
    %v980 = vsel %vm979, %v954, %v950
    %v981 = vsel %vm979, %v976, %v951
    %v982 = vmax.f32 %v957, %v958
    %983 = vmax.xlane.f32.xlu0 %v982
    %v984 = vpop.xlane.xlu0 %983
    %vm985 = vcmp.eq.f32.partialorder %v957, %v984
    %vm986 = vcmp.eq.f32.partialorder %v958, %v984
    %v987 = vsel %vm985, 0.0, %v957
    %v988 = vsel %vm986, 0.0, %v958
    %v989 = vsel %vm985, %v140, 256
    %v990 = vsel %vm986, %v141, 256
    %vm991 = vcmp.lt.s32.totalorder %v989, %v990
    %v992 = vsel %vm991, %v989, %v990
    %v993 = vand.u32 %v992, 65535
    %v994 = vshra.s32 %v992, 16
    %v995 = vcvt.s32.f32 %v993
    %v996 = vcvt.s32.f32 %v994
    %997 = vmin.xlane.f32.xlu0 %v996
    %v998 = vpop.xlane.xlu0 %997
    %vm999 = vcmp.eq.f32.partialorder %v996, %v998
    %v1000 = vsel %vm999, %v995, inf
    %1001 = vmin.xlane.f32.xlu0 %v1000
    %v1002 = vpop.xlane.xlu0 %1001
    %v1003 = vcvt.f32.s32 %v1002
    %v1004 = vcvt.f32.s32 %v998
    %v1005 = vshll.u32 %v1004, 16
    %v1006 = vadd.s32 %v1005, %v1003
    %vm1007 = vcmp.eq.s32.totalorder %v140, 28
    %v1008 = vsel %vm1007, 1, 0
    %vm1009 = vcmp.eq.s32.totalorder %v1008, 1
    %v1010 = vsel %vm1009, %v984, %v980
    %v1011 = vsel %vm1009, %v1006, %v981
    %v1012 = vmax.f32 %v987, %v988
    %1013 = vmax.xlane.f32.xlu0 %v1012
    %v1014 = vpop.xlane.xlu0 %1013
    %vm1015 = vcmp.eq.f32.partialorder %v987, %v1014
    %vm1016 = vcmp.eq.f32.partialorder %v988, %v1014
    %v1017 = vsel %vm1015, 0.0, %v987
    %v1018 = vsel %vm1016, 0.0, %v988
    %v1019 = vsel %vm1015, %v140, 256
    %v1020 = vsel %vm1016, %v141, 256
    %vm1021 = vcmp.lt.s32.totalorder %v1019, %v1020
    %v1022 = vsel %vm1021, %v1019, %v1020
    %v1023 = vand.u32 %v1022, 65535
    %v1024 = vshra.s32 %v1022, 16
    %v1025 = vcvt.s32.f32 %v1023
    %v1026 = vcvt.s32.f32 %v1024
    %1027 = vmin.xlane.f32.xlu0 %v1026
    %v1028 = vpop.xlane.xlu0 %1027
    %vm1029 = vcmp.eq.f32.partialorder %v1026, %v1028
    %v1030 = vsel %vm1029, %v1025, inf
    %1031 = vmin.xlane.f32.xlu0 %v1030
    %v1032 = vpop.xlane.xlu0 %1031
    %v1033 = vcvt.f32.s32 %v1032
    %v1034 = vcvt.f32.s32 %v1028
    %v1035 = vshll.u32 %v1034, 16
    %v1036 = vadd.s32 %v1035, %v1033
    %vm1037 = vcmp.eq.s32.totalorder %v140, 29
    %v1038 = vsel %vm1037, 1, 0
    %vm1039 = vcmp.eq.s32.totalorder %v1038, 1
    %v1040 = vsel %vm1039, %v1014, %v1010
    %v1041 = vsel %vm1039, %v1036, %v1011
    %v1042 = vmax.f32 %v1017, %v1018
    %1043 = vmax.xlane.f32.xlu0 %v1042
    %v1044 = vpop.xlane.xlu0 %1043
    %vm1045 = vcmp.eq.f32.partialorder %v1017, %v1044
    %vm1046 = vcmp.eq.f32.partialorder %v1018, %v1044
    %v1047 = vsel %vm1045, 0.0, %v1017
    %v1048 = vsel %vm1046, 0.0, %v1018
    %v1049 = vsel %vm1045, %v140, 256
    %v1050 = vsel %vm1046, %v141, 256
    %vm1051 = vcmp.lt.s32.totalorder %v1049, %v1050
    %v1052 = vsel %vm1051, %v1049, %v1050
    %v1053 = vand.u32 %v1052, 65535
    %v1054 = vshra.s32 %v1052, 16
    %v1055 = vcvt.s32.f32 %v1053
    %v1056 = vcvt.s32.f32 %v1054
    %1057 = vmin.xlane.f32.xlu0 %v1056
    %v1058 = vpop.xlane.xlu0 %1057
    %vm1059 = vcmp.eq.f32.partialorder %v1056, %v1058
    %v1060 = vsel %vm1059, %v1055, inf
    %1061 = vmin.xlane.f32.xlu0 %v1060
    %v1062 = vpop.xlane.xlu0 %1061
    %v1063 = vcvt.f32.s32 %v1062
    %v1064 = vcvt.f32.s32 %v1058
    %v1065 = vshll.u32 %v1064, 16
    %v1066 = vadd.s32 %v1065, %v1063
    %vm1067 = vcmp.eq.s32.totalorder %v140, 30
    %v1068 = vsel %vm1067, 1, 0
    %vm1069 = vcmp.eq.s32.totalorder %v1068, 1
    %v1070 = vsel %vm1069, %v1044, %v1040
    %v1071 = vsel %vm1069, %v1066, %v1041
    %v1072 = vmax.f32 %v1047, %v1048
    %1073 = vmax.xlane.f32.xlu0 %v1072
    %v1074 = vpop.xlane.xlu0 %1073
    %vm1075 = vcmp.eq.f32.partialorder %v1047, %v1074
    %vm1076 = vcmp.eq.f32.partialorder %v1048, %v1074
    %v1077 = vsel %vm1075, 0.0, %v1047
    %v1078 = vsel %vm1076, 0.0, %v1048
    %v1079 = vsel %vm1075, %v140, 256
    %v1080 = vsel %vm1076, %v141, 256
    %vm1081 = vcmp.lt.s32.totalorder %v1079, %v1080
    %v1082 = vsel %vm1081, %v1079, %v1080
    %v1083 = vand.u32 %v1082, 65535
    %v1084 = vshra.s32 %v1082, 16
    %v1085 = vcvt.s32.f32 %v1083
    %v1086 = vcvt.s32.f32 %v1084
    %1087 = vmin.xlane.f32.xlu0 %v1086
    %v1088 = vpop.xlane.xlu0 %1087
    %vm1089 = vcmp.eq.f32.partialorder %v1086, %v1088
    %v1090 = vsel %vm1089, %v1085, inf
    %1091 = vmin.xlane.f32.xlu0 %v1090
    %v1092 = vpop.xlane.xlu0 %1091
    %v1093 = vcvt.f32.s32 %v1092
    %v1094 = vcvt.f32.s32 %v1088
    %v1095 = vshll.u32 %v1094, 16
    %v1096 = vadd.s32 %v1095, %v1093
    %vm1097 = vcmp.eq.s32.totalorder %v140, 31
    %v1098 = vsel %vm1097, 1, 0
    %vm1099 = vcmp.eq.s32.totalorder %v1098, 1
    %v1100 = vsel %vm1099, %v1074, %v1070
    %v1101 = vsel %vm1099, %v1096, %v1071
    %v1102 = vmax.f32 %v1077, %v1078
    %1103 = vmax.xlane.f32.xlu0 %v1102
    %v1104 = vpop.xlane.xlu0 %1103
    %vm1105 = vcmp.eq.f32.partialorder %v1077, %v1104
    %vm1106 = vcmp.eq.f32.partialorder %v1078, %v1104
    %v1107 = vsel %vm1105, 0.0, %v1077
    %v1108 = vsel %vm1106, 0.0, %v1078
    %v1109 = vsel %vm1105, %v140, 256
    %v1110 = vsel %vm1106, %v141, 256
    %vm1111 = vcmp.lt.s32.totalorder %v1109, %v1110
    %v1112 = vsel %vm1111, %v1109, %v1110
    %v1113 = vand.u32 %v1112, 65535
    %v1114 = vshra.s32 %v1112, 16
    %v1115 = vcvt.s32.f32 %v1113
    %v1116 = vcvt.s32.f32 %v1114
    %1117 = vmin.xlane.f32.xlu0 %v1116
    %v1118 = vpop.xlane.xlu0 %1117
    %vm1119 = vcmp.eq.f32.partialorder %v1116, %v1118
    %v1120 = vsel %vm1119, %v1115, inf
    %1121 = vmin.xlane.f32.xlu0 %v1120
    %v1122 = vpop.xlane.xlu0 %1121
    %v1123 = vcvt.f32.s32 %v1122
    %v1124 = vcvt.f32.s32 %v1118
    %v1125 = vshll.u32 %v1124, 16
    %v1126 = vadd.s32 %v1125, %v1123
    %vm1127 = vcmp.eq.s32.totalorder %v140, 32
    %v1128 = vsel %vm1127, 1, 0
    %vm1129 = vcmp.eq.s32.totalorder %v1128, 1
    %v1130 = vsel %vm1129, %v1104, %v1100
    %v1131 = vsel %vm1129, %v1126, %v1101
    %v1132 = vmax.f32 %v1107, %v1108
    %1133 = vmax.xlane.f32.xlu0 %v1132
    %v1134 = vpop.xlane.xlu0 %1133
    %vm1135 = vcmp.eq.f32.partialorder %v1107, %v1134
    %vm1136 = vcmp.eq.f32.partialorder %v1108, %v1134
    %v1137 = vsel %vm1135, 0.0, %v1107
    %v1138 = vsel %vm1136, 0.0, %v1108
    %v1139 = vsel %vm1135, %v140, 256
    %v1140 = vsel %vm1136, %v141, 256
    %vm1141 = vcmp.lt.s32.totalorder %v1139, %v1140
    %v1142 = vsel %vm1141, %v1139, %v1140
    %v1143 = vand.u32 %v1142, 65535
    %v1144 = vshra.s32 %v1142, 16
    %v1145 = vcvt.s32.f32 %v1143
    %v1146 = vcvt.s32.f32 %v1144
    %1147 = vmin.xlane.f32.xlu0 %v1146
    %v1148 = vpop.xlane.xlu0 %1147
    %vm1149 = vcmp.eq.f32.partialorder %v1146, %v1148
    %v1150 = vsel %vm1149, %v1145, inf
    %1151 = vmin.xlane.f32.xlu0 %v1150
    %v1152 = vpop.xlane.xlu0 %1151
    %v1153 = vcvt.f32.s32 %v1152
    %v1154 = vcvt.f32.s32 %v1148
    %v1155 = vshll.u32 %v1154, 16
    %v1156 = vadd.s32 %v1155, %v1153
    %vm1157 = vcmp.eq.s32.totalorder %v140, 33
    %v1158 = vsel %vm1157, 1, 0
    %vm1159 = vcmp.eq.s32.totalorder %v1158, 1
    %v1160 = vsel %vm1159, %v1134, %v1130
    %v1161 = vsel %vm1159, %v1156, %v1131
    %v1162 = vmax.f32 %v1137, %v1138
    %1163 = vmax.xlane.f32.xlu0 %v1162
    %v1164 = vpop.xlane.xlu0 %1163
    %vm1165 = vcmp.eq.f32.partialorder %v1137, %v1164
    %vm1166 = vcmp.eq.f32.partialorder %v1138, %v1164
    %v1167 = vsel %vm1165, 0.0, %v1137
    %v1168 = vsel %vm1166, 0.0, %v1138
    %v1169 = vsel %vm1165, %v140, 256
    %v1170 = vsel %vm1166, %v141, 256
    %vm1171 = vcmp.lt.s32.totalorder %v1169, %v1170
    %v1172 = vsel %vm1171, %v1169, %v1170
    %v1173 = vand.u32 %v1172, 65535
    %v1174 = vshra.s32 %v1172, 16
    %v1175 = vcvt.s32.f32 %v1173
    %v1176 = vcvt.s32.f32 %v1174
    %1177 = vmin.xlane.f32.xlu0 %v1176
    %v1178 = vpop.xlane.xlu0 %1177
    %vm1179 = vcmp.eq.f32.partialorder %v1176, %v1178
    %v1180 = vsel %vm1179, %v1175, inf
    %1181 = vmin.xlane.f32.xlu0 %v1180
    %v1182 = vpop.xlane.xlu0 %1181
    %v1183 = vcvt.f32.s32 %v1182
    %v1184 = vcvt.f32.s32 %v1178
    %v1185 = vshll.u32 %v1184, 16
    %v1186 = vadd.s32 %v1185, %v1183
    %vm1187 = vcmp.eq.s32.totalorder %v140, 34
    %v1188 = vsel %vm1187, 1, 0
    %vm1189 = vcmp.eq.s32.totalorder %v1188, 1
    %v1190 = vsel %vm1189, %v1164, %v1160
    %v1191 = vsel %vm1189, %v1186, %v1161
    %v1192 = vmax.f32 %v1167, %v1168
    %1193 = vmax.xlane.f32.xlu0 %v1192
    %v1194 = vpop.xlane.xlu0 %1193
    %vm1195 = vcmp.eq.f32.partialorder %v1167, %v1194
    %vm1196 = vcmp.eq.f32.partialorder %v1168, %v1194
    %v1197 = vsel %vm1195, 0.0, %v1167
    %v1198 = vsel %vm1196, 0.0, %v1168
    %v1199 = vsel %vm1195, %v140, 256
    %v1200 = vsel %vm1196, %v141, 256
    %vm1201 = vcmp.lt.s32.totalorder %v1199, %v1200
    %v1202 = vsel %vm1201, %v1199, %v1200
    %v1203 = vand.u32 %v1202, 65535
    %v1204 = vshra.s32 %v1202, 16
    %v1205 = vcvt.s32.f32 %v1203
    %v1206 = vcvt.s32.f32 %v1204
    %1207 = vmin.xlane.f32.xlu0 %v1206
    %v1208 = vpop.xlane.xlu0 %1207
    %vm1209 = vcmp.eq.f32.partialorder %v1206, %v1208
    %v1210 = vsel %vm1209, %v1205, inf
    %1211 = vmin.xlane.f32.xlu0 %v1210
    %v1212 = vpop.xlane.xlu0 %1211
    %v1213 = vcvt.f32.s32 %v1212
    %v1214 = vcvt.f32.s32 %v1208
    %v1215 = vshll.u32 %v1214, 16
    %v1216 = vadd.s32 %v1215, %v1213
    %vm1217 = vcmp.eq.s32.totalorder %v140, 35
    %v1218 = vsel %vm1217, 1, 0
    %vm1219 = vcmp.eq.s32.totalorder %v1218, 1
    %v1220 = vsel %vm1219, %v1194, %v1190
    %v1221 = vsel %vm1219, %v1216, %v1191
    %v1222 = vmax.f32 %v1197, %v1198
    %1223 = vmax.xlane.f32.xlu0 %v1222
    %v1224 = vpop.xlane.xlu0 %1223
    %vm1225 = vcmp.eq.f32.partialorder %v1197, %v1224
    %vm1226 = vcmp.eq.f32.partialorder %v1198, %v1224
    %v1227 = vsel %vm1225, 0.0, %v1197
    %v1228 = vsel %vm1226, 0.0, %v1198
    %v1229 = vsel %vm1225, %v140, 256
    %v1230 = vsel %vm1226, %v141, 256
    %vm1231 = vcmp.lt.s32.totalorder %v1229, %v1230
    %v1232 = vsel %vm1231, %v1229, %v1230
    %v1233 = vand.u32 %v1232, 65535
    %v1234 = vshra.s32 %v1232, 16
    %v1235 = vcvt.s32.f32 %v1233
    %v1236 = vcvt.s32.f32 %v1234
    %1237 = vmin.xlane.f32.xlu0 %v1236
    %v1238 = vpop.xlane.xlu0 %1237
    %vm1239 = vcmp.eq.f32.partialorder %v1236, %v1238
    %v1240 = vsel %vm1239, %v1235, inf
    %1241 = vmin.xlane.f32.xlu0 %v1240
    %v1242 = vpop.xlane.xlu0 %1241
    %v1243 = vcvt.f32.s32 %v1242
    %v1244 = vcvt.f32.s32 %v1238
    %v1245 = vshll.u32 %v1244, 16
    %v1246 = vadd.s32 %v1245, %v1243
    %vm1247 = vcmp.eq.s32.totalorder %v140, 36
    %v1248 = vsel %vm1247, 1, 0
    %vm1249 = vcmp.eq.s32.totalorder %v1248, 1
    %v1250 = vsel %vm1249, %v1224, %v1220
    %v1251 = vsel %vm1249, %v1246, %v1221
    %v1252 = vmax.f32 %v1227, %v1228
    %1253 = vmax.xlane.f32.xlu0 %v1252
    %v1254 = vpop.xlane.xlu0 %1253
    %vm1255 = vcmp.eq.f32.partialorder %v1227, %v1254
    %vm1256 = vcmp.eq.f32.partialorder %v1228, %v1254
    %v1257 = vsel %vm1255, 0.0, %v1227
    %v1258 = vsel %vm1256, 0.0, %v1228
    %v1259 = vsel %vm1255, %v140, 256
    %v1260 = vsel %vm1256, %v141, 256
    %vm1261 = vcmp.lt.s32.totalorder %v1259, %v1260
    %v1262 = vsel %vm1261, %v1259, %v1260
    %v1263 = vand.u32 %v1262, 65535
    %v1264 = vshra.s32 %v1262, 16
    %v1265 = vcvt.s32.f32 %v1263
    %v1266 = vcvt.s32.f32 %v1264
    %1267 = vmin.xlane.f32.xlu0 %v1266
    %v1268 = vpop.xlane.xlu0 %1267
    %vm1269 = vcmp.eq.f32.partialorder %v1266, %v1268
    %v1270 = vsel %vm1269, %v1265, inf
    %1271 = vmin.xlane.f32.xlu0 %v1270
    %v1272 = vpop.xlane.xlu0 %1271
    %v1273 = vcvt.f32.s32 %v1272
    %v1274 = vcvt.f32.s32 %v1268
    %v1275 = vshll.u32 %v1274, 16
    %v1276 = vadd.s32 %v1275, %v1273
    %vm1277 = vcmp.eq.s32.totalorder %v140, 37
    %v1278 = vsel %vm1277, 1, 0
    %vm1279 = vcmp.eq.s32.totalorder %v1278, 1
    %v1280 = vsel %vm1279, %v1254, %v1250
    %v1281 = vsel %vm1279, %v1276, %v1251
    %v1282 = vmax.f32 %v1257, %v1258
    %1283 = vmax.xlane.f32.xlu0 %v1282
    %v1284 = vpop.xlane.xlu0 %1283
    %vm1285 = vcmp.eq.f32.partialorder %v1257, %v1284
    %vm1286 = vcmp.eq.f32.partialorder %v1258, %v1284
    %v1287 = vsel %vm1285, 0.0, %v1257
    %v1288 = vsel %vm1286, 0.0, %v1258
    %v1289 = vsel %vm1285, %v140, 256
    %v1290 = vsel %vm1286, %v141, 256
    %vm1291 = vcmp.lt.s32.totalorder %v1289, %v1290
    %v1292 = vsel %vm1291, %v1289, %v1290
    %v1293 = vand.u32 %v1292, 65535
    %v1294 = vshra.s32 %v1292, 16
    %v1295 = vcvt.s32.f32 %v1293
    %v1296 = vcvt.s32.f32 %v1294
    %1297 = vmin.xlane.f32.xlu0 %v1296
    %v1298 = vpop.xlane.xlu0 %1297
    %vm1299 = vcmp.eq.f32.partialorder %v1296, %v1298
    %v1300 = vsel %vm1299, %v1295, inf
    %1301 = vmin.xlane.f32.xlu0 %v1300
    %v1302 = vpop.xlane.xlu0 %1301
    %v1303 = vcvt.f32.s32 %v1302
    %v1304 = vcvt.f32.s32 %v1298
    %v1305 = vshll.u32 %v1304, 16
    %v1306 = vadd.s32 %v1305, %v1303
    %vm1307 = vcmp.eq.s32.totalorder %v140, 38
    %v1308 = vsel %vm1307, 1, 0
    %vm1309 = vcmp.eq.s32.totalorder %v1308, 1
    %v1310 = vsel %vm1309, %v1284, %v1280
    %v1311 = vsel %vm1309, %v1306, %v1281
    %v1312 = vmax.f32 %v1287, %v1288
    %1313 = vmax.xlane.f32.xlu0 %v1312
    %v1314 = vpop.xlane.xlu0 %1313
    %vm1315 = vcmp.eq.f32.partialorder %v1287, %v1314
    %vm1316 = vcmp.eq.f32.partialorder %v1288, %v1314
    %v1317 = vsel %vm1315, 0.0, %v1287
    %v1318 = vsel %vm1316, 0.0, %v1288
    %v1319 = vsel %vm1315, %v140, 256
    %v1320 = vsel %vm1316, %v141, 256
    %vm1321 = vcmp.lt.s32.totalorder %v1319, %v1320
    %v1322 = vsel %vm1321, %v1319, %v1320
    %v1323 = vand.u32 %v1322, 65535
    %v1324 = vshra.s32 %v1322, 16
    %v1325 = vcvt.s32.f32 %v1323
    %v1326 = vcvt.s32.f32 %v1324
    %1327 = vmin.xlane.f32.xlu0 %v1326
    %v1328 = vpop.xlane.xlu0 %1327
    %vm1329 = vcmp.eq.f32.partialorder %v1326, %v1328
    %v1330 = vsel %vm1329, %v1325, inf
    %1331 = vmin.xlane.f32.xlu0 %v1330
    %v1332 = vpop.xlane.xlu0 %1331
    %v1333 = vcvt.f32.s32 %v1332
    %v1334 = vcvt.f32.s32 %v1328
    %v1335 = vshll.u32 %v1334, 16
    %v1336 = vadd.s32 %v1335, %v1333
    %vm1337 = vcmp.eq.s32.totalorder %v140, 39
    %v1338 = vsel %vm1337, 1, 0
    %vm1339 = vcmp.eq.s32.totalorder %v1338, 1
    %v1340 = vsel %vm1339, %v1314, %v1310
    %v1341 = vsel %vm1339, %v1336, %v1311
    %v1342 = vmax.f32 %v1317, %v1318
    %1343 = vmax.xlane.f32.xlu0 %v1342
    %v1344 = vpop.xlane.xlu0 %1343
    %vm1345 = vcmp.eq.f32.partialorder %v1317, %v1344
    %vm1346 = vcmp.eq.f32.partialorder %v1318, %v1344
    %v1347 = vsel %vm1345, 0.0, %v1317
    %v1348 = vsel %vm1346, 0.0, %v1318
    %v1349 = vsel %vm1345, %v140, 256
    %v1350 = vsel %vm1346, %v141, 256
    %vm1351 = vcmp.lt.s32.totalorder %v1349, %v1350
    %v1352 = vsel %vm1351, %v1349, %v1350
    %v1353 = vand.u32 %v1352, 65535
    %v1354 = vshra.s32 %v1352, 16
    %v1355 = vcvt.s32.f32 %v1353
    %v1356 = vcvt.s32.f32 %v1354
    %1357 = vmin.xlane.f32.xlu0 %v1356
    %v1358 = vpop.xlane.xlu0 %1357
    %vm1359 = vcmp.eq.f32.partialorder %v1356, %v1358
    %v1360 = vsel %vm1359, %v1355, inf
    %1361 = vmin.xlane.f32.xlu0 %v1360
    %v1362 = vpop.xlane.xlu0 %1361
    %v1363 = vcvt.f32.s32 %v1362
    %v1364 = vcvt.f32.s32 %v1358
    %v1365 = vshll.u32 %v1364, 16
    %v1366 = vadd.s32 %v1365, %v1363
    %vm1367 = vcmp.eq.s32.totalorder %v140, 40
    %v1368 = vsel %vm1367, 1, 0
    %vm1369 = vcmp.eq.s32.totalorder %v1368, 1
    %v1370 = vsel %vm1369, %v1344, %v1340
    %v1371 = vsel %vm1369, %v1366, %v1341
    %v1372 = vmax.f32 %v1347, %v1348
    %1373 = vmax.xlane.f32.xlu0 %v1372
    %v1374 = vpop.xlane.xlu0 %1373
    %vm1375 = vcmp.eq.f32.partialorder %v1347, %v1374
    %vm1376 = vcmp.eq.f32.partialorder %v1348, %v1374
    %v1377 = vsel %vm1375, 0.0, %v1347
    %v1378 = vsel %vm1376, 0.0, %v1348
    %v1379 = vsel %vm1375, %v140, 256
    %v1380 = vsel %vm1376, %v141, 256
    %vm1381 = vcmp.lt.s32.totalorder %v1379, %v1380
    %v1382 = vsel %vm1381, %v1379, %v1380
    %v1383 = vand.u32 %v1382, 65535
    %v1384 = vshra.s32 %v1382, 16
    %v1385 = vcvt.s32.f32 %v1383
    %v1386 = vcvt.s32.f32 %v1384
    %1387 = vmin.xlane.f32.xlu0 %v1386
    %v1388 = vpop.xlane.xlu0 %1387
    %vm1389 = vcmp.eq.f32.partialorder %v1386, %v1388
    %v1390 = vsel %vm1389, %v1385, inf
    %1391 = vmin.xlane.f32.xlu0 %v1390
    %v1392 = vpop.xlane.xlu0 %1391
    %v1393 = vcvt.f32.s32 %v1392
    %v1394 = vcvt.f32.s32 %v1388
    %v1395 = vshll.u32 %v1394, 16
    %v1396 = vadd.s32 %v1395, %v1393
    %vm1397 = vcmp.eq.s32.totalorder %v140, 41
    %v1398 = vsel %vm1397, 1, 0
    %vm1399 = vcmp.eq.s32.totalorder %v1398, 1
    %v1400 = vsel %vm1399, %v1374, %v1370
    %v1401 = vsel %vm1399, %v1396, %v1371
    %v1402 = vmax.f32 %v1377, %v1378
    %1403 = vmax.xlane.f32.xlu0 %v1402
    %v1404 = vpop.xlane.xlu0 %1403
    %vm1405 = vcmp.eq.f32.partialorder %v1377, %v1404
    %vm1406 = vcmp.eq.f32.partialorder %v1378, %v1404
    %v1407 = vsel %vm1405, 0.0, %v1377
    %v1408 = vsel %vm1406, 0.0, %v1378
    %v1409 = vsel %vm1405, %v140, 256
    %v1410 = vsel %vm1406, %v141, 256
    %vm1411 = vcmp.lt.s32.totalorder %v1409, %v1410
    %v1412 = vsel %vm1411, %v1409, %v1410
    %v1413 = vand.u32 %v1412, 65535
    %v1414 = vshra.s32 %v1412, 16
    %v1415 = vcvt.s32.f32 %v1413
    %v1416 = vcvt.s32.f32 %v1414
    %1417 = vmin.xlane.f32.xlu0 %v1416
    %v1418 = vpop.xlane.xlu0 %1417
    %vm1419 = vcmp.eq.f32.partialorder %v1416, %v1418
    %v1420 = vsel %vm1419, %v1415, inf
    %1421 = vmin.xlane.f32.xlu0 %v1420
    %v1422 = vpop.xlane.xlu0 %1421
    %v1423 = vcvt.f32.s32 %v1422
    %v1424 = vcvt.f32.s32 %v1418
    %v1425 = vshll.u32 %v1424, 16
    %v1426 = vadd.s32 %v1425, %v1423
    %vm1427 = vcmp.eq.s32.totalorder %v140, 42
    %v1428 = vsel %vm1427, 1, 0
    %vm1429 = vcmp.eq.s32.totalorder %v1428, 1
    %v1430 = vsel %vm1429, %v1404, %v1400
    %v1431 = vsel %vm1429, %v1426, %v1401
    %v1432 = vmax.f32 %v1407, %v1408
    %1433 = vmax.xlane.f32.xlu0 %v1432
    %v1434 = vpop.xlane.xlu0 %1433
    %vm1435 = vcmp.eq.f32.partialorder %v1407, %v1434
    %vm1436 = vcmp.eq.f32.partialorder %v1408, %v1434
    %v1437 = vsel %vm1435, 0.0, %v1407
    %v1438 = vsel %vm1436, 0.0, %v1408
    %v1439 = vsel %vm1435, %v140, 256
    %v1440 = vsel %vm1436, %v141, 256
    %vm1441 = vcmp.lt.s32.totalorder %v1439, %v1440
    %v1442 = vsel %vm1441, %v1439, %v1440
    %v1443 = vand.u32 %v1442, 65535
    %v1444 = vshra.s32 %v1442, 16
    %v1445 = vcvt.s32.f32 %v1443
    %v1446 = vcvt.s32.f32 %v1444
    %1447 = vmin.xlane.f32.xlu0 %v1446
    %v1448 = vpop.xlane.xlu0 %1447
    %vm1449 = vcmp.eq.f32.partialorder %v1446, %v1448
    %v1450 = vsel %vm1449, %v1445, inf
    %1451 = vmin.xlane.f32.xlu0 %v1450
    %v1452 = vpop.xlane.xlu0 %1451
    %v1453 = vcvt.f32.s32 %v1452
    %v1454 = vcvt.f32.s32 %v1448
    %v1455 = vshll.u32 %v1454, 16
    %v1456 = vadd.s32 %v1455, %v1453
    %vm1457 = vcmp.eq.s32.totalorder %v140, 43
    %v1458 = vsel %vm1457, 1, 0
    %vm1459 = vcmp.eq.s32.totalorder %v1458, 1
    %v1460 = vsel %vm1459, %v1434, %v1430
    %v1461 = vsel %vm1459, %v1456, %v1431
    %v1462 = vmax.f32 %v1437, %v1438
    %1463 = vmax.xlane.f32.xlu0 %v1462
    %v1464 = vpop.xlane.xlu0 %1463
    %vm1465 = vcmp.eq.f32.partialorder %v1437, %v1464
    %vm1466 = vcmp.eq.f32.partialorder %v1438, %v1464
    %v1467 = vsel %vm1465, 0.0, %v1437
    %v1468 = vsel %vm1466, 0.0, %v1438
    %v1469 = vsel %vm1465, %v140, 256
    %v1470 = vsel %vm1466, %v141, 256
    %vm1471 = vcmp.lt.s32.totalorder %v1469, %v1470
    %v1472 = vsel %vm1471, %v1469, %v1470
    %v1473 = vand.u32 %v1472, 65535
    %v1474 = vshra.s32 %v1472, 16
    %v1475 = vcvt.s32.f32 %v1473
    %v1476 = vcvt.s32.f32 %v1474
    %1477 = vmin.xlane.f32.xlu0 %v1476
    %v1478 = vpop.xlane.xlu0 %1477
    %vm1479 = vcmp.eq.f32.partialorder %v1476, %v1478
    %v1480 = vsel %vm1479, %v1475, inf
    %1481 = vmin.xlane.f32.xlu0 %v1480
    %v1482 = vpop.xlane.xlu0 %1481
    %v1483 = vcvt.f32.s32 %v1482
    %v1484 = vcvt.f32.s32 %v1478
    %v1485 = vshll.u32 %v1484, 16
    %v1486 = vadd.s32 %v1485, %v1483
    %vm1487 = vcmp.eq.s32.totalorder %v140, 44
    %v1488 = vsel %vm1487, 1, 0
    %vm1489 = vcmp.eq.s32.totalorder %v1488, 1
    %v1490 = vsel %vm1489, %v1464, %v1460
    %v1491 = vsel %vm1489, %v1486, %v1461
    %v1492 = vmax.f32 %v1467, %v1468
    %1493 = vmax.xlane.f32.xlu0 %v1492
    %v1494 = vpop.xlane.xlu0 %1493
    %vm1495 = vcmp.eq.f32.partialorder %v1467, %v1494
    %vm1496 = vcmp.eq.f32.partialorder %v1468, %v1494
    %v1497 = vsel %vm1495, 0.0, %v1467
    %v1498 = vsel %vm1496, 0.0, %v1468
    %v1499 = vsel %vm1495, %v140, 256
    %v1500 = vsel %vm1496, %v141, 256
    %vm1501 = vcmp.lt.s32.totalorder %v1499, %v1500
    %v1502 = vsel %vm1501, %v1499, %v1500
    %v1503 = vand.u32 %v1502, 65535
    %v1504 = vshra.s32 %v1502, 16
    %v1505 = vcvt.s32.f32 %v1503
    %v1506 = vcvt.s32.f32 %v1504
    %1507 = vmin.xlane.f32.xlu0 %v1506
    %v1508 = vpop.xlane.xlu0 %1507
    %vm1509 = vcmp.eq.f32.partialorder %v1506, %v1508
    %v1510 = vsel %vm1509, %v1505, inf
    %1511 = vmin.xlane.f32.xlu0 %v1510
    %v1512 = vpop.xlane.xlu0 %1511
    %v1513 = vcvt.f32.s32 %v1512
    %v1514 = vcvt.f32.s32 %v1508
    %v1515 = vshll.u32 %v1514, 16
    %v1516 = vadd.s32 %v1515, %v1513
    %vm1517 = vcmp.eq.s32.totalorder %v140, 45
    %v1518 = vsel %vm1517, 1, 0
    %vm1519 = vcmp.eq.s32.totalorder %v1518, 1
    %v1520 = vsel %vm1519, %v1494, %v1490
    %v1521 = vsel %vm1519, %v1516, %v1491
    %v1522 = vmax.f32 %v1497, %v1498
    %1523 = vmax.xlane.f32.xlu0 %v1522
    %v1524 = vpop.xlane.xlu0 %1523
    %vm1525 = vcmp.eq.f32.partialorder %v1497, %v1524
    %vm1526 = vcmp.eq.f32.partialorder %v1498, %v1524
    %v1527 = vsel %vm1525, 0.0, %v1497
    %v1528 = vsel %vm1526, 0.0, %v1498
    %v1529 = vsel %vm1525, %v140, 256
    %v1530 = vsel %vm1526, %v141, 256
    %vm1531 = vcmp.lt.s32.totalorder %v1529, %v1530
    %v1532 = vsel %vm1531, %v1529, %v1530
    %v1533 = vand.u32 %v1532, 65535
    %v1534 = vshra.s32 %v1532, 16
    %v1535 = vcvt.s32.f32 %v1533
    %v1536 = vcvt.s32.f32 %v1534
    %1537 = vmin.xlane.f32.xlu0 %v1536
    %v1538 = vpop.xlane.xlu0 %1537
    %vm1539 = vcmp.eq.f32.partialorder %v1536, %v1538
    %v1540 = vsel %vm1539, %v1535, inf
    %1541 = vmin.xlane.f32.xlu0 %v1540
    %v1542 = vpop.xlane.xlu0 %1541
    %v1543 = vcvt.f32.s32 %v1542
    %v1544 = vcvt.f32.s32 %v1538
    %v1545 = vshll.u32 %v1544, 16
    %v1546 = vadd.s32 %v1545, %v1543
    %vm1547 = vcmp.eq.s32.totalorder %v140, 46
    %v1548 = vsel %vm1547, 1, 0
    %vm1549 = vcmp.eq.s32.totalorder %v1548, 1
    %v1550 = vsel %vm1549, %v1524, %v1520
    %v1551 = vsel %vm1549, %v1546, %v1521
    %v1552 = vmax.f32 %v1527, %v1528
    %1553 = vmax.xlane.f32.xlu0 %v1552
    %v1554 = vpop.xlane.xlu0 %1553
    %vm1555 = vcmp.eq.f32.partialorder %v1527, %v1554
    %vm1556 = vcmp.eq.f32.partialorder %v1528, %v1554
    %v1557 = vsel %vm1555, 0.0, %v1527
    %v1558 = vsel %vm1556, 0.0, %v1528
    %v1559 = vsel %vm1555, %v140, 256
    %v1560 = vsel %vm1556, %v141, 256
    %vm1561 = vcmp.lt.s32.totalorder %v1559, %v1560
    %v1562 = vsel %vm1561, %v1559, %v1560
    %v1563 = vand.u32 %v1562, 65535
    %v1564 = vshra.s32 %v1562, 16
    %v1565 = vcvt.s32.f32 %v1563
    %v1566 = vcvt.s32.f32 %v1564
    %1567 = vmin.xlane.f32.xlu0 %v1566
    %v1568 = vpop.xlane.xlu0 %1567
    %vm1569 = vcmp.eq.f32.partialorder %v1566, %v1568
    %v1570 = vsel %vm1569, %v1565, inf
    %1571 = vmin.xlane.f32.xlu0 %v1570
    %v1572 = vpop.xlane.xlu0 %1571
    %v1573 = vcvt.f32.s32 %v1572
    %v1574 = vcvt.f32.s32 %v1568
    %v1575 = vshll.u32 %v1574, 16
    %v1576 = vadd.s32 %v1575, %v1573
    %vm1577 = vcmp.eq.s32.totalorder %v140, 47
    %v1578 = vsel %vm1577, 1, 0
    %vm1579 = vcmp.eq.s32.totalorder %v1578, 1
    %v1580 = vsel %vm1579, %v1554, %v1550
    %v1581 = vsel %vm1579, %v1576, %v1551
    %v1582 = vmax.f32 %v1557, %v1558
    %1583 = vmax.xlane.f32.xlu0 %v1582
    %v1584 = vpop.xlane.xlu0 %1583
    %vm1585 = vcmp.eq.f32.partialorder %v1557, %v1584
    %vm1586 = vcmp.eq.f32.partialorder %v1558, %v1584
    %v1587 = vsel %vm1585, 0.0, %v1557
    %v1588 = vsel %vm1586, 0.0, %v1558
    %v1589 = vsel %vm1585, %v140, 256
    %v1590 = vsel %vm1586, %v141, 256
    %vm1591 = vcmp.lt.s32.totalorder %v1589, %v1590
    %v1592 = vsel %vm1591, %v1589, %v1590
    %v1593 = vand.u32 %v1592, 65535
    %v1594 = vshra.s32 %v1592, 16
    %v1595 = vcvt.s32.f32 %v1593
    %v1596 = vcvt.s32.f32 %v1594
    %1597 = vmin.xlane.f32.xlu0 %v1596
    %v1598 = vpop.xlane.xlu0 %1597
    %vm1599 = vcmp.eq.f32.partialorder %v1596, %v1598
    %v1600 = vsel %vm1599, %v1595, inf
    %1601 = vmin.xlane.f32.xlu0 %v1600
    %v1602 = vpop.xlane.xlu0 %1601
    %v1603 = vcvt.f32.s32 %v1602
    %v1604 = vcvt.f32.s32 %v1598
    %v1605 = vshll.u32 %v1604, 16
    %v1606 = vadd.s32 %v1605, %v1603
    %vm1607 = vcmp.eq.s32.totalorder %v140, 48
    %v1608 = vsel %vm1607, 1, 0
    %vm1609 = vcmp.eq.s32.totalorder %v1608, 1
    %v1610 = vsel %vm1609, %v1584, %v1580
    %v1611 = vsel %vm1609, %v1606, %v1581
    %v1612 = vmax.f32 %v1587, %v1588
    %1613 = vmax.xlane.f32.xlu0 %v1612
    %v1614 = vpop.xlane.xlu0 %1613
    %vm1615 = vcmp.eq.f32.partialorder %v1587, %v1614
    %vm1616 = vcmp.eq.f32.partialorder %v1588, %v1614
    %v1617 = vsel %vm1615, 0.0, %v1587
    %v1618 = vsel %vm1616, 0.0, %v1588
    %v1619 = vsel %vm1615, %v140, 256
    %v1620 = vsel %vm1616, %v141, 256
    %vm1621 = vcmp.lt.s32.totalorder %v1619, %v1620
    %v1622 = vsel %vm1621, %v1619, %v1620
    %v1623 = vand.u32 %v1622, 65535
    %v1624 = vshra.s32 %v1622, 16
    %v1625 = vcvt.s32.f32 %v1623
    %v1626 = vcvt.s32.f32 %v1624
    %1627 = vmin.xlane.f32.xlu0 %v1626
    %v1628 = vpop.xlane.xlu0 %1627
    %vm1629 = vcmp.eq.f32.partialorder %v1626, %v1628
    %v1630 = vsel %vm1629, %v1625, inf
    %1631 = vmin.xlane.f32.xlu0 %v1630
    %v1632 = vpop.xlane.xlu0 %1631
    %v1633 = vcvt.f32.s32 %v1632
    %v1634 = vcvt.f32.s32 %v1628
    %v1635 = vshll.u32 %v1634, 16
    %v1636 = vadd.s32 %v1635, %v1633
    %vm1637 = vcmp.eq.s32.totalorder %v140, 49
    %v1638 = vsel %vm1637, 1, 0
    %vm1639 = vcmp.eq.s32.totalorder %v1638, 1
    %v1640 = vsel %vm1639, %v1614, %v1610
    %v1641 = vsel %vm1639, %v1636, %v1611
    %v1642 = vmul.f32 %v1640, %v138
    %vm1643 = vcmask 408576
    %1644 = vst.msk [vmem:[#allocation6] sm:$0xff] %vm1643, %v1642
    %1645 = vst.msk [vmem:[#allocation4] sm:$0xff] %vm1643, %v1641
    %v1646 = vsub.f32 %v129, %v1617
    %v1647 = vsub.f32 %v131, %v1618
    %v1648 = vmul.f32 %v1646, %v138
    %v1649 = vmul.f32 %v1647, %v138
    %v1650 = vld [vmem:[%s3] sm:$0xff]
    %v1651 = vld [vmem:[%s3 + $0x8] sm:$0xff]
    %v1652 = vld [vmem:[%s3 + $0x10] sm:$0xff]
    %v1653 = vld [vmem:[%s3 + $0x18] sm:$0xff]
    %v1654 = vld [vmem:[%s3 + $0x20] sm:$0xff]
    %v1655 = vld [vmem:[%s3 + $0x28] sm:$0xff]
    %v1656 = vld [vmem:[%s3 + $0x30] sm:$0xff]
    %v1657 = vld [vmem:[%s3 + $0x38] sm:$0xff]
    %v1658 = vld [vmem:[%s3 + $0x40] sm:$0xff]
    %v1659 = vld [vmem:[%s3 + $0x48] sm:$0xff]
    %v1660 = vld [vmem:[%s3 + $0x50] sm:$0xff]
    %v1661 = vld [vmem:[%s3 + $0x58] sm:$0xff]
    %v1662 = vld [vmem:[%s3 + $0x60] sm:$0xff]
    %v1663 = vld [vmem:[%s3 + $0x68] sm:$0xff]
    %v1664 = vld [vmem:[%s3 + $0x70] sm:$0xff]
    %v1665 = vld [vmem:[%s3 + $0x78] sm:$0xff]
    %v1666 = vld [vmem:[%s3 + $0x80] sm:$0xff]
    %v1667 = vld [vmem:[%s3 + $0x88] sm:$0xff]
    %v1668 = vld [vmem:[%s3 + $0x90] sm:$0xff]
    %v1669 = vld [vmem:[%s3 + $0x98] sm:$0xff]
    %v1670 = vld [vmem:[%s3 + $0xa0] sm:$0xff]
    %v1671 = vld [vmem:[%s3 + $0xa8] sm:$0xff]
    %v1672 = vld [vmem:[%s3 + $0xb0] sm:$0xff]
    %v1673 = vld [vmem:[%s3 + $0xb8] sm:$0xff]
    %v1674 = vld [vmem:[%s3 + $0xc0] sm:$0xff]
    %v1675 = vld [vmem:[%s3 + $0xc8] sm:$0xff]
    %v1676 = vld [vmem:[%s3 + $0xd0] sm:$0xff]
    %v1677 = vld [vmem:[%s3 + $0xd8] sm:$0xff]
    %v1678 = vld [vmem:[%s3 + $0xe0] sm:$0xff]
    %v1679 = vld [vmem:[%s3 + $0xe8] sm:$0xff]
    %v1680 = vld [vmem:[%s3 + $0xf0] sm:$0xff]
    %v1681 = vld [vmem:[%s3 + $0xf8] sm:$0xff]
    %1682 = vmatprep.subr.mxu0 0.0
    %1683 = vmatpush1.msra.mxu0 %v1650
    %1684 = vmatprep.subr.mxu0 0.0
    %1685 = vmatpush1.msra.mxu0 %v1651
    %1686 = vmatprep.subr.mxu0 0.0
    %1687 = vmatpush1.msra.mxu0 %v1652
    %1688 = vmatprep.subr.mxu0 0.0
    %1689 = vmatpush1.msra.mxu0 %v1653
    %1690 = vmatprep.subr.mxu0 0.0
    %1691 = vmatpush1.msra.mxu0 %v1654
    %1692 = vmatprep.subr.mxu0 0.0
    %1693 = vmatpush1.msra.mxu0 %v1655
    %1694 = vmatprep.subr.mxu0 0.0
    %1695 = vmatpush1.msra.mxu0 %v1656
    %1696 = vmatprep.subr.mxu0 0.0
    %1697 = vmatpush1.msra.mxu0 %v1657
    %1698 = vmatprep.subr.mxu0 0.0
    %1699 = vmatpush1.msra.mxu0 %v1658
    %1700 = vmatprep.subr.mxu0 0.0
    %1701 = vmatpush1.msra.mxu0 %v1659
    %1702 = vmatprep.subr.mxu0 0.0
    %1703 = vmatpush1.msra.mxu0 %v1660
    %1704 = vmatprep.subr.mxu0 0.0
    %1705 = vmatpush1.msra.mxu0 %v1661
    %1706 = vmatprep.subr.mxu0 0.0
    %1707 = vmatpush1.msra.mxu0 %v1662
    %1708 = vmatprep.subr.mxu0 0.0
    %1709 = vmatpush1.msra.mxu0 %v1663
    %1710 = vmatprep.subr.mxu0 0.0
    %1711 = vmatpush1.msra.mxu0 %v1664
    %1712 = vmatprep.subr.mxu0 0.0
    %1713 = vmatpush1.msra.mxu0 %v1665
    %1714 = vmatprep.subr.mxu0 0.0
    %1715 = vmatpush1.msra.mxu0 %v1666
    %1716 = vmatprep.subr.mxu0 0.0
    %1717 = vmatpush1.msra.mxu0 %v1667
    %1718 = vmatprep.subr.mxu0 0.0
    %1719 = vmatpush1.msra.mxu0 %v1668
    %1720 = vmatprep.subr.mxu0 0.0
    %1721 = vmatpush1.msra.mxu0 %v1669
    %1722 = vmatprep.subr.mxu0 0.0
    %1723 = vmatpush1.msra.mxu0 %v1670
    %1724 = vmatprep.subr.mxu0 0.0
    %1725 = vmatpush1.msra.mxu0 %v1671
    %1726 = vmatprep.subr.mxu0 0.0
    %1727 = vmatpush1.msra.mxu0 %v1672
    %1728 = vmatprep.subr.mxu0 0.0
    %1729 = vmatpush1.msra.mxu0 %v1673
    %1730 = vmatprep.subr.mxu0 0.0
    %1731 = vmatpush1.msra.mxu0 %v1674
    %1732 = vmatprep.subr.mxu0 0.0
    %1733 = vmatpush1.msra.mxu0 %v1675
    %1734 = vmatprep.subr.mxu0 0.0
    %1735 = vmatpush1.msra.mxu0 %v1676
    %1736 = vmatprep.subr.mxu0 0.0
    %1737 = vmatpush1.msra.mxu0 %v1677
    %1738 = vmatprep.subr.mxu0 0.0
    %1739 = vmatpush1.msra.mxu0 %v1678
    %1740 = vmatprep.subr.mxu0 0.0
    %1741 = vmatpush1.msra.mxu0 %v1679
    %1742 = vmatprep.subr.mxu0 0.0
    %1743 = vmatpush1.msra.mxu0 %v1680
    %1744 = vmatprep.subr.mxu0 0.0
    %1745 = vmatpush1.msra.mxu0 %v1681
    %1746 = vmatprep.mubr.f32.mxu0 %v1649
    %1747 = vmatmul.mubr.f32.gmra.mrb[0].mxu0 %v1648
    %v1748 = vpop.f32.mrb[0].mxu0
    %v1749 = vadd.f32 0.0, %v1748
    %v1750 = vpop.f32.mrb[0].mxu0
    %1751 = vdwg.mxu0
    %vm1752 = vcmask 261120
    %1753 = vst.msk [vmem:[#allocation2] sm:$0xff] %vm1752, %v1749
    // Predicated region
    $region18: #{tpu_custom_call.1} parent=1 // pred_check
      _
    $region19: #{tpu_custom_call.1} parent=1 // pred_check_branch
      %1755 = sbr.rel (0) target = $region21
    $region20: #{tpu_custom_call.1} parent=1 // pred_region
      %s1757 = ssub.s32 128, 128
      %1758 = vsyncadd [#allocation3], %s1757
      %s1760 = sshll.u32 [#allocation2], 4
      %s1761 = int_to_ptr.vmem [resolvable:$true] %s1760
      %1763 = dma.vmem_to_hbm [thread:$0]  %s1761, 128, %s4, [#allocation3]
    $region21: #{tpu_custom_call.1} parent=1 // pred_fallthru
      _
    // Predicated region
    $region22: #{tpu_custom_call.1} parent=1 // pred_check
      _
    $region23: #{tpu_custom_call.1} parent=1 // pred_check_branch
      %1765 = sbr.rel (0) target = $region25
    $region24: #{tpu_custom_call.1} parent=1 // pred_region
      %s1767 = ssub.s32 128, 128
      %1768 = vsyncadd [#allocation5], %s1767
      %s1770 = sshll.u32 [#allocation4], 4
      %s1771 = int_to_ptr.vmem [resolvable:$true] %s1770
      %1773 = dma.vmem_to_hbm [thread:$0]  %s1771, 128, %s5, [#allocation5]
    $region25: #{tpu_custom_call.1} parent=1 // pred_fallthru
      _
    // Predicated region
    $region26: #{tpu_custom_call.1} parent=1 // pred_check
      _
    $region27: #{tpu_custom_call.1} parent=1 // pred_check_branch
      %1775 = sbr.rel (0) target = $region29
    $region28: #{tpu_custom_call.1} parent=1 // pred_region
      %s1777 = ssub.s32 128, 128
      %1778 = vsyncadd [#allocation5], %s1777
      %s1780 = sshll.u32 [#allocation6], 4
      %s1781 = int_to_ptr.vmem [resolvable:$true] %s1780
      %1783 = dma.vmem_to_hbm [thread:$0]  %s1781, 128, %s6, [#allocation5]
    $region29: #{tpu_custom_call.1} parent=1 // pred_fallthru
      _
    // Predicated region
    $region30: #{tpu_custom_call.1} parent=1 // pred_check
      _
    $region31: #{tpu_custom_call.1} parent=1 // pred_check_branch
      %1785 = sbr.rel (0) target = $region33
    $region32: #{tpu_custom_call.1} parent=1 // pred_region
      %1786 = dma.done [#allocation3], 128
    $region33: #{tpu_custom_call.1} parent=1 // pred_fallthru
      _
    // Predicated region
    $region34: #{tpu_custom_call.1} parent=1 // pred_check
      _
    $region35: #{tpu_custom_call.1} parent=1 // pred_check_branch
      %1788 = sbr.rel (0) target = $region37
    $region36: #{tpu_custom_call.1} parent=1 // pred_region
      %1789 = dma.done [#allocation5], 128
    $region37: #{tpu_custom_call.1} parent=1 // pred_fallthru
      _
    // Predicated region
    $region38: #{tpu_custom_call.1} parent=1 // pred_check
      _
    $region39: #{tpu_custom_call.1} parent=1 // pred_check_branch
      %1791 = sbr.rel (0) target = $region41
    $region40: #{tpu_custom_call.1} parent=1 // pred_region
      %1792 = dma.done [#allocation5], 128
    $region41: #{tpu_custom_call.1} parent=1 // pred_fallthru
      _
    %1793 = vsyncpa [#allocation3], 1
    %1794 = vsyncpa [#allocation5], 1

</llo_original>
